<compile_context>
chip_gen: v6e
topology: v6e:2x2x1
jax: 0.10.0
libtpu: 0.0.40
codegen_flags: <defaults>
</compile_context>

<pallas_src>
import math
from functools import partial

import jax
import jax.numpy as jnp
from jax.experimental import pallas as pl
from jax.experimental.pallas import tpu as pltpu  # noqa: F401  (TPU backend)

# ----------------------------- model config -------------------------------- #
IN_CHANNELS = 16
VEC_IN_DIM = 8
CONTEXT_IN_DIM = 12
HIDDEN = 32
MLP_RATIO = 4.0
NUM_HEADS = 2
DEPTH = 1
DEPTH_SINGLE = 1
AXES_DIM = (4, 6, 6)          # sum == HIDDEN // NUM_HEADS == 16
THETA = 10000
HEAD_DIM = HIDDEN // NUM_HEADS
MLP_HIDDEN = int(HIDDEN * MLP_RATIO)

# ---- constants for the fused QK-RMSNorm (group-mean via block-diag matmul) - #
def _rms_group_mat(n, gsize):
    idx = jnp.arange(n) // gsize
    return (idx[:, None] == idx[None, :]).astype(jnp.float32) / float(gsize)

# qkv projection output: [q(heads*D) | k(heads*D) | v(heads*D)] = 3*HIDDEN
GRP_QKV = _rms_group_mat(3 * HIDDEN, HEAD_DIM)
MASK_QKV = jnp.concatenate(
    [jnp.ones((2 * HIDDEN,), jnp.float32), jnp.zeros((HIDDEN,), jnp.float32)])
# single-block lin1 output: [qkv(3*HIDDEN) | mlp(MLP_HIDDEN)]
GRP_LIN1 = _rms_group_mat(3 * HIDDEN + MLP_HIDDEN, HEAD_DIM)
MASK_LIN1 = jnp.concatenate(
    [jnp.ones((2 * HIDDEN,), jnp.float32),
     jnp.zeros((HIDDEN + MLP_HIDDEN,), jnp.float32)])


# ----------------------------- in-kernel helpers ---------------------------- #
def _silu(x):
    return x * jax.nn.sigmoid(x)


def _gelu_tanh(x):
    return 0.5 * x * (1.0 + jnp.tanh(
        math.sqrt(2.0 / math.pi) * (x + 0.044715 * x * x * x)))


def _layernorm(x, eps=1e-6):
    mu = jnp.mean(x, axis=-1, keepdims=True)
    xc = x - mu
    var = jnp.mean(xc * xc, axis=-1, keepdims=True)
    return xc * jax.lax.rsqrt(var + eps)


def _dot(a, b):
    return jnp.dot(a, b, preferred_element_type=jnp.float32)


# ----------------------------- Pallas kernels ------------------------------ #
def _embed_kernel(img_ref, iw_ref, ib_ref,
                  txt_ref, tw_ref, tb_ref,
                  temb_ref, t1w_ref, t1b_ref, t2w_ref, t2b_ref,
                  y_ref, v1w_ref, v1b_ref, v2w_ref, v2b_ref,
                  img_o, txt_o, vec_o):
    # img_in / txt_in linear projections
    img_o[...] = _dot(img_ref[...], iw_ref[...]) + ib_ref[...]
    txt_o[...] = _dot(txt_ref[...], tw_ref[...]) + tb_ref[...]
    # time_in MLP (linear -> SiLU -> linear) + vector_in MLP, summed
    th = _silu(_dot(temb_ref[...], t1w_ref[...]) + t1b_ref[...])
    tv = _dot(th, t2w_ref[...]) + t2b_ref[...]
    vh = _silu(_dot(y_ref[...], v1w_ref[...]) + v1b_ref[...])
    vv = _dot(vh, v2w_ref[...]) + v2b_ref[...]
    vec_o[...] = tv + vv


def embed_all(p, img2, txt2, temb, y):
    Mi, Mt, B = img2.shape[0], txt2.shape[0], temb.shape[0]
    return pl.pallas_call(
        _embed_kernel,
        out_shape=(jax.ShapeDtypeStruct((Mi, HIDDEN), jnp.float32),
                   jax.ShapeDtypeStruct((Mt, HIDDEN), jnp.float32),
                   jax.ShapeDtypeStruct((B, HIDDEN), jnp.float32)),
    )(img2, p["img_in_w"], p["img_in_b"].reshape(1, -1),
      txt2, p["txt_in_w"], p["txt_in_b"].reshape(1, -1),
      temb, p["time_in"]["in_w"], p["time_in"]["in_b"].reshape(1, -1),
      p["time_in"]["out_w"], p["time_in"]["out_b"].reshape(1, -1),
      y, p["vector_in"]["in_w"], p["vector_in"]["in_b"].reshape(1, -1),
      p["vector_in"]["out_w"], p["vector_in"]["out_b"].reshape(1, -1))


def _double_pre_kernel(vec_ref, mw_ref, mb_ref,
                       img_ref, sel_i_ref, txt_ref, sel_t_ref,
                       iqw_ref, iqb_ref, tqw_ref, tqb_ref,
                       grp_ref, mask_ref, ics_ref, tcs_ref,
                       iqkv_o, tqkv_o, mod_o):
    # Fused img+txt modulation: one SiLU + one 384-wide (lane-dense) matmul.
    mod = _dot(_silu(vec_ref[...]), mw_ref[...]) + mb_ref[...]      # (B, 384)
    mod_o[...] = mod
    grp = grp_ref[...]
    mask = mask_ref[...]

    def qkv_stream(x, sel, col0, qw, qb, cs):
        # broadcast per-batch (shift1 | scale1) to token rows via sel matmul
        m = _dot(sel, mod[:, col0:col0 + 2 * HIDDEN])
        sh1 = m[:, :HIDDEN]
        sc1 = m[:, HIDDEN:2 * HIDDEN]
        xm = (1.0 + sc1) * _layernorm(x) + sh1
        y = _dot(xm, qw) + qb
        # per-head RMS of q/k via block-diagonal group-mean matmul
        ms = _dot(y * y, grp)
        rr = jax.lax.rsqrt(ms + 1e-6)
        return y * jnp.where(mask > 0.5, rr * cs, 1.0)

    iqkv_o[...] = qkv_stream(img_ref[...], sel_i_ref[...], 0,
                             iqw_ref[...], iqb_ref[...], ics_ref[...])
    tqkv_o[...] = qkv_stream(txt_ref[...], sel_t_ref[...], 6 * HIDDEN,
                             tqw_ref[...], tqb_ref[...], tcs_ref[...])


def double_pre(vec, mod_w, mod_b, img2, sel_img, txt2, sel_txt,
               iqw, iqb, tqw, tqb, grp, mask, ics, tcs):
    Mi, Mt, B = img2.shape[0], txt2.shape[0], vec.shape[0]
    return pl.pallas_call(
        _double_pre_kernel,
        out_shape=(jax.ShapeDtypeStruct((Mi, 3 * HIDDEN), jnp.float32),
                   jax.ShapeDtypeStruct((Mt, 3 * HIDDEN), jnp.float32),
                   jax.ShapeDtypeStruct((B, 12 * HIDDEN), jnp.float32)),
    )(vec, mod_w, mod_b.reshape(1, -1), img2, sel_img, txt2, sel_txt,
      iqw, iqb.reshape(1, -1), tqw, tqb.reshape(1, -1),
      grp, mask.reshape(1, -1), ics.reshape(1, -1), tcs.reshape(1, -1))


def _attn_kernel(q_ref, k_ref, v_ref, m_ref, o_ref, *, B, H):
    # q, k, v: (B*H, L, D); m: (B*H, 1, L) key-padding mask (1.0 = keep)
    # o: (B, L, H*D) written directly in output layout.
    q = q_ref[...]
    k = k_ref[...]
    v = v_ref[...]
    D = q.shape[-1]
    scale = 1.0 / math.sqrt(D)
    s = jnp.einsum("bqd,bkd->bqk", q, k, preferred_element_type=jnp.float32) * scale
    s = jnp.where(m_ref[...] > 0.5, s, -1e30)
    s = s - jnp.max(s, axis=-1, keepdims=True)
    p = jnp.exp(s)
    p = p * pl.reciprocal(jnp.sum(p, axis=-1, keepdims=True), approx=True)
    o = jnp.einsum("bqk,bkd->bqd", p, v, preferred_element_type=jnp.float32)
    o4 = o.reshape(B, H, o.shape[1], D)            # split leading dim only
    o_ref[...] = jnp.concatenate([o4[:, h] for h in range(H)], axis=-1)


def attention_pallas(q, k, v, key_mask):
    """q, k, v: (B, H, L, D); key_mask: (B, L) -> (B, L, H*D)."""
    B, H, L, D = q.shape
    q2 = q.reshape(B * H, L, D).astype(jnp.float32)
    k2 = k.reshape(B * H, L, D).astype(jnp.float32)
    v2 = v.reshape(B * H, L, D).astype(jnp.float32)
    m = jnp.broadcast_to(key_mask[:, None, None, :].astype(jnp.float32),
                         (B, H, 1, L)).reshape(B * H, 1, L)
    return pl.pallas_call(
        partial(_attn_kernel, B=B, H=H),
        out_shape=jax.ShapeDtypeStruct((B, L, H * D), jnp.float32),
    )(q2, k2, v2, m)


def _double_post_kernel(mod_ref,
                        img_ref, iattn_ref, sel_i_ref,
                        ipw_ref, ipb_ref, im0w_ref, im0b_ref, im1w_ref, im1b_ref,
                        txt_ref, tattn_ref, sel_t_ref,
                        tpw_ref, tpb_ref, tm0w_ref, tm0b_ref, tm1w_ref, tm1b_ref,
                        img_o, txt_o):
    mod = mod_ref[...]

    def stream(res, attn, sel, col0, pw, pb, w0, b0, w1, b1):
        # broadcast per-batch (gate1 | shift2 | scale2 | gate2) to token rows
        m = _dot(sel, mod[:, col0:col0 + 4 * HIDDEN])
        g1 = m[:, :HIDDEN]
        sh2 = m[:, HIDDEN:2 * HIDDEN]
        sc2 = m[:, 2 * HIDDEN:3 * HIDDEN]
        g2 = m[:, 3 * HIDDEN:4 * HIDDEN]
        h = res + g1 * (_dot(attn, pw) + pb)
        hm = (1.0 + sc2) * _layernorm(h) + sh2
        t = _gelu_tanh(_dot(hm, w0) + b0)
        return h + g2 * (_dot(t, w1) + b1)

    img_o[...] = stream(img_ref[...], iattn_ref[...], sel_i_ref[...], 2 * HIDDEN,
                        ipw_ref[...], ipb_ref[...], im0w_ref[...], im0b_ref[...],
                        im1w_ref[...], im1b_ref[...])
    txt_o[...] = stream(txt_ref[...], tattn_ref[...], sel_t_ref[...], 8 * HIDDEN,
                        tpw_ref[...], tpb_ref[...], tm0w_ref[...], tm0b_ref[...],
                        tm1w_ref[...], tm1b_ref[...])


def double_post(mod, img2, img_attn, sel_img, ipw, ipb, im0w, im0b, im1w, im1b,
                txt2, txt_attn, sel_txt, tpw, tpb, tm0w, tm0b, tm1w, tm1b):
    Mi, Mt = img2.shape[0], txt2.shape[0]
    return pl.pallas_call(
        _double_post_kernel,
        out_shape=(jax.ShapeDtypeStruct((Mi, HIDDEN), jnp.float32),
                   jax.ShapeDtypeStruct((Mt, HIDDEN), jnp.float32)),
    )(mod,
      img2, img_attn, sel_img, ipw, ipb.reshape(1, -1),
      im0w, im0b.reshape(1, -1), im1w, im1b.reshape(1, -1),
      txt2, txt_attn, sel_txt, tpw, tpb.reshape(1, -1),
      tm0w, tm0b.reshape(1, -1), tm1w, tm1b.reshape(1, -1))


def _single_pre_kernel(vec_ref, mw_ref, mb_ref,
                       x_ref, sel_ref,
                       l1w_ref, l1b_ref, grp_ref, mask_ref, cs_ref,
                       lin1_o, mod_o):
    mod = _dot(_silu(vec_ref[...]), mw_ref[...]) + mb_ref[...]      # (B, 96)
    mod_o[...] = mod
    m = _dot(sel_ref[...], mod[:, :2 * HIDDEN])
    sh = m[:, :HIDDEN]
    sc = m[:, HIDDEN:2 * HIDDEN]
    xm = (1.0 + sc) * _layernorm(x_ref[...]) + sh
    y = _dot(xm, l1w_ref[...]) + l1b_ref[...]
    ms = _dot(y * y, grp_ref[...])
    rr = jax.lax.rsqrt(ms + 1e-6)
    lin1_o[...] = y * jnp.where(mask_ref[...] > 0.5, rr * cs_ref[...], 1.0)


def single_pre(vec, mod_w, mod_b, x2, sel, l1w, l1b, grp, mask, cs):
    M, B = x2.shape[0], vec.shape[0]
    N = l1w.shape[1]
    return pl.pallas_call(
        _single_pre_kernel,
        out_shape=(jax.ShapeDtypeStruct((M, N), jnp.float32),
                   jax.ShapeDtypeStruct((B, 3 * HIDDEN), jnp.float32)),
    )(vec, mod_w, mod_b.reshape(1, -1), x2, sel,
      l1w, l1b.reshape(1, -1), grp, mask.reshape(1, -1), cs.reshape(1, -1))


def _single_post_kernel(x_ref, attn_ref, mlp_ref, mod_ref, sel_ref,
                        wa_ref, wm_ref, b_ref, o_ref):
    # out = x + gate * (concat(attn, gelu(mlp)) @ lin2 + b), with lin2 split
    # into its attn / mlp row blocks (avoids an in-kernel lane concat).
    gate = _dot(sel_ref[...], mod_ref[:, 2 * HIDDEN:3 * HIDDEN])
    t = _gelu_tanh(mlp_ref[...])
    y = _dot(attn_ref[...], wa_ref[...]) + _dot(t, wm_ref[...]) + b_ref[...]
    o_ref[...] = x_ref[...] + gate * y


def single_post(x2, attn, mlp2, mod, sel, wa, wm, b):
    M, C = x2.shape
    return pl.pallas_call(
        _single_post_kernel,
        out_shape=jax.ShapeDtypeStruct((M, C), jnp.float32),
    )(x2, attn, mlp2, mod, sel, wa, wm, b.reshape(1, -1))


def _final_kernel(x_ref, vec_ref, sel_ref, aw_ref, ab_ref, lw_ref, lb_ref, o_ref):
    mod = _dot(_silu(vec_ref[...]), aw_ref[...]) + ab_ref[...]      # (B, 2C)
    m = _dot(sel_ref[...], mod)
    sh = m[:, :HIDDEN]
    sc = m[:, HIDDEN:2 * HIDDEN]
    xm = (1.0 + sc) * _layernorm(x_ref[...]) + sh
    o_ref[...] = _dot(xm, lw_ref[...]) + lb_ref[...]


def final_layer_call(p, x2, vec, sel):
    M = x2.shape[0]
    N = p["lin_w"].shape[1]
    return pl.pallas_call(
        _final_kernel,
        out_shape=jax.ShapeDtypeStruct((M, N), jnp.float32),
    )(x2, vec, sel, p["ada_w"], p["ada_b"].reshape(1, -1),
      p["lin_w"], p["lin_b"].reshape(1, -1))


# ----------------------------- plain-JAX glue ------------------------------- #
def timestep_embedding(t, dim, max_period=10000, time_factor=1000.0):
    t = time_factor * t
    half = dim // 2
    freqs = jnp.exp(-math.log(max_period) * jnp.arange(half, dtype=jnp.float32) / half)
    args = t[:, None].astype(jnp.float32) * freqs[None]
    return jnp.concatenate([jnp.cos(args), jnp.sin(args)], axis=-1)


def rope(pos, dim, theta):
    scale = jnp.arange(0, dim, 2, dtype=jnp.float32) / dim
    omega = 1.0 / (theta ** scale)
    out = jnp.einsum("bn,d->bnd", pos.astype(jnp.float32), omega)
    out = jnp.stack([jnp.cos(out), -jnp.sin(out), jnp.sin(out), jnp.cos(out)], axis=-1)
    return out.reshape(*out.shape[:-1], 2, 2)


def embed_nd(ids, axes_dim, theta):
    n_axes = ids.shape[-1]
    emb = jnp.concatenate(
        [rope(ids[..., i], axes_dim[i], theta) for i in range(n_axes)], axis=-3)
    return emb[:, None]


def apply_rope(xq, xk, freqs_cis):
    xq_ = xq.reshape(*xq.shape[:-1], -1, 1, 2)
    xk_ = xk.reshape(*xk.shape[:-1], -1, 1, 2)
    xq_out = freqs_cis[..., 0] * xq_[..., 0] + freqs_cis[..., 1] * xq_[..., 1]
    xk_out = freqs_cis[..., 0] * xk_[..., 0] + freqs_cis[..., 1] * xk_[..., 1]
    return xq_out.reshape(xq.shape), xk_out.reshape(xk.shape)


def _split_heads(qkv2, B, L):
    # (B*L, 3*HIDDEN) -> q, k, v each (B, NUM_HEADS, L, HEAD_DIM)
    qkv = qkv2.reshape(B, L, 3, NUM_HEADS, HEAD_DIM)
    qkv = jnp.transpose(qkv, (2, 0, 3, 1, 4))
    return qkv[0], qkv[1], qkv[2]


def _qkv_colscale(q_scale, k_scale, extra):
    return jnp.concatenate([
        jnp.tile(q_scale, NUM_HEADS),
        jnp.tile(k_scale, NUM_HEADS),
        jnp.ones((extra,), jnp.float32)])


def _sel_matrix(B, L):
    # one-hot row->batch selector: (B*L, B); rows are batch-major (matches reshape)
    return jnp.repeat(jnp.eye(B, dtype=jnp.float32), L, axis=0)


# ----------------------------- blocks --------------------------------------- #
def double_block(p, img, txt, vec, pe, key_mask, sel_img, sel_txt):
    B, L_img, C = img.shape
    L_txt = txt.shape[1]
    img2 = img.reshape(B * L_img, C)
    txt2 = txt.reshape(B * L_txt, C)

    # img+txt modulation weights concatenated -> one lane-dense 384-wide matmul
    mod_w = jnp.concatenate([p["img_mod_w"], p["txt_mod_w"]], axis=1)
    mod_b = jnp.concatenate([p["img_mod_b"], p["txt_mod_b"]], axis=0)
    img_cs = _qkv_colscale(p["img_q_scale"], p["img_k_scale"], HIDDEN)
    txt_cs = _qkv_colscale(p["txt_q_scale"], p["txt_k_scale"], HIDDEN)

    img_qkv, txt_qkv, mod = double_pre(
        vec, mod_w, mod_b, img2, sel_img, txt2, sel_txt,
        p["img_qkv_w"], p["img_qkv_b"], p["txt_qkv_w"], p["txt_qkv_b"],
        GRP_QKV, MASK_QKV, img_cs, txt_cs)

    img_q, img_k, img_v = _split_heads(img_qkv, B, L_img)
    txt_q, txt_k, txt_v = _split_heads(txt_qkv, B, L_txt)

    q = jnp.concatenate([txt_q, img_q], axis=2)
    k = jnp.concatenate([txt_k, img_k], axis=2)
    v = jnp.concatenate([txt_v, img_v], axis=2)
    q, k = apply_rope(q, k, pe)

    attn = attention_pallas(q, k, v, key_mask)              # (B, L, HIDDEN)
    txt_attn = attn[:, :L_txt].reshape(B * L_txt, HIDDEN)
    img_attn = attn[:, L_txt:].reshape(B * L_img, HIDDEN)

    img_new, txt_new = double_post(
        mod,
        img2, img_attn, sel_img,
        p["img_proj_w"], p["img_proj_b"],
        p["img_mlp0_w"], p["img_mlp0_b"], p["img_mlp1_w"], p["img_mlp1_b"],
        txt2, txt_attn, sel_txt,
        p["txt_proj_w"], p["txt_proj_b"],
        p["txt_mlp0_w"], p["txt_mlp0_b"], p["txt_mlp1_w"], p["txt_mlp1_b"])

    # TODO(synk): img_cond stream / attn & mlp token-select branches (disabled
    # by config: attn_token_select=False, mlp_token_select=False, img_cond=None).
    return img_new.reshape(B, L_img, C), txt_new.reshape(B, L_txt, C), None, None, None


def single_block(p, x, vec, pe, key_mask, sel):
    B, L, C = x.shape
    x2 = x.reshape(B * L, C)
    cs = _qkv_colscale(p["q_scale"], p["k_scale"], HIDDEN + MLP_HIDDEN)

    lin1, mod = single_pre(vec, p["mod_w"], p["mod_b"], x2, sel,
                           p["lin1_w"], p["lin1_b"], GRP_LIN1, MASK_LIN1, cs)

    qkv2 = lin1[:, :3 * HIDDEN]
    mlp2 = lin1[:, 3 * HIDDEN:]
    q, k, v = _split_heads(qkv2, B, L)
    q, k = apply_rope(q, k, pe)
    attn = attention_pallas(q, k, v, key_mask).reshape(B * L, HIDDEN)

    w2a = p["lin2_w"][:HIDDEN]
    w2m = p["lin2_w"][HIDDEN:]
    out = single_post(x2, attn, mlp2, mod, sel, w2a, w2m, p["lin2_b"])
    return out.reshape(B, L, C), None, None


# ----------------------------- full forward --------------------------------- #
@jax.jit
def flux_forward(params, img, timesteps, img_ids, txt, txt_ids, y, txt_mask, img_mask):
    B, L_img, _ = img.shape
    L_txt = txt.shape[1]

    sel_img = _sel_matrix(B, L_img)
    sel_txt = _sel_matrix(B, L_txt)
    sel_all = _sel_matrix(B, L_txt + L_img)

    temb = timestep_embedding(timesteps, 256)
    img_h, txt_h, vec = embed_all(
        params,
        img.reshape(B * L_img, -1).astype(jnp.float32),
        txt.reshape(B * L_txt, -1).astype(jnp.float32),
        temb, y.astype(jnp.float32))
    # guidance_embed=False -> no guidance branch
    img = img_h.reshape(B, L_img, HIDDEN)
    txt = txt_h.reshape(B, L_txt, HIDDEN)

    ids = jnp.concatenate([txt_ids, img_ids], axis=1)
    pe = embed_nd(ids, AXES_DIM, THETA)

    key_mask = jnp.concatenate([txt_mask, img_mask], axis=1).astype(jnp.float32)

    for bp in params["double_blocks"]:
        img, txt, _, _, _ = double_block(bp, img, txt, vec, pe, key_mask,
                                         sel_img, sel_txt)

    x = jnp.concatenate([txt, img], axis=1)
    for bp in params["single_blocks"]:
        x, _, _ = single_block(bp, x, vec, pe, key_mask, sel_all)

    img_x = x[:, L_txt:, :].reshape(B * L_img, HIDDEN)
    out = final_layer_call(params["final"], img_x, vec, sel_img)
    # TODO(synk): classify_mode / discriminator heads and controls injection
    # (not exercised: num_discriminator_heads=0, controls=None).
    return {"output": out.reshape(B, L_img, -1)}


# ----------------------------- param init ----------------------------------- #
def _lin_init(key, din, dout):
    kw, kb = jax.random.split(key)
    return (jax.random.normal(kw, (din, dout), jnp.float32) * 0.02,
            jax.random.normal(kb, (dout,), jnp.float32) * 0.02)


def init_params(key):
    keys = iter(jax.random.split(key, 64))
    p = {}
    p["img_in_w"], p["img_in_b"] = _lin_init(next(keys), IN_CHANNELS, HIDDEN)
    p["txt_in_w"], p["txt_in_b"] = _lin_init(next(keys), CONTEXT_IN_DIM, HIDDEN)

    def mlp_embedder_params(din):
        q = {}
        q["in_w"], q["in_b"] = _lin_init(next(keys), din, HIDDEN)
        q["out_w"], q["out_b"] = _lin_init(next(keys), HIDDEN, HIDDEN)
        return q

    p["time_in"] = mlp_embedder_params(256)
    p["vector_in"] = mlp_embedder_params(VEC_IN_DIM)

    def double_params():
        d = {}
        d["img_mod_w"], d["img_mod_b"] = _lin_init(next(keys), HIDDEN, 6 * HIDDEN)
        d["txt_mod_w"], d["txt_mod_b"] = _lin_init(next(keys), HIDDEN, 6 * HIDDEN)
        d["img_qkv_w"], d["img_qkv_b"] = _lin_init(next(keys), HIDDEN, 3 * HIDDEN)
        d["txt_qkv_w"], d["txt_qkv_b"] = _lin_init(next(keys), HIDDEN, 3 * HIDDEN)
        d["img_proj_w"], d["img_proj_b"] = _lin_init(next(keys), HIDDEN, HIDDEN)
        d["txt_proj_w"], d["txt_proj_b"] = _lin_init(next(keys), HIDDEN, HIDDEN)
        d["img_mlp0_w"], d["img_mlp0_b"] = _lin_init(next(keys), HIDDEN, MLP_HIDDEN)
        d["img_mlp1_w"], d["img_mlp1_b"] = _lin_init(next(keys), MLP_HIDDEN, HIDDEN)
        d["txt_mlp0_w"], d["txt_mlp0_b"] = _lin_init(next(keys), HIDDEN, MLP_HIDDEN)
        d["txt_mlp1_w"], d["txt_mlp1_b"] = _lin_init(next(keys), MLP_HIDDEN, HIDDEN)
        d["img_q_scale"] = jnp.ones((HEAD_DIM,), jnp.float32)
        d["img_k_scale"] = jnp.ones((HEAD_DIM,), jnp.float32)
        d["txt_q_scale"] = jnp.ones((HEAD_DIM,), jnp.float32)
        d["txt_k_scale"] = jnp.ones((HEAD_DIM,), jnp.float32)
        return d

    def single_params():
        s = {}
        s["mod_w"], s["mod_b"] = _lin_init(next(keys), HIDDEN, 3 * HIDDEN)
        s["lin1_w"], s["lin1_b"] = _lin_init(next(keys), HIDDEN, 3 * HIDDEN + MLP_HIDDEN)
        s["lin2_w"], s["lin2_b"] = _lin_init(next(keys), HIDDEN + MLP_HIDDEN, HIDDEN)
        s["q_scale"] = jnp.ones((HEAD_DIM,), jnp.float32)
        s["k_scale"] = jnp.ones((HEAD_DIM,), jnp.float32)
        return s

    p["double_blocks"] = [double_params() for _ in range(DEPTH)]
    p["single_blocks"] = [single_params() for _ in range(DEPTH_SINGLE)]

    f = {}
    f["ada_w"], f["ada_b"] = _lin_init(next(keys), HIDDEN, 2 * HIDDEN)
    f["lin_w"], f["lin_b"] = _lin_init(next(keys), HIDDEN, 1 * 1 * IN_CHANNELS)
    p["final"] = f
    return p


# ----------------------------- main ------------------------------------------ #
if __name__ == "__main__":
    key = jax.random.PRNGKey(0)
    k_param, k_img, k_txt, k_y, k_t = jax.random.split(key, 5)

    params = init_params(k_param)

    B, L_IMG, L_TXT = 2, 8, 4
    img = jax.random.normal(k_img, (B, L_IMG, IN_CHANNELS), jnp.float32)
    txt = jax.random.normal(k_txt, (B, L_TXT, CONTEXT_IN_DIM), jnp.float32)
    y = jax.random.normal(k_y, (B, VEC_IN_DIM), jnp.float32)
    timesteps = jax.random.uniform(k_t, (B,), jnp.float32)

    # positional ids (n_axes = 3, float as in the reference impl)
    img_ids = jnp.stack(
        [jnp.zeros((L_IMG,), jnp.float32),
         jnp.arange(L_IMG, dtype=jnp.float32) // 4,
         jnp.arange(L_IMG, dtype=jnp.float32) % 4],
        axis=-1,
    )[None].repeat(B, axis=0)                      # (B, L_IMG, 3)
    txt_ids = jnp.zeros((B, L_TXT, 3), jnp.float32)

    txt_mask = jnp.ones((B, L_TXT), jnp.float32)
    img_mask = jnp.ones((B, L_IMG), jnp.float32)

    out = flux_forward(params, img, timesteps, img_ids, txt, txt_ids, y,
                       txt_mask, img_mask)
    jax.block_until_ready(out["output"])
    assert out["output"].shape == (B, L_IMG, IN_CHANNELS)
    assert bool(jnp.all(jnp.isfinite(out["output"])))
    print("KERNEL_OK")
</pallas_src>

<mosaic_0001>
module attributes {stable_mosaic.version = 11 : i64} {
  func.func @_embed_kernel(%arg0: memref<16x16xf32, #tpu.memory_space<vmem>>, %arg1: memref<16x32xf32, #tpu.memory_space<vmem>>, %arg2: memref<1x32xf32, #tpu.memory_space<vmem>>, %arg3: memref<8x12xf32, #tpu.memory_space<vmem>>, %arg4: memref<12x32xf32, #tpu.memory_space<vmem>>, %arg5: memref<1x32xf32, #tpu.memory_space<vmem>>, %arg6: memref<2x256xf32, #tpu.memory_space<vmem>>, %arg7: memref<256x32xf32, #tpu.memory_space<vmem>>, %arg8: memref<1x32xf32, #tpu.memory_space<vmem>>, %arg9: memref<32x32xf32, #tpu.memory_space<vmem>>, %arg10: memref<1x32xf32, #tpu.memory_space<vmem>>, %arg11: memref<2x8xf32, #tpu.memory_space<vmem>>, %arg12: memref<8x32xf32, #tpu.memory_space<vmem>>, %arg13: memref<1x32xf32, #tpu.memory_space<vmem>>, %arg14: memref<32x32xf32, #tpu.memory_space<vmem>>, %arg15: memref<1x32xf32, #tpu.memory_space<vmem>>, %arg16: memref<16x32xf32, #tpu.memory_space<vmem>>, %arg17: memref<8x32xf32, #tpu.memory_space<vmem>>, %arg18: memref<2x32xf32, #tpu.memory_space<vmem>>) attributes {dimension_semantics = [], scalar_prefetch = 0 : i64, scratch_operands = 0 : i64, tpu.core_type = #tpu.core_type<tc>} {
    %c0 = arith.constant 0 : index
    %c0_0 = arith.constant 0 : index
    %0 = vector.load %arg0[%c0, %c0_0] : memref<16x16xf32, #tpu.memory_space<vmem>>, vector<16x16xf32>
    %c0_1 = arith.constant 0 : index
    %c0_2 = arith.constant 0 : index
    %1 = vector.load %arg1[%c0_1, %c0_2] : memref<16x32xf32, #tpu.memory_space<vmem>>, vector<16x32xf32>
    %cst = arith.constant dense<0.000000e+00> : vector<16x32xf32>
    %2 = tpu.matmul %0, %1, %cst {dimension_numbers = #tpu.dot_dimension_numbers<[1], [0], [0], [1], [0, 0, 1, 1], [], []>} : vector<16x16xf32>, vector<16x32xf32>, vector<16x32xf32> -> vector<16x32xf32>
    %c0_3 = arith.constant 0 : index
    %c0_4 = arith.constant 0 : index
    %3 = vector.load %arg2[%c0_3, %c0_4] : memref<1x32xf32, #tpu.memory_space<vmem>>, vector<1x32xf32>
    %4 = vector.broadcast %3 : vector<1x32xf32> to vector<16x32xf32>
    %5 = arith.addf %2, %4 : vector<16x32xf32>
    %c0_5 = arith.constant 0 : index
    %c0_6 = arith.constant 0 : index
    %6 = vector.load %arg16[%c0_5, %c0_6] : memref<16x32xf32, #tpu.memory_space<vmem>>, vector<16x32xf32>
    tpu.vector_store %arg16[%c0_5, %c0_6], %5 {strides = array<i32>} : memref<16x32xf32, #tpu.memory_space<vmem>>, vector<16x32xf32>,
    %c0_7 = arith.constant 0 : index
    %c0_8 = arith.constant 0 : index
    %7 = vector.load %arg3[%c0_7, %c0_8] : memref<8x12xf32, #tpu.memory_space<vmem>>, vector<8x12xf32>
    %c0_9 = arith.constant 0 : index
    %c0_10 = arith.constant 0 : index
    %8 = vector.load %arg4[%c0_9, %c0_10] : memref<12x32xf32, #tpu.memory_space<vmem>>, vector<12x32xf32>
    %cst_11 = arith.constant dense<0.000000e+00> : vector<8x32xf32>
    %9 = tpu.matmul %7, %8, %cst_11 {dimension_numbers = #tpu.dot_dimension_numbers<[1], [0], [0], [1], [0, 0, 1, 1], [], []>} : vector<8x12xf32>, vector<12x32xf32>, vector<8x32xf32> -> vector<8x32xf32>
    %c0_12 = arith.constant 0 : index
    %c0_13 = arith.constant 0 : index
    %10 = vector.load %arg5[%c0_12, %c0_13] : memref<1x32xf32, #tpu.memory_space<vmem>>, vector<1x32xf32>
    %11 = vector.broadcast %10 : vector<1x32xf32> to vector<8x32xf32>
    %12 = arith.addf %9, %11 : vector<8x32xf32>
    %c0_14 = arith.constant 0 : index
    %c0_15 = arith.constant 0 : index
    %13 = vector.load %arg17[%c0_14, %c0_15] : memref<8x32xf32, #tpu.memory_space<vmem>>, vector<8x32xf32>
    tpu.vector_store %arg17[%c0_14, %c0_15], %12 {strides = array<i32>} : memref<8x32xf32, #tpu.memory_space<vmem>>, vector<8x32xf32>,
    %c0_16 = arith.constant 0 : index
    %c0_17 = arith.constant 0 : index
    %14 = vector.load %arg6[%c0_16, %c0_17] : memref<2x256xf32, #tpu.memory_space<vmem>>, vector<2x256xf32>
    %c0_18 = arith.constant 0 : index
    %c0_19 = arith.constant 0 : index
    %15 = vector.load %arg7[%c0_18, %c0_19] : memref<256x32xf32, #tpu.memory_space<vmem>>, vector<256x32xf32>
    %cst_20 = arith.constant dense<0.000000e+00> : vector<2x32xf32>
    %16 = tpu.matmul %14, %15, %cst_20 {dimension_numbers = #tpu.dot_dimension_numbers<[1], [0], [0], [1], [0, 0, 1, 1], [], []>} : vector<2x256xf32>, vector<256x32xf32>, vector<2x32xf32> -> vector<2x32xf32>
    %c0_21 = arith.constant 0 : index
    %c0_22 = arith.constant 0 : index
    %17 = vector.load %arg8[%c0_21, %c0_22] : memref<1x32xf32, #tpu.memory_space<vmem>>, vector<1x32xf32>
    %18 = vector.broadcast %17 : vector<1x32xf32> to vector<2x32xf32>
    %19 = arith.addf %16, %18 : vector<2x32xf32>
    %20 = arith.negf %19 : vector<2x32xf32>
    %21 = math.exp %20 : vector<2x32xf32>
    %cst_23 = arith.constant 1.000000e+00 : f32
    %22 = vector.broadcast %cst_23 : f32 to vector<2x32xf32>
    %23 = arith.addf %22, %21 : vector<2x32xf32>
    %24 = arith.divf %22, %23 : vector<2x32xf32>
    %25 = arith.mulf %19, %24 : vector<2x32xf32>
    %c0_24 = arith.constant 0 : index
    %c0_25 = arith.constant 0 : index
    %26 = vector.load %arg9[%c0_24, %c0_25] : memref<32x32xf32, #tpu.memory_space<vmem>>, vector<32x32xf32>
    %cst_26 = arith.constant dense<0.000000e+00> : vector<2x32xf32>
    %27 = tpu.matmul %25, %26, %cst_26 {dimension_numbers = #tpu.dot_dimension_numbers<[1], [0], [0], [1], [0, 0, 1, 1], [], []>} : vector<2x32xf32>, vector<32x32xf32>, vector<2x32xf32> -> vector<2x32xf32>
    %c0_27 = arith.constant 0 : index
    %c0_28 = arith.constant 0 : index
    %28 = vector.load %arg10[%c0_27, %c0_28] : memref<1x32xf32, #tpu.memory_space<vmem>>, vector<1x32xf32>
    %29 = vector.broadcast %28 : vector<1x32xf32> to vector<2x32xf32>
    %30 = arith.addf %27, %29 : vector<2x32xf32>
    %c0_29 = arith.constant 0 : index
    %c0_30 = arith.constant 0 : index
    %31 = vector.load %arg11[%c0_29, %c0_30] : memref<2x8xf32, #tpu.memory_space<vmem>>, vector<2x8xf32>
    %c0_31 = arith.constant 0 : index
    %c0_32 = arith.constant 0 : index
    %32 = vector.load %arg12[%c0_31, %c0_32] : memref<8x32xf32, #tpu.memory_space<vmem>>, vector<8x32xf32>
    %cst_33 = arith.constant dense<0.000000e+00> : vector<2x32xf32>
    %33 = tpu.matmul %31, %32, %cst_33 {dimension_numbers = #tpu.dot_dimension_numbers<[1], [0], [0], [1], [0, 0, 1, 1], [], []>} : vector<2x8xf32>, vector<8x32xf32>, vector<2x32xf32> -> vector<2x32xf32>
    %c0_34 = arith.constant 0 : index
    %c0_35 = arith.constant 0 : index
    %34 = vector.load %arg13[%c0_34, %c0_35] : memref<1x32xf32, #tpu.memory_space<vmem>>, vector<1x32xf32>
    %35 = vector.broadcast %34 : vector<1x32xf32> to vector<2x32xf32>
    %36 = arith.addf %33, %35 : vector<2x32xf32>
    %37 = arith.negf %36 : vector<2x32xf32>
    %38 = math.exp %37 : vector<2x32xf32>
    %cst_36 = arith.constant 1.000000e+00 : f32
    %39 = vector.broadcast %cst_36 : f32 to vector<2x32xf32>
    %40 = arith.addf %39, %38 : vector<2x32xf32>
    %41 = arith.divf %39, %40 : vector<2x32xf32>
    %42 = arith.mulf %36, %41 : vector<2x32xf32>
    %c0_37 = arith.constant 0 : index
    %c0_38 = arith.constant 0 : index
    %43 = vector.load %arg14[%c0_37, %c0_38] : memref<32x32xf32, #tpu.memory_space<vmem>>, vector<32x32xf32>
    %cst_39 = arith.constant dense<0.000000e+00> : vector<2x32xf32>
    %44 = tpu.matmul %42, %43, %cst_39 {dimension_numbers = #tpu.dot_dimension_numbers<[1], [0], [0], [1], [0, 0, 1, 1], [], []>} : vector<2x32xf32>, vector<32x32xf32>, vector<2x32xf32> -> vector<2x32xf32>
    %c0_40 = arith.constant 0 : index
    %c0_41 = arith.constant 0 : index
    %45 = vector.load %arg15[%c0_40, %c0_41] : memref<1x32xf32, #tpu.memory_space<vmem>>, vector<1x32xf32>
    %46 = vector.broadcast %45 : vector<1x32xf32> to vector<2x32xf32>
    %47 = arith.addf %44, %46 : vector<2x32xf32>
    %48 = arith.addf %30, %47 : vector<2x32xf32>
    %c0_42 = arith.constant 0 : index
    %c0_43 = arith.constant 0 : index
    %49 = vector.load %arg18[%c0_42, %c0_43] : memref<2x32xf32, #tpu.memory_space<vmem>>, vector<2x32xf32>
    tpu.vector_store %arg18[%c0_42, %c0_43], %48 {strides = array<i32>} : memref<2x32xf32, #tpu.memory_space<vmem>>, vector<2x32xf32>,
    return
  }
}

module attributes {stable_mosaic.version = 11 : i64} {
  func.func @_double_pre_kernel(%arg0: memref<2x32xf32, #tpu.memory_space<vmem>>, %arg1: memref<32x384xf32, #tpu.memory_space<vmem>>, %arg2: memref<1x384xf32, #tpu.memory_space<vmem>>, %arg3: memref<16x32xf32, #tpu.memory_space<vmem>>, %arg4: memref<16x2xf32, #tpu.memory_space<vmem>>, %arg5: memref<8x32xf32, #tpu.memory_space<vmem>>, %arg6: memref<8x2xf32, #tpu.memory_space<vmem>>, %arg7: memref<32x96xf32, #tpu.memory_space<vmem>>, %arg8: memref<1x96xf32, #tpu.memory_space<vmem>>, %arg9: memref<32x96xf32, #tpu.memory_space<vmem>>, %arg10: memref<1x96xf32, #tpu.memory_space<vmem>>, %arg11: memref<96x96xf32, #tpu.memory_space<vmem>>, %arg12: memref<1x96xf32, #tpu.memory_space<vmem>>, %arg13: memref<1x96xf32, #tpu.memory_space<vmem>>, %arg14: memref<1x96xf32, #tpu.memory_space<vmem>>, %arg15: memref<16x96xf32, #tpu.memory_space<vmem>>, %arg16: memref<8x96xf32, #tpu.memory_space<vmem>>, %arg17: memref<2x384xf32, #tpu.memory_space<vmem>>) attributes {dimension_semantics = [], scalar_prefetch = 0 : i64, scratch_operands = 0 : i64, tpu.core_type = #tpu.core_type<tc>} {
    %c0 = arith.constant 0 : index
    %c0_0 = arith.constant 0 : index
    %0 = vector.load %arg0[%c0, %c0_0] : memref<2x32xf32, #tpu.memory_space<vmem>>, vector<2x32xf32>
    %1 = arith.negf %0 : vector<2x32xf32>
    %2 = math.exp %1 : vector<2x32xf32>
    %cst = arith.constant 1.000000e+00 : f32
    %3 = vector.broadcast %cst : f32 to vector<2x32xf32>
    %4 = arith.addf %3, %2 : vector<2x32xf32>
    %5 = arith.divf %3, %4 : vector<2x32xf32>
    %6 = arith.mulf %0, %5 : vector<2x32xf32>
    %c0_1 = arith.constant 0 : index
    %c0_2 = arith.constant 0 : index
    %7 = vector.load %arg1[%c0_1, %c0_2] : memref<32x384xf32, #tpu.memory_space<vmem>>, vector<32x384xf32>
    %cst_3 = arith.constant dense<0.000000e+00> : vector<2x384xf32>
    %8 = tpu.matmul %6, %7, %cst_3 {dimension_numbers = #tpu.dot_dimension_numbers<[1], [0], [0], [1], [0, 0, 1, 1], [], []>} : vector<2x32xf32>, vector<32x384xf32>, vector<2x384xf32> -> vector<2x384xf32>
    %c0_4 = arith.constant 0 : index
    %c0_5 = arith.constant 0 : index
    %9 = vector.load %arg2[%c0_4, %c0_5] : memref<1x384xf32, #tpu.memory_space<vmem>>, vector<1x384xf32>
    %10 = vector.broadcast %9 : vector<1x384xf32> to vector<2x384xf32>
    %11 = arith.addf %8, %10 : vector<2x384xf32>
    %c0_6 = arith.constant 0 : index
    %c0_7 = arith.constant 0 : index
    %12 = vector.load %arg17[%c0_6, %c0_7] : memref<2x384xf32, #tpu.memory_space<vmem>>, vector<2x384xf32>
    tpu.vector_store %arg17[%c0_6, %c0_7], %11 {strides = array<i32>} : memref<2x384xf32, #tpu.memory_space<vmem>>, vector<2x384xf32>,
    %c0_8 = arith.constant 0 : index
    %c0_9 = arith.constant 0 : index
    %13 = vector.load %arg11[%c0_8, %c0_9] : memref<96x96xf32, #tpu.memory_space<vmem>>, vector<96x96xf32>
    %c0_10 = arith.constant 0 : index
    %c0_11 = arith.constant 0 : index
    %14 = vector.load %arg12[%c0_10, %c0_11] : memref<1x96xf32, #tpu.memory_space<vmem>>, vector<1x96xf32>
    %c0_12 = arith.constant 0 : index
    %c0_13 = arith.constant 0 : index
    %15 = vector.load %arg3[%c0_12, %c0_13] : memref<16x32xf32, #tpu.memory_space<vmem>>, vector<16x32xf32>
    %c0_14 = arith.constant 0 : index
    %c0_15 = arith.constant 0 : index
    %16 = vector.load %arg4[%c0_14, %c0_15] : memref<16x2xf32, #tpu.memory_space<vmem>>, vector<16x2xf32>
    %c0_16 = arith.constant 0 : index
    %c0_17 = arith.constant 0 : index
    %17 = vector.load %arg7[%c0_16, %c0_17] : memref<32x96xf32, #tpu.memory_space<vmem>>, vector<32x96xf32>
    %c0_18 = arith.constant 0 : index
    %c0_19 = arith.constant 0 : index
    %18 = vector.load %arg8[%c0_18, %c0_19] : memref<1x96xf32, #tpu.memory_space<vmem>>, vector<1x96xf32>
    %c0_20 = arith.constant 0 : index
    %c0_21 = arith.constant 0 : index
    %19 = vector.load %arg13[%c0_20, %c0_21] : memref<1x96xf32, #tpu.memory_space<vmem>>, vector<1x96xf32>
    %20 = vector.extract_strided_slice %11 {offsets = [0, 0], sizes = [2, 64], strides = [1, 1]} : vector<2x384xf32> to vector<2x64xf32>
    %cst_22 = arith.constant dense<0.000000e+00> : vector<16x64xf32>
    %21 = tpu.matmul %16, %20, %cst_22 {dimension_numbers = #tpu.dot_dimension_numbers<[1], [0], [0], [1], [0, 0, 1, 1], [], []>} : vector<16x2xf32>, vector<2x64xf32>, vector<16x64xf32> -> vector<16x64xf32>
    %22 = vector.extract_strided_slice %21 {offsets = [0, 0], sizes = [16, 32], strides = [1, 1]} : vector<16x64xf32> to vector<16x32xf32>
    %23 = vector.extract_strided_slice %21 {offsets = [0, 32], sizes = [16, 32], strides = [1, 1]} : vector<16x64xf32> to vector<16x32xf32>
    %cst_23 = arith.constant 1.000000e+00 : f32
    %24 = vector.broadcast %cst_23 : f32 to vector<16x32xf32>
    %25 = arith.addf %24, %23 : vector<16x32xf32>
    %cst_24 = arith.constant dense<0.000000e+00> : vector<16xf32>
    %26 = vector.multi_reduction <add>, %15, %cst_24 [1] : vector<16x32xf32> to vector<16xf32>
    %27 = vector.shape_cast %26 : vector<16xf32> to vector<16x1xf32>
    %cst_25 = arith.constant 3.200000e+01 : f32
    %28 = vector.broadcast %cst_25 : f32 to vector<16x1xf32>
    %29 = arith.divf %27, %28 : vector<16x1xf32>
    %30 = vector.broadcast %29 : vector<16x1xf32> to vector<16x32xf32>
    %31 = arith.subf %15, %30 : vector<16x32xf32>
    %32 = arith.mulf %31, %31 : vector<16x32xf32>
    %cst_26 = arith.constant dense<0.000000e+00> : vector<16xf32>
    %33 = vector.multi_reduction <add>, %32, %cst_26 [1] : vector<16x32xf32> to vector<16xf32>
    %34 = vector.shape_cast %33 : vector<16xf32> to vector<16x1xf32>
    %cst_27 = arith.constant 3.200000e+01 : f32
    %35 = vector.broadcast %cst_27 : f32 to vector<16x1xf32>
    %36 = arith.divf %34, %35 : vector<16x1xf32>
    %cst_28 = arith.constant 9.99999997E-7 : f32
    %37 = vector.broadcast %cst_28 : f32 to vector<16x1xf32>
    %38 = arith.addf %36, %37 : vector<16x1xf32>
    %39 = math.rsqrt %38 : vector<16x1xf32>
    %40 = vector.broadcast %39 : vector<16x1xf32> to vector<16x32xf32>
    %41 = arith.mulf %31, %40 : vector<16x32xf32>
    %42 = arith.mulf %25, %41 : vector<16x32xf32>
    %43 = arith.addf %42, %22 : vector<16x32xf32>
    %cst_29 = arith.constant dense<0.000000e+00> : vector<16x96xf32>
    %44 = tpu.matmul %43, %17, %cst_29 {dimension_numbers = #tpu.dot_dimension_numbers<[1], [0], [0], [1], [0, 0, 1, 1], [], []>} : vector<16x32xf32>, vector<32x96xf32>, vector<16x96xf32> -> vector<16x96xf32>
    %45 = vector.broadcast %18 : vector<1x96xf32> to vector<16x96xf32>
    %46 = arith.addf %44, %45 : vector<16x96xf32>
    %47 = arith.mulf %46, %46 : vector<16x96xf32>
    %cst_30 = arith.constant dense<0.000000e+00> : vector<16x96xf32>
    %48 = tpu.matmul %47, %13, %cst_30 {dimension_numbers = #tpu.dot_dimension_numbers<[1], [0], [0], [1], [0, 0, 1, 1], [], []>} : vector<16x96xf32>, vector<96x96xf32>, vector<16x96xf32> -> vector<16x96xf32>
    %cst_31 = arith.constant 9.99999997E-7 : f32
    %49 = vector.broadcast %cst_31 : f32 to vector<16x96xf32>
    %50 = arith.addf %48, %49 : vector<16x96xf32>
    %51 = math.rsqrt %50 : vector<16x96xf32>
    %cst_32 = arith.constant 5.000000e-01 : f32
    %52 = vector.broadcast %cst_32 : f32 to vector<1x96xf32>
    %53 = arith.cmpf ogt, %14, %52 : vector<1x96xf32>
    %54 = vector.broadcast %19 : vector<1x96xf32> to vector<16x96xf32>
    %55 = arith.mulf %51, %54 : vector<16x96xf32>
    %cst_33 = arith.constant 1.000000e+00 : f32
    %56 = vector.shape_cast %53 : vector<1x96xi1> to vector<1x96xi1>
    %57 = vector.broadcast %56 : vector<1x96xi1> to vector<16x96xi1>
    %58 = vector.broadcast %cst_33 : f32 to vector<16x96xf32>
    %59 = arith.select %57, %55, %58 : vector<16x96xi1>, vector<16x96xf32>
    %60 = arith.mulf %46, %59 : vector<16x96xf32>
    %c0_34 = arith.constant 0 : index
    %c0_35 = arith.constant 0 : index
    %61 = vector.load %arg15[%c0_34, %c0_35] : memref<16x96xf32, #tpu.memory_space<vmem>>, vector<16x96xf32>
    tpu.vector_store %arg15[%c0_34, %c0_35], %60 {strides = array<i32>} : memref<16x96xf32, #tpu.memory_space<vmem>>, vector<16x96xf32>,
    %c0_36 = arith.constant 0 : index
    %c0_37 = arith.constant 0 : index
    %62 = vector.load %arg5[%c0_36, %c0_37] : memref<8x32xf32, #tpu.memory_space<vmem>>, vector<8x32xf32>
    %c0_38 = arith.constant 0 : index
    %c0_39 = arith.constant 0 : index
    %63 = vector.load %arg6[%c0_38, %c0_39] : memref<8x2xf32, #tpu.memory_space<vmem>>, vector<8x2xf32>
    %c0_40 = arith.constant 0 : index
    %c0_41 = arith.constant 0 : index
    %64 = vector.load %arg9[%c0_40, %c0_41] : memref<32x96xf32, #tpu.memory_space<vmem>>, vector<32x96xf32>
    %c0_42 = arith.constant 0 : index
    %c0_43 = arith.constant 0 : index
    %65 = vector.load %arg10[%c0_42, %c0_43] : memref<1x96xf32, #tpu.memory_space<vmem>>, vector<1x96xf32>
    %c0_44 = arith.constant 0 : index
    %c0_45 = arith.constant 0 : index
    %66 = vector.load %arg14[%c0_44, %c0_45] : memref<1x96xf32, #tpu.memory_space<vmem>>, vector<1x96xf32>
    %67 = vector.extract_strided_slice %11 {offsets = [0, 192], sizes = [2, 64], strides = [1, 1]} : vector<2x384xf32> to vector<2x64xf32>
    %cst_46 = arith.constant dense<0.000000e+00> : vector<8x64xf32>
    %68 = tpu.matmul %63, %67, %cst_46 {dimension_numbers = #tpu.dot_dimension_numbers<[1], [0], [0], [1], [0, 0, 1, 1], [], []>} : vector<8x2xf32>, vector<2x64xf32>, vector<8x64xf32> -> vector<8x64xf32>
    %69 = vector.extract_strided_slice %68 {offsets = [0, 0], sizes = [8, 32], strides = [1, 1]} : vector<8x64xf32> to vector<8x32xf32>
    %70 = vector.extract_strided_slice %68 {offsets = [0, 32], sizes = [8, 32], strides = [1, 1]} : vector<8x64xf32> to vector<8x32xf32>
    %cst_47 = arith.constant 1.000000e+00 : f32
    %71 = vector.broadcast %cst_47 : f32 to vector<8x32xf32>
    %72 = arith.addf %71, %70 : vector<8x32xf32>
    %cst_48 = arith.constant dense<0.000000e+00> : vector<8xf32>
    %73 = vector.multi_reduction <add>, %62, %cst_48 [1] : vector<8x32xf32> to vector<8xf32>
    %74 = vector.shape_cast %73 : vector<8xf32> to vector<8x1xf32>
    %cst_49 = arith.constant 3.200000e+01 : f32
    %75 = vector.broadcast %cst_49 : f32 to vector<8x1xf32>
    %76 = arith.divf %74, %75 : vector<8x1xf32>
    %77 = vector.broadcast %76 : vector<8x1xf32> to vector<8x32xf32>
    %78 = arith.subf %62, %77 : vector<8x32xf32>
    %79 = arith.mulf %78, %78 : vector<8x32xf32>
    %cst_50 = arith.constant dense<0.000000e+00> : vector<8xf32>
    %80 = vector.multi_reduction <add>, %79, %cst_50 [1] : vector<8x32xf32> to vector<8xf32>
    %81 = vector.shape_cast %80 : vector<8xf32> to vector<8x1xf32>
    %cst_51 = arith.constant 3.200000e+01 : f32
    %82 = vector.broadcast %cst_51 : f32 to vector<8x1xf32>
    %83 = arith.divf %81, %82 : vector<8x1xf32>
    %cst_52 = arith.constant 9.99999997E-7 : f32
    %84 = vector.broadcast %cst_52 : f32 to vector<8x1xf32>
    %85 = arith.addf %83, %84 : vector<8x1xf32>
    %86 = math.rsqrt %85 : vector<8x1xf32>
    %87 = vector.broadcast %86 : vector<8x1xf32> to vector<8x32xf32>
    %88 = arith.mulf %78, %87 : vector<8x32xf32>
    %89 = arith.mulf %72, %88 : vector<8x32xf32>
    %90 = arith.addf %89, %69 : vector<8x32xf32>
    %cst_53 = arith.constant dense<0.000000e+00> : vector<8x96xf32>
    %91 = tpu.matmul %90, %64, %cst_53 {dimension_numbers = #tpu.dot_dimension_numbers<[1], [0], [0], [1], [0, 0, 1, 1], [], []>} : vector<8x32xf32>, vector<32x96xf32>, vector<8x96xf32> -> vector<8x96xf32>
    %92 = vector.broadcast %65 : vector<1x96xf32> to vector<8x96xf32>
    %93 = arith.addf %91, %92 : vector<8x96xf32>
    %94 = arith.mulf %93, %93 : vector<8x96xf32>
    %cst_54 = arith.constant dense<0.000000e+00> : vector<8x96xf32>
    %95 = tpu.matmul %94, %13, %cst_54 {dimension_numbers = #tpu.dot_dimension_numbers<[1], [0], [0], [1], [0, 0, 1, 1], [], []>} : vector<8x96xf32>, vector<96x96xf32>, vector<8x96xf32> -> vector<8x96xf32>
    %cst_55 = arith.constant 9.99999997E-7 : f32
    %96 = vector.broadcast %cst_55 : f32 to vector<8x96xf32>
    %97 = arith.addf %95, %96 : vector<8x96xf32>
    %98 = math.rsqrt %97 : vector<8x96xf32>
    %cst_56 = arith.constant 5.000000e-01 : f32
    %99 = vector.broadcast %cst_56 : f32 to vector<1x96xf32>
    %100 = arith.cmpf ogt, %14, %99 : vector<1x96xf32>
    %101 = vector.broadcast %66 : vector<1x96xf32> to vector<8x96xf32>
    %102 = arith.mulf %98, %101 : vector<8x96xf32>
    %cst_57 = arith.constant 1.000000e+00 : f32
    %103 = vector.shape_cast %100 : vector<1x96xi1> to vector<1x96xi1>
    %104 = vector.broadcast %103 : vector<1x96xi1> to vector<8x96xi1>
    %105 = vector.broadcast %cst_57 : f32 to vector<8x96xf32>
    %106 = arith.select %104, %102, %105 : vector<8x96xi1>, vector<8x96xf32>
    %107 = arith.mulf %93, %106 : vector<8x96xf32>
    %c0_58 = arith.constant 0 : index
    %c0_59 = arith.constant 0 : index
    %108 = vector.load %arg16[%c0_58, %c0_59] : memref<8x96xf32, #tpu.memory_space<vmem>>, vector<8x96xf32>
    tpu.vector_store %arg16[%c0_58, %c0_59], %107 {strides = array<i32>} : memref<8x96xf32, #tpu.memory_space<vmem>>, vector<8x96xf32>,
    return
  }
}

module attributes {stable_mosaic.version = 11 : i64} {
  func.func @_attn_kernel(%arg0: memref<4x12x16xf32, #tpu.memory_space<vmem>>, %arg1: memref<4x12x16xf32, #tpu.memory_space<vmem>>, %arg2: memref<4x12x16xf32, #tpu.memory_space<vmem>>, %arg3: memref<4x1x12xf32, #tpu.memory_space<vmem>>, %arg4: memref<2x12x32xf32, #tpu.memory_space<vmem>>) attributes {dimension_semantics = [], scalar_prefetch = 0 : i64, scratch_operands = 0 : i64, tpu.core_type = #tpu.core_type<tc>} {
    %c0 = arith.constant 0 : index
    %c0_0 = arith.constant 0 : index
    %c0_1 = arith.constant 0 : index
    %0 = vector.load %arg0[%c0, %c0_0, %c0_1] : memref<4x12x16xf32, #tpu.memory_space<vmem>>, vector<4x12x16xf32>
    %c0_2 = arith.constant 0 : index
    %c0_3 = arith.constant 0 : index
    %c0_4 = arith.constant 0 : index
    %1 = vector.load %arg1[%c0_2, %c0_3, %c0_4] : memref<4x12x16xf32, #tpu.memory_space<vmem>>, vector<4x12x16xf32>
    %c0_5 = arith.constant 0 : index
    %c0_6 = arith.constant 0 : index
    %c0_7 = arith.constant 0 : index
    %2 = vector.load %arg2[%c0_5, %c0_6, %c0_7] : memref<4x12x16xf32, #tpu.memory_space<vmem>>, vector<4x12x16xf32>
    "tpu.trace_start"() <{level = 10 : i32, message = "bqd,bkd->bqk"}> : () -> ()
    %cst = arith.constant dense<0.000000e+00> : vector<4x12x12xf32>
    %3 = tpu.matmul %0, %1, %cst {dimension_numbers = #tpu.dot_dimension_numbers<[2], [2], [1], [1], [0, 0, 0, 1, 1, 1], [0], [0]>} : vector<4x12x16xf32>, vector<4x12x16xf32>, vector<4x12x12xf32> -> vector<4x12x12xf32>
    "tpu.trace_stop"() : () -> ()
    %cst_8 = arith.constant 2.500000e-01 : f32
    %4 = vector.broadcast %cst_8 : f32 to vector<4x12x12xf32>
    %5 = arith.mulf %3, %4 : vector<4x12x12xf32>
    %c0_9 = arith.constant 0 : index
    %c0_10 = arith.constant 0 : index
    %c0_11 = arith.constant 0 : index
    %6 = vector.load %arg3[%c0_9, %c0_10, %c0_11] : memref<4x1x12xf32, #tpu.memory_space<vmem>>, vector<4x1x12xf32>
    %cst_12 = arith.constant 5.000000e-01 : f32
    %7 = vector.broadcast %cst_12 : f32 to vector<4x1x12xf32>
    %8 = arith.cmpf ogt, %6, %7 : vector<4x1x12xf32>
    %cst_13 = arith.constant -1.000000e+30 : f32
    %9 = vector.shape_cast %8 : vector<4x1x12xi1> to vector<4x1x12xi1>
    %10 = vector.broadcast %9 : vector<4x1x12xi1> to vector<4x12x12xi1>
    %11 = vector.broadcast %cst_13 : f32 to vector<4x12x12xf32>
    %12 = arith.select %10, %5, %11 : vector<4x12x12xi1>, vector<4x12x12xf32>
    %cst_14 = arith.constant dense<0xFF800000> : vector<4x12xf32>
    %13 = vector.multi_reduction <maximumf>, %12, %cst_14 [2] : vector<4x12x12xf32> to vector<4x12xf32>
    %14 = vector.shape_cast %13 : vector<4x12xf32> to vector<4x12x1xf32>
    %15 = vector.broadcast %14 : vector<4x12x1xf32> to vector<4x12x12xf32>
    %16 = arith.subf %12, %15 : vector<4x12x12xf32>
    %17 = math.exp %16 : vector<4x12x12xf32>
    %cst_15 = arith.constant dense<0.000000e+00> : vector<4x12xf32>
    %18 = vector.multi_reduction <add>, %17, %cst_15 [2] : vector<4x12x12xf32> to vector<4x12xf32>
    %19 = vector.shape_cast %18 : vector<4x12xf32> to vector<4x12x1xf32>
    %20 = tpu.reciprocal %19 {approx = true} : vector<4x12x1xf32> -> vector<4x12x1xf32>
    %21 = vector.broadcast %20 : vector<4x12x1xf32> to vector<4x12x12xf32>
    %22 = arith.mulf %17, %21 : vector<4x12x12xf32>
    "tpu.trace_start"() <{level = 10 : i32, message = "bqk,bkd->bqd"}> : () -> ()
    %cst_16 = arith.constant dense<0.000000e+00> : vector<4x12x16xf32>
    %23 = tpu.matmul %22, %2, %cst_16 {dimension_numbers = #tpu.dot_dimension_numbers<[2], [1], [1], [2], [0, 0, 0, 1, 1, 2], [0], [0]>} : vector<4x12x12xf32>, vector<4x12x16xf32>, vector<4x12x16xf32> -> vector<4x12x16xf32>
    "tpu.trace_stop"() : () -> ()
    %24 = vector.shape_cast %23 : vector<4x12x16xf32> to vector<2x2x12x16xf32>
    %25 = vector.extract_strided_slice %24 {offsets = [0, 0, 0, 0], sizes = [2, 1, 12, 16], strides = [1, 1, 1, 1]} : vector<2x2x12x16xf32> to vector<2x1x12x16xf32>
    %26 = vector.shape_cast %25 : vector<2x1x12x16xf32> to vector<2x12x16xf32>
    %27 = vector.extract_strided_slice %24 {offsets = [0, 1, 0, 0], sizes = [2, 1, 12, 16], strides = [1, 1, 1, 1]} : vector<2x2x12x16xf32> to vector<2x1x12x16xf32>
    %28 = vector.shape_cast %27 : vector<2x1x12x16xf32> to vector<2x12x16xf32>
    %29 = tpu.concatenate %26, %28 in 2 : vector<2x12x16xf32>, vector<2x12x16xf32> -> vector<2x12x32xf32>
    %c0_17 = arith.constant 0 : index
    %c0_18 = arith.constant 0 : index
    %c0_19 = arith.constant 0 : index
    %30 = vector.load %arg4[%c0_17, %c0_18, %c0_19] : memref<2x12x32xf32, #tpu.memory_space<vmem>>, vector<2x12x32xf32>
    tpu.vector_store %arg4[%c0_17, %c0_18, %c0_19], %29 {strides = array<i32>} : memref<2x12x32xf32, #tpu.memory_space<vmem>>, vector<2x12x32xf32>,
    return
  }
}

module attributes {stable_mosaic.version = 11 : i64} {
  func.func @_double_post_kernel(%arg0: memref<2x384xf32, #tpu.memory_space<vmem>>, %arg1: memref<16x32xf32, #tpu.memory_space<vmem>>, %arg2: memref<16x32xf32, #tpu.memory_space<vmem>>, %arg3: memref<16x2xf32, #tpu.memory_space<vmem>>, %arg4: memref<32x32xf32, #tpu.memory_space<vmem>>, %arg5: memref<1x32xf32, #tpu.memory_space<vmem>>, %arg6: memref<32x128xf32, #tpu.memory_space<vmem>>, %arg7: memref<1x128xf32, #tpu.memory_space<vmem>>, %arg8: memref<128x32xf32, #tpu.memory_space<vmem>>, %arg9: memref<1x32xf32, #tpu.memory_space<vmem>>, %arg10: memref<8x32xf32, #tpu.memory_space<vmem>>, %arg11: memref<8x32xf32, #tpu.memory_space<vmem>>, %arg12: memref<8x2xf32, #tpu.memory_space<vmem>>, %arg13: memref<32x32xf32, #tpu.memory_space<vmem>>, %arg14: memref<1x32xf32, #tpu.memory_space<vmem>>, %arg15: memref<32x128xf32, #tpu.memory_space<vmem>>, %arg16: memref<1x128xf32, #tpu.memory_space<vmem>>, %arg17: memref<128x32xf32, #tpu.memory_space<vmem>>, %arg18: memref<1x32xf32, #tpu.memory_space<vmem>>, %arg19: memref<16x32xf32, #tpu.memory_space<vmem>>, %arg20: memref<8x32xf32, #tpu.memory_space<vmem>>) attributes {dimension_semantics = [], scalar_prefetch = 0 : i64, scratch_operands = 0 : i64, tpu.core_type = #tpu.core_type<tc>} {
    %c0 = arith.constant 0 : index
    %c0_0 = arith.constant 0 : index
    %0 = vector.load %arg0[%c0, %c0_0] : memref<2x384xf32, #tpu.memory_space<vmem>>, vector<2x384xf32>
    %c0_1 = arith.constant 0 : index
    %c0_2 = arith.constant 0 : index
    %1 = vector.load %arg1[%c0_1, %c0_2] : memref<16x32xf32, #tpu.memory_space<vmem>>, vector<16x32xf32>
    %c0_3 = arith.constant 0 : index
    %c0_4 = arith.constant 0 : index
    %2 = vector.load %arg2[%c0_3, %c0_4] : memref<16x32xf32, #tpu.memory_space<vmem>>, vector<16x32xf32>
    %c0_5 = arith.constant 0 : index
    %c0_6 = arith.constant 0 : index
    %3 = vector.load %arg3[%c0_5, %c0_6] : memref<16x2xf32, #tpu.memory_space<vmem>>, vector<16x2xf32>
    %c0_7 = arith.constant 0 : index
    %c0_8 = arith.constant 0 : index
    %4 = vector.load %arg4[%c0_7, %c0_8] : memref<32x32xf32, #tpu.memory_space<vmem>>, vector<32x32xf32>
    %c0_9 = arith.constant 0 : index
    %c0_10 = arith.constant 0 : index
    %5 = vector.load %arg5[%c0_9, %c0_10] : memref<1x32xf32, #tpu.memory_space<vmem>>, vector<1x32xf32>
    %c0_11 = arith.constant 0 : index
    %c0_12 = arith.constant 0 : index
    %6 = vector.load %arg6[%c0_11, %c0_12] : memref<32x128xf32, #tpu.memory_space<vmem>>, vector<32x128xf32>
    %c0_13 = arith.constant 0 : index
    %c0_14 = arith.constant 0 : index
    %7 = vector.load %arg7[%c0_13, %c0_14] : memref<1x128xf32, #tpu.memory_space<vmem>>, vector<1x128xf32>
    %c0_15 = arith.constant 0 : index
    %c0_16 = arith.constant 0 : index
    %8 = vector.load %arg8[%c0_15, %c0_16] : memref<128x32xf32, #tpu.memory_space<vmem>>, vector<128x32xf32>
    %c0_17 = arith.constant 0 : index
    %c0_18 = arith.constant 0 : index
    %9 = vector.load %arg9[%c0_17, %c0_18] : memref<1x32xf32, #tpu.memory_space<vmem>>, vector<1x32xf32>
    %10 = vector.extract_strided_slice %0 {offsets = [0, 64], sizes = [2, 128], strides = [1, 1]} : vector<2x384xf32> to vector<2x128xf32>
    %cst = arith.constant dense<0.000000e+00> : vector<16x128xf32>
    %11 = tpu.matmul %3, %10, %cst {dimension_numbers = #tpu.dot_dimension_numbers<[1], [0], [0], [1], [0, 0, 1, 1], [], []>} : vector<16x2xf32>, vector<2x128xf32>, vector<16x128xf32> -> vector<16x128xf32>
    %12 = vector.extract_strided_slice %11 {offsets = [0, 0], sizes = [16, 32], strides = [1, 1]} : vector<16x128xf32> to vector<16x32xf32>
    %13 = vector.extract_strided_slice %11 {offsets = [0, 32], sizes = [16, 32], strides = [1, 1]} : vector<16x128xf32> to vector<16x32xf32>
    %14 = vector.extract_strided_slice %11 {offsets = [0, 64], sizes = [16, 32], strides = [1, 1]} : vector<16x128xf32> to vector<16x32xf32>
    %15 = vector.extract_strided_slice %11 {offsets = [0, 96], sizes = [16, 32], strides = [1, 1]} : vector<16x128xf32> to vector<16x32xf32>
    %cst_19 = arith.constant dense<0.000000e+00> : vector<16x32xf32>
    %16 = tpu.matmul %2, %4, %cst_19 {dimension_numbers = #tpu.dot_dimension_numbers<[1], [0], [0], [1], [0, 0, 1, 1], [], []>} : vector<16x32xf32>, vector<32x32xf32>, vector<16x32xf32> -> vector<16x32xf32>
    %17 = vector.broadcast %5 : vector<1x32xf32> to vector<16x32xf32>
    %18 = arith.addf %16, %17 : vector<16x32xf32>
    %19 = arith.mulf %12, %18 : vector<16x32xf32>
    %20 = arith.addf %1, %19 : vector<16x32xf32>
    %cst_20 = arith.constant 1.000000e+00 : f32
    %21 = vector.broadcast %cst_20 : f32 to vector<16x32xf32>
    %22 = arith.addf %21, %14 : vector<16x32xf32>
    %cst_21 = arith.constant dense<0.000000e+00> : vector<16xf32>
    %23 = vector.multi_reduction <add>, %20, %cst_21 [1] : vector<16x32xf32> to vector<16xf32>
    %24 = vector.shape_cast %23 : vector<16xf32> to vector<16x1xf32>
    %cst_22 = arith.constant 3.200000e+01 : f32
    %25 = vector.broadcast %cst_22 : f32 to vector<16x1xf32>
    %26 = arith.divf %24, %25 : vector<16x1xf32>
    %27 = vector.broadcast %26 : vector<16x1xf32> to vector<16x32xf32>
    %28 = arith.subf %20, %27 : vector<16x32xf32>
    %29 = arith.mulf %28, %28 : vector<16x32xf32>
    %cst_23 = arith.constant dense<0.000000e+00> : vector<16xf32>
    %30 = vector.multi_reduction <add>, %29, %cst_23 [1] : vector<16x32xf32> to vector<16xf32>
    %31 = vector.shape_cast %30 : vector<16xf32> to vector<16x1xf32>
    %cst_24 = arith.constant 3.200000e+01 : f32
    %32 = vector.broadcast %cst_24 : f32 to vector<16x1xf32>
    %33 = arith.divf %31, %32 : vector<16x1xf32>
    %cst_25 = arith.constant 9.99999997E-7 : f32
    %34 = vector.broadcast %cst_25 : f32 to vector<16x1xf32>
    %35 = arith.addf %33, %34 : vector<16x1xf32>
    %36 = math.rsqrt %35 : vector<16x1xf32>
    %37 = vector.broadcast %36 : vector<16x1xf32> to vector<16x32xf32>
    %38 = arith.mulf %28, %37 : vector<16x32xf32>
    %39 = arith.mulf %22, %38 : vector<16x32xf32>
    %40 = arith.addf %39, %13 : vector<16x32xf32>
    %cst_26 = arith.constant dense<0.000000e+00> : vector<16x128xf32>
    %41 = tpu.matmul %40, %6, %cst_26 {dimension_numbers = #tpu.dot_dimension_numbers<[1], [0], [0], [1], [0, 0, 1, 1], [], []>} : vector<16x32xf32>, vector<32x128xf32>, vector<16x128xf32> -> vector<16x128xf32>
    %42 = vector.broadcast %7 : vector<1x128xf32> to vector<16x128xf32>
    %43 = arith.addf %41, %42 : vector<16x128xf32>
    %cst_27 = arith.constant 5.000000e-01 : f32
    %44 = vector.broadcast %cst_27 : f32 to vector<16x128xf32>
    %45 = arith.mulf %44, %43 : vector<16x128xf32>
    %cst_28 = arith.constant 4.471500e-02 : f32
    %46 = vector.broadcast %cst_28 : f32 to vector<16x128xf32>
    %47 = arith.mulf %46, %43 : vector<16x128xf32>
    %48 = arith.mulf %47, %43 : vector<16x128xf32>
    %49 = arith.mulf %48, %43 : vector<16x128xf32>
    %50 = arith.addf %43, %49 : vector<16x128xf32>
    %cst_29 = arith.constant 0.797884583 : f32
    %51 = vector.broadcast %cst_29 : f32 to vector<16x128xf32>
    %52 = arith.mulf %51, %50 : vector<16x128xf32>
    %53 = math.tanh %52 : vector<16x128xf32>
    %cst_30 = arith.constant 1.000000e+00 : f32
    %54 = vector.broadcast %cst_30 : f32 to vector<16x128xf32>
    %55 = arith.addf %54, %53 : vector<16x128xf32>
    %56 = arith.mulf %45, %55 : vector<16x128xf32>
    %cst_31 = arith.constant dense<0.000000e+00> : vector<16x32xf32>
    %57 = tpu.matmul %56, %8, %cst_31 {dimension_numbers = #tpu.dot_dimension_numbers<[1], [0], [0], [1], [0, 0, 1, 1], [], []>} : vector<16x128xf32>, vector<128x32xf32>, vector<16x32xf32> -> vector<16x32xf32>
    %58 = vector.broadcast %9 : vector<1x32xf32> to vector<16x32xf32>
    %59 = arith.addf %57, %58 : vector<16x32xf32>
    %60 = arith.mulf %15, %59 : vector<16x32xf32>
    %61 = arith.addf %20, %60 : vector<16x32xf32>
    %c0_32 = arith.constant 0 : index
    %c0_33 = arith.constant 0 : index
    %62 = vector.load %arg19[%c0_32, %c0_33] : memref<16x32xf32, #tpu.memory_space<vmem>>, vector<16x32xf32>
    tpu.vector_store %arg19[%c0_32, %c0_33], %61 {strides = array<i32>} : memref<16x32xf32, #tpu.memory_space<vmem>>, vector<16x32xf32>,
    %c0_34 = arith.constant 0 : index
    %c0_35 = arith.constant 0 : index
    %63 = vector.load %arg10[%c0_34, %c0_35] : memref<8x32xf32, #tpu.memory_space<vmem>>, vector<8x32xf32>
    %c0_36 = arith.constant 0 : index
    %c0_37 = arith.constant 0 : index
    %64 = vector.load %arg11[%c0_36, %c0_37] : memref<8x32xf32, #tpu.memory_space<vmem>>, vector<8x32xf32>
    %c0_38 = arith.constant 0 : index
    %c0_39 = arith.constant 0 : index
    %65 = vector.load %arg12[%c0_38, %c0_39] : memref<8x2xf32, #tpu.memory_space<vmem>>, vector<8x2xf32>
    %c0_40 = arith.constant 0 : index
    %c0_41 = arith.constant 0 : index
    %66 = vector.load %arg13[%c0_40, %c0_41] : memref<32x32xf32, #tpu.memory_space<vmem>>, vector<32x32xf32>
    %c0_42 = arith.constant 0 : index
    %c0_43 = arith.constant 0 : index
    %67 = vector.load %arg14[%c0_42, %c0_43] : memref<1x32xf32, #tpu.memory_space<vmem>>, vector<1x32xf32>
    %c0_44 = arith.constant 0 : index
    %c0_45 = arith.constant 0 : index
    %68 = vector.load %arg15[%c0_44, %c0_45] : memref<32x128xf32, #tpu.memory_space<vmem>>, vector<32x128xf32>
    %c0_46 = arith.constant 0 : index
    %c0_47 = arith.constant 0 : index
    %69 = vector.load %arg16[%c0_46, %c0_47] : memref<1x128xf32, #tpu.memory_space<vmem>>, vector<1x128xf32>
    %c0_48 = arith.constant 0 : index
    %c0_49 = arith.constant 0 : index
    %70 = vector.load %arg17[%c0_48, %c0_49] : memref<128x32xf32, #tpu.memory_space<vmem>>, vector<128x32xf32>
    %c0_50 = arith.constant 0 : index
    %c0_51 = arith.constant 0 : index
    %71 = vector.load %arg18[%c0_50, %c0_51] : memref<1x32xf32, #tpu.memory_space<vmem>>, vector<1x32xf32>
    %72 = vector.extract_strided_slice %0 {offsets = [0, 256], sizes = [2, 128], strides = [1, 1]} : vector<2x384xf32> to vector<2x128xf32>
    %cst_52 = arith.constant dense<0.000000e+00> : vector<8x128xf32>
    %73 = tpu.matmul %65, %72, %cst_52 {dimension_numbers = #tpu.dot_dimension_numbers<[1], [0], [0], [1], [0, 0, 1, 1], [], []>} : vector<8x2xf32>, vector<2x128xf32>, vector<8x128xf32> -> vector<8x128xf32>
    %74 = vector.extract_strided_slice %73 {offsets = [0, 0], sizes = [8, 32], strides = [1, 1]} : vector<8x128xf32> to vector<8x32xf32>
    %75 = vector.extract_strided_slice %73 {offsets = [0, 32], sizes = [8, 32], strides = [1, 1]} : vector<8x128xf32> to vector<8x32xf32>
    %76 = vector.extract_strided_slice %73 {offsets = [0, 64], sizes = [8, 32], strides = [1, 1]} : vector<8x128xf32> to vector<8x32xf32>
    %77 = vector.extract_strided_slice %73 {offsets = [0, 96], sizes = [8, 32], strides = [1, 1]} : vector<8x128xf32> to vector<8x32xf32>
    %cst_53 = arith.constant dense<0.000000e+00> : vector<8x32xf32>
    %78 = tpu.matmul %64, %66, %cst_53 {dimension_numbers = #tpu.dot_dimension_numbers<[1], [0], [0], [1], [0, 0, 1, 1], [], []>} : vector<8x32xf32>, vector<32x32xf32>, vector<8x32xf32> -> vector<8x32xf32>
    %79 = vector.broadcast %67 : vector<1x32xf32> to vector<8x32xf32>
    %80 = arith.addf %78, %79 : vector<8x32xf32>
    %81 = arith.mulf %74, %80 : vector<8x32xf32>
    %82 = arith.addf %63, %81 : vector<8x32xf32>
    %cst_54 = arith.constant 1.000000e+00 : f32
    %83 = vector.broadcast %cst_54 : f32 to vector<8x32xf32>
    %84 = arith.addf %83, %76 : vector<8x32xf32>
    %cst_55 = arith.constant dense<0.000000e+00> : vector<8xf32>
    %85 = vector.multi_reduction <add>, %82, %cst_55 [1] : vector<8x32xf32> to vector<8xf32>
    %86 = vector.shape_cast %85 : vector<8xf32> to vector<8x1xf32>
    %cst_56 = arith.constant 3.200000e+01 : f32
    %87 = vector.broadcast %cst_56 : f32 to vector<8x1xf32>
    %88 = arith.divf %86, %87 : vector<8x1xf32>
    %89 = vector.broadcast %88 : vector<8x1xf32> to vector<8x32xf32>
    %90 = arith.subf %82, %89 : vector<8x32xf32>
    %91 = arith.mulf %90, %90 : vector<8x32xf32>
    %cst_57 = arith.constant dense<0.000000e+00> : vector<8xf32>
    %92 = vector.multi_reduction <add>, %91, %cst_57 [1] : vector<8x32xf32> to vector<8xf32>
    %93 = vector.shape_cast %92 : vector<8xf32> to vector<8x1xf32>
    %cst_58 = arith.constant 3.200000e+01 : f32
    %94 = vector.broadcast %cst_58 : f32 to vector<8x1xf32>
    %95 = arith.divf %93, %94 : vector<8x1xf32>
    %cst_59 = arith.constant 9.99999997E-7 : f32
    %96 = vector.broadcast %cst_59 : f32 to vector<8x1xf32>
    %97 = arith.addf %95, %96 : vector<8x1xf32>
    %98 = math.rsqrt %97 : vector<8x1xf32>
    %99 = vector.broadcast %98 : vector<8x1xf32> to vector<8x32xf32>
    %100 = arith.mulf %90, %99 : vector<8x32xf32>
    %101 = arith.mulf %84, %100 : vector<8x32xf32>
    %102 = arith.addf %101, %75 : vector<8x32xf32>
    %cst_60 = arith.constant dense<0.000000e+00> : vector<8x128xf32>
    %103 = tpu.matmul %102, %68, %cst_60 {dimension_numbers = #tpu.dot_dimension_numbers<[1], [0], [0], [1], [0, 0, 1, 1], [], []>} : vector<8x32xf32>, vector<32x128xf32>, vector<8x128xf32> -> vector<8x128xf32>
    %104 = vector.broadcast %69 : vector<1x128xf32> to vector<8x128xf32>
    %105 = arith.addf %103, %104 : vector<8x128xf32>
    %cst_61 = arith.constant 5.000000e-01 : f32
    %106 = vector.broadcast %cst_61 : f32 to vector<8x128xf32>
    %107 = arith.mulf %106, %105 : vector<8x128xf32>
    %cst_62 = arith.constant 4.471500e-02 : f32
    %108 = vector.broadcast %cst_62 : f32 to vector<8x128xf32>
    %109 = arith.mulf %108, %105 : vector<8x128xf32>
    %110 = arith.mulf %109, %105 : vector<8x128xf32>
    %111 = arith.mulf %110, %105 : vector<8x128xf32>
    %112 = arith.addf %105, %111 : vector<8x128xf32>
    %cst_63 = arith.constant 0.797884583 : f32
    %113 = vector.broadcast %cst_63 : f32 to vector<8x128xf32>
    %114 = arith.mulf %113, %112 : vector<8x128xf32>
    %115 = math.tanh %114 : vector<8x128xf32>
    %cst_64 = arith.constant 1.000000e+00 : f32
    %116 = vector.broadcast %cst_64 : f32 to vector<8x128xf32>
    %117 = arith.addf %116, %115 : vector<8x128xf32>
    %118 = arith.mulf %107, %117 : vector<8x128xf32>
    %cst_65 = arith.constant dense<0.000000e+00> : vector<8x32xf32>
    %119 = tpu.matmul %118, %70, %cst_65 {dimension_numbers = #tpu.dot_dimension_numbers<[1], [0], [0], [1], [0, 0, 1, 1], [], []>} : vector<8x128xf32>, vector<128x32xf32>, vector<8x32xf32> -> vector<8x32xf32>
    %120 = vector.broadcast %71 : vector<1x32xf32> to vector<8x32xf32>
    %121 = arith.addf %119, %120 : vector<8x32xf32>
    %122 = arith.mulf %77, %121 : vector<8x32xf32>
    %123 = arith.addf %82, %122 : vector<8x32xf32>
    %c0_66 = arith.constant 0 : index
    %c0_67 = arith.constant 0 : index
    %124 = vector.load %arg20[%c0_66, %c0_67] : memref<8x32xf32, #tpu.memory_space<vmem>>, vector<8x32xf32>
    tpu.vector_store %arg20[%c0_66, %c0_67], %123 {strides = array<i32>} : memref<8x32xf32, #tpu.memory_space<vmem>>, vector<8x32xf32>,
    return
  }
}

module attributes {stable_mosaic.version = 11 : i64} {
  func.func @_single_pre_kernel(%arg0: memref<2x32xf32, #tpu.memory_space<vmem>>, %arg1: memref<32x96xf32, #tpu.memory_space<vmem>>, %arg2: memref<1x96xf32, #tpu.memory_space<vmem>>, %arg3: memref<24x32xf32, #tpu.memory_space<vmem>>, %arg4: memref<24x2xf32, #tpu.memory_space<vmem>>, %arg5: memref<32x224xf32, #tpu.memory_space<vmem>>, %arg6: memref<1x224xf32, #tpu.memory_space<vmem>>, %arg7: memref<224x224xf32, #tpu.memory_space<vmem>>, %arg8: memref<1x224xf32, #tpu.memory_space<vmem>>, %arg9: memref<1x224xf32, #tpu.memory_space<vmem>>, %arg10: memref<24x224xf32, #tpu.memory_space<vmem>>, %arg11: memref<2x96xf32, #tpu.memory_space<vmem>>) attributes {dimension_semantics = [], scalar_prefetch = 0 : i64, scratch_operands = 0 : i64, tpu.core_type = #tpu.core_type<tc>} {
    %c0 = arith.constant 0 : index
    %c0_0 = arith.constant 0 : index
    %0 = vector.load %arg0[%c0, %c0_0] : memref<2x32xf32, #tpu.memory_space<vmem>>, vector<2x32xf32>
    %1 = arith.negf %0 : vector<2x32xf32>
    %2 = math.exp %1 : vector<2x32xf32>
    %cst = arith.constant 1.000000e+00 : f32
    %3 = vector.broadcast %cst : f32 to vector<2x32xf32>
    %4 = arith.addf %3, %2 : vector<2x32xf32>
    %5 = arith.divf %3, %4 : vector<2x32xf32>
    %6 = arith.mulf %0, %5 : vector<2x32xf32>
    %c0_1 = arith.constant 0 : index
    %c0_2 = arith.constant 0 : index
    %7 = vector.load %arg1[%c0_1, %c0_2] : memref<32x96xf32, #tpu.memory_space<vmem>>, vector<32x96xf32>
    %cst_3 = arith.constant dense<0.000000e+00> : vector<2x96xf32>
    %8 = tpu.matmul %6, %7, %cst_3 {dimension_numbers = #tpu.dot_dimension_numbers<[1], [0], [0], [1], [0, 0, 1, 1], [], []>} : vector<2x32xf32>, vector<32x96xf32>, vector<2x96xf32> -> vector<2x96xf32>
    %c0_4 = arith.constant 0 : index
    %c0_5 = arith.constant 0 : index
    %9 = vector.load %arg2[%c0_4, %c0_5] : memref<1x96xf32, #tpu.memory_space<vmem>>, vector<1x96xf32>
    %10 = vector.broadcast %9 : vector<1x96xf32> to vector<2x96xf32>
    %11 = arith.addf %8, %10 : vector<2x96xf32>
    %c0_6 = arith.constant 0 : index
    %c0_7 = arith.constant 0 : index
    %12 = vector.load %arg11[%c0_6, %c0_7] : memref<2x96xf32, #tpu.memory_space<vmem>>, vector<2x96xf32>
    tpu.vector_store %arg11[%c0_6, %c0_7], %11 {strides = array<i32>} : memref<2x96xf32, #tpu.memory_space<vmem>>, vector<2x96xf32>,
    %c0_8 = arith.constant 0 : index
    %c0_9 = arith.constant 0 : index
    %13 = vector.load %arg4[%c0_8, %c0_9] : memref<24x2xf32, #tpu.memory_space<vmem>>, vector<24x2xf32>
    %14 = vector.extract_strided_slice %11 {offsets = [0, 0], sizes = [2, 64], strides = [1, 1]} : vector<2x96xf32> to vector<2x64xf32>
    %cst_10 = arith.constant dense<0.000000e+00> : vector<24x64xf32>
    %15 = tpu.matmul %13, %14, %cst_10 {dimension_numbers = #tpu.dot_dimension_numbers<[1], [0], [0], [1], [0, 0, 1, 1], [], []>} : vector<24x2xf32>, vector<2x64xf32>, vector<24x64xf32> -> vector<24x64xf32>
    %16 = vector.extract_strided_slice %15 {offsets = [0, 0], sizes = [24, 32], strides = [1, 1]} : vector<24x64xf32> to vector<24x32xf32>
    %17 = vector.extract_strided_slice %15 {offsets = [0, 32], sizes = [24, 32], strides = [1, 1]} : vector<24x64xf32> to vector<24x32xf32>
    %cst_11 = arith.constant 1.000000e+00 : f32
    %18 = vector.broadcast %cst_11 : f32 to vector<24x32xf32>
    %19 = arith.addf %18, %17 : vector<24x32xf32>
    %c0_12 = arith.constant 0 : index
    %c0_13 = arith.constant 0 : index
    %20 = vector.load %arg3[%c0_12, %c0_13] : memref<24x32xf32, #tpu.memory_space<vmem>>, vector<24x32xf32>
    %cst_14 = arith.constant dense<0.000000e+00> : vector<24xf32>
    %21 = vector.multi_reduction <add>, %20, %cst_14 [1] : vector<24x32xf32> to vector<24xf32>
    %22 = vector.shape_cast %21 : vector<24xf32> to vector<24x1xf32>
    %cst_15 = arith.constant 3.200000e+01 : f32
    %23 = vector.broadcast %cst_15 : f32 to vector<24x1xf32>
    %24 = arith.divf %22, %23 : vector<24x1xf32>
    %25 = vector.broadcast %24 : vector<24x1xf32> to vector<24x32xf32>
    %26 = arith.subf %20, %25 : vector<24x32xf32>
    %27 = arith.mulf %26, %26 : vector<24x32xf32>
    %cst_16 = arith.constant dense<0.000000e+00> : vector<24xf32>
    %28 = vector.multi_reduction <add>, %27, %cst_16 [1] : vector<24x32xf32> to vector<24xf32>
    %29 = vector.shape_cast %28 : vector<24xf32> to vector<24x1xf32>
    %cst_17 = arith.constant 3.200000e+01 : f32
    %30 = vector.broadcast %cst_17 : f32 to vector<24x1xf32>
    %31 = arith.divf %29, %30 : vector<24x1xf32>
    %cst_18 = arith.constant 9.99999997E-7 : f32
    %32 = vector.broadcast %cst_18 : f32 to vector<24x1xf32>
    %33 = arith.addf %31, %32 : vector<24x1xf32>
    %34 = math.rsqrt %33 : vector<24x1xf32>
    %35 = vector.broadcast %34 : vector<24x1xf32> to vector<24x32xf32>
    %36 = arith.mulf %26, %35 : vector<24x32xf32>
    %37 = arith.mulf %19, %36 : vector<24x32xf32>
    %38 = arith.addf %37, %16 : vector<24x32xf32>
    %c0_19 = arith.constant 0 : index
    %c0_20 = arith.constant 0 : index
    %39 = vector.load %arg5[%c0_19, %c0_20] : memref<32x224xf32, #tpu.memory_space<vmem>>, vector<32x224xf32>
    %cst_21 = arith.constant dense<0.000000e+00> : vector<24x224xf32>
    %40 = tpu.matmul %38, %39, %cst_21 {dimension_numbers = #tpu.dot_dimension_numbers<[1], [0], [0], [1], [0, 0, 1, 1], [], []>} : vector<24x32xf32>, vector<32x224xf32>, vector<24x224xf32> -> vector<24x224xf32>
    %c0_22 = arith.constant 0 : index
    %c0_23 = arith.constant 0 : index
    %41 = vector.load %arg6[%c0_22, %c0_23] : memref<1x224xf32, #tpu.memory_space<vmem>>, vector<1x224xf32>
    %42 = vector.broadcast %41 : vector<1x224xf32> to vector<24x224xf32>
    %43 = arith.addf %40, %42 : vector<24x224xf32>
    %44 = arith.mulf %43, %43 : vector<24x224xf32>
    %c0_24 = arith.constant 0 : index
    %c0_25 = arith.constant 0 : index
    %45 = vector.load %arg7[%c0_24, %c0_25] : memref<224x224xf32, #tpu.memory_space<vmem>>, vector<224x224xf32>
    %cst_26 = arith.constant dense<0.000000e+00> : vector<24x224xf32>
    %46 = tpu.matmul %44, %45, %cst_26 {dimension_numbers = #tpu.dot_dimension_numbers<[1], [0], [0], [1], [0, 0, 1, 1], [], []>} : vector<24x224xf32>, vector<224x224xf32>, vector<24x224xf32> -> vector<24x224xf32>
    %cst_27 = arith.constant 9.99999997E-7 : f32
    %47 = vector.broadcast %cst_27 : f32 to vector<24x224xf32>
    %48 = arith.addf %46, %47 : vector<24x224xf32>
    %49 = math.rsqrt %48 : vector<24x224xf32>
    %c0_28 = arith.constant 0 : index
    %c0_29 = arith.constant 0 : index
    %50 = vector.load %arg8[%c0_28, %c0_29] : memref<1x224xf32, #tpu.memory_space<vmem>>, vector<1x224xf32>
    %cst_30 = arith.constant 5.000000e-01 : f32
    %51 = vector.broadcast %cst_30 : f32 to vector<1x224xf32>
    %52 = arith.cmpf ogt, %50, %51 : vector<1x224xf32>
    %c0_31 = arith.constant 0 : index
    %c0_32 = arith.constant 0 : index
    %53 = vector.load %arg9[%c0_31, %c0_32] : memref<1x224xf32, #tpu.memory_space<vmem>>, vector<1x224xf32>
    %54 = vector.broadcast %53 : vector<1x224xf32> to vector<24x224xf32>
    %55 = arith.mulf %49, %54 : vector<24x224xf32>
    %cst_33 = arith.constant 1.000000e+00 : f32
    %56 = vector.shape_cast %52 : vector<1x224xi1> to vector<1x224xi1>
    %57 = vector.broadcast %56 : vector<1x224xi1> to vector<24x224xi1>
    %58 = vector.broadcast %cst_33 : f32 to vector<24x224xf32>
    %59 = arith.select %57, %55, %58 : vector<24x224xi1>, vector<24x224xf32>
    %60 = arith.mulf %43, %59 : vector<24x224xf32>
    %c0_34 = arith.constant 0 : index
    %c0_35 = arith.constant 0 : index
    %61 = vector.load %arg10[%c0_34, %c0_35] : memref<24x224xf32, #tpu.memory_space<vmem>>, vector<24x224xf32>
    tpu.vector_store %arg10[%c0_34, %c0_35], %60 {strides = array<i32>} : memref<24x224xf32, #tpu.memory_space<vmem>>, vector<24x224xf32>,
    return
  }
}

module attributes {stable_mosaic.version = 11 : i64} {
  func.func @_final_kernel(%arg0: memref<16x32xf32, #tpu.memory_space<vmem>>, %arg1: memref<2x32xf32, #tpu.memory_space<vmem>>, %arg2: memref<16x2xf32, #tpu.memory_space<vmem>>, %arg3: memref<32x64xf32, #tpu.memory_space<vmem>>, %arg4: memref<1x64xf32, #tpu.memory_space<vmem>>, %arg5: memref<32x16xf32, #tpu.memory_space<vmem>>, %arg6: memref<1x16xf32, #tpu.memory_space<vmem>>, %arg7: memref<16x16xf32, #tpu.memory_space<vmem>>) attributes {dimension_semantics = [], scalar_prefetch = 0 : i64, scratch_operands = 0 : i64, tpu.core_type = #tpu.core_type<tc>} {
    %c0 = arith.constant 0 : index
    %c0_0 = arith.constant 0 : index
    %0 = vector.load %arg1[%c0, %c0_0] : memref<2x32xf32, #tpu.memory_space<vmem>>, vector<2x32xf32>
    %1 = arith.negf %0 : vector<2x32xf32>
    %2 = math.exp %1 : vector<2x32xf32>
    %cst = arith.constant 1.000000e+00 : f32
    %3 = vector.broadcast %cst : f32 to vector<2x32xf32>
    %4 = arith.addf %3, %2 : vector<2x32xf32>
    %5 = arith.divf %3, %4 : vector<2x32xf32>
    %6 = arith.mulf %0, %5 : vector<2x32xf32>
    %c0_1 = arith.constant 0 : index
    %c0_2 = arith.constant 0 : index
    %7 = vector.load %arg3[%c0_1, %c0_2] : memref<32x64xf32, #tpu.memory_space<vmem>>, vector<32x64xf32>
    %cst_3 = arith.constant dense<0.000000e+00> : vector<2x64xf32>
    %8 = tpu.matmul %6, %7, %cst_3 {dimension_numbers = #tpu.dot_dimension_numbers<[1], [0], [0], [1], [0, 0, 1, 1], [], []>} : vector<2x32xf32>, vector<32x64xf32>, vector<2x64xf32> -> vector<2x64xf32>
    %c0_4 = arith.constant 0 : index
    %c0_5 = arith.constant 0 : index
    %9 = vector.load %arg4[%c0_4, %c0_5] : memref<1x64xf32, #tpu.memory_space<vmem>>, vector<1x64xf32>
    %10 = vector.broadcast %9 : vector<1x64xf32> to vector<2x64xf32>
    %11 = arith.addf %8, %10 : vector<2x64xf32>
    %c0_6 = arith.constant 0 : index
    %c0_7 = arith.constant 0 : index
    %12 = vector.load %arg2[%c0_6, %c0_7] : memref<16x2xf32, #tpu.memory_space<vmem>>, vector<16x2xf32>
    %cst_8 = arith.constant dense<0.000000e+00> : vector<16x64xf32>
    %13 = tpu.matmul %12, %11, %cst_8 {dimension_numbers = #tpu.dot_dimension_numbers<[1], [0], [0], [1], [0, 0, 1, 1], [], []>} : vector<16x2xf32>, vector<2x64xf32>, vector<16x64xf32> -> vector<16x64xf32>
    %14 = vector.extract_strided_slice %13 {offsets = [0, 0], sizes = [16, 32], strides = [1, 1]} : vector<16x64xf32> to vector<16x32xf32>
    %15 = vector.extract_strided_slice %13 {offsets = [0, 32], sizes = [16, 32], strides = [1, 1]} : vector<16x64xf32> to vector<16x32xf32>
    %cst_9 = arith.constant 1.000000e+00 : f32
    %16 = vector.broadcast %cst_9 : f32 to vector<16x32xf32>
    %17 = arith.addf %16, %15 : vector<16x32xf32>
    %c0_10 = arith.constant 0 : index
    %c0_11 = arith.constant 0 : index
    %18 = vector.load %arg0[%c0_10, %c0_11] : memref<16x32xf32, #tpu.memory_space<vmem>>, vector<16x32xf32>
    %cst_12 = arith.constant dense<0.000000e+00> : vector<16xf32>
    %19 = vector.multi_reduction <add>, %18, %cst_12 [1] : vector<16x32xf32> to vector<16xf32>
    %20 = vector.shape_cast %19 : vector<16xf32> to vector<16x1xf32>
    %cst_13 = arith.constant 3.200000e+01 : f32
    %21 = vector.broadcast %cst_13 : f32 to vector<16x1xf32>
    %22 = arith.divf %20, %21 : vector<16x1xf32>
    %23 = vector.broadcast %22 : vector<16x1xf32> to vector<16x32xf32>
    %24 = arith.subf %18, %23 : vector<16x32xf32>
    %25 = arith.mulf %24, %24 : vector<16x32xf32>
    %cst_14 = arith.constant dense<0.000000e+00> : vector<16xf32>
    %26 = vector.multi_reduction <add>, %25, %cst_14 [1] : vector<16x32xf32> to vector<16xf32>
    %27 = vector.shape_cast %26 : vector<16xf32> to vector<16x1xf32>
    %cst_15 = arith.constant 3.200000e+01 : f32
    %28 = vector.broadcast %cst_15 : f32 to vector<16x1xf32>
    %29 = arith.divf %27, %28 : vector<16x1xf32>
    %cst_16 = arith.constant 9.99999997E-7 : f32
    %30 = vector.broadcast %cst_16 : f32 to vector<16x1xf32>
    %31 = arith.addf %29, %30 : vector<16x1xf32>
    %32 = math.rsqrt %31 : vector<16x1xf32>
    %33 = vector.broadcast %32 : vector<16x1xf32> to vector<16x32xf32>
    %34 = arith.mulf %24, %33 : vector<16x32xf32>
    %35 = arith.mulf %17, %34 : vector<16x32xf32>
    %36 = arith.addf %35, %14 : vector<16x32xf32>
    %c0_17 = arith.constant 0 : index
    %c0_18 = arith.constant 0 : index
    %37 = vector.load %arg5[%c0_17, %c0_18] : memref<32x16xf32, #tpu.memory_space<vmem>>, vector<32x16xf32>
    %cst_19 = arith.constant dense<0.000000e+00> : vector<16x16xf32>
    %38 = tpu.matmul %36, %37, %cst_19 {dimension_numbers = #tpu.dot_dimension_numbers<[1], [0], [0], [1], [0, 0, 1, 1], [], []>} : vector<16x32xf32>, vector<32x16xf32>, vector<16x16xf32> -> vector<16x16xf32>
    %c0_20 = arith.constant 0 : index
    %c0_21 = arith.constant 0 : index
    %39 = vector.load %arg6[%c0_20, %c0_21] : memref<1x16xf32, #tpu.memory_space<vmem>>, vector<1x16xf32>
    %40 = vector.broadcast %39 : vector<1x16xf32> to vector<16x16xf32>
    %41 = arith.addf %38, %40 : vector<16x16xf32>
    %c0_22 = arith.constant 0 : index
    %c0_23 = arith.constant 0 : index
    %42 = vector.load %arg7[%c0_22, %c0_23] : memref<16x16xf32, #tpu.memory_space<vmem>>, vector<16x16xf32>
    tpu.vector_store %arg7[%c0_22, %c0_23], %41 {strides = array<i32>} : memref<16x16xf32, #tpu.memory_space<vmem>>, vector<16x16xf32>,
    return
  }
}

module attributes {stable_mosaic.version = 11 : i64} {
  func.func @_single_post_kernel(%arg0: memref<24x32xf32, #tpu.memory_space<vmem>>, %arg1: memref<24x32xf32, #tpu.memory_space<vmem>>, %arg2: memref<24x128xf32, #tpu.memory_space<vmem>>, %arg3: memref<2x96xf32, #tpu.memory_space<vmem>>, %arg4: memref<24x2xf32, #tpu.memory_space<vmem>>, %arg5: memref<32x32xf32, #tpu.memory_space<vmem>>, %arg6: memref<128x32xf32, #tpu.memory_space<vmem>>, %arg7: memref<1x32xf32, #tpu.memory_space<vmem>>, %arg8: memref<24x32xf32, #tpu.memory_space<vmem>>) attributes {dimension_semantics = [], scalar_prefetch = 0 : i64, scratch_operands = 0 : i64, tpu.core_type = #tpu.core_type<tc>} {
    %c0 = arith.constant 0 : index
    %c0_0 = arith.constant 0 : index
    %0 = vector.load %arg4[%c0, %c0_0] : memref<24x2xf32, #tpu.memory_space<vmem>>, vector<24x2xf32>
    %c0_1 = arith.constant 0 : index
    %c64 = arith.constant 64 : index
    %1 = vector.load %arg3[%c0_1, %c64] : memref<2x96xf32, #tpu.memory_space<vmem>>, vector<2x32xf32>
    %cst = arith.constant dense<0.000000e+00> : vector<24x32xf32>
    %2 = tpu.matmul %0, %1, %cst {dimension_numbers = #tpu.dot_dimension_numbers<[1], [0], [0], [1], [0, 0, 1, 1], [], []>} : vector<24x2xf32>, vector<2x32xf32>, vector<24x32xf32> -> vector<24x32xf32>
    %c0_2 = arith.constant 0 : index
    %c0_3 = arith.constant 0 : index
    %3 = vector.load %arg2[%c0_2, %c0_3] : memref<24x128xf32, #tpu.memory_space<vmem>>, vector<24x128xf32>
    %cst_4 = arith.constant 5.000000e-01 : f32
    %4 = vector.broadcast %cst_4 : f32 to vector<24x128xf32>
    %5 = arith.mulf %4, %3 : vector<24x128xf32>
    %cst_5 = arith.constant 4.471500e-02 : f32
    %6 = vector.broadcast %cst_5 : f32 to vector<24x128xf32>
    %7 = arith.mulf %6, %3 : vector<24x128xf32>
    %8 = arith.mulf %7, %3 : vector<24x128xf32>
    %9 = arith.mulf %8, %3 : vector<24x128xf32>
    %10 = arith.addf %3, %9 : vector<24x128xf32>
    %cst_6 = arith.constant 0.797884583 : f32
    %11 = vector.broadcast %cst_6 : f32 to vector<24x128xf32>
    %12 = arith.mulf %11, %10 : vector<24x128xf32>
    %13 = math.tanh %12 : vector<24x128xf32>
    %cst_7 = arith.constant 1.000000e+00 : f32
    %14 = vector.broadcast %cst_7 : f32 to vector<24x128xf32>
    %15 = arith.addf %14, %13 : vector<24x128xf32>
    %16 = arith.mulf %5, %15 : vector<24x128xf32>
    %c0_8 = arith.constant 0 : index
    %c0_9 = arith.constant 0 : index
    %17 = vector.load %arg1[%c0_8, %c0_9] : memref<24x32xf32, #tpu.memory_space<vmem>>, vector<24x32xf32>
    %c0_10 = arith.constant 0 : index
    %c0_11 = arith.constant 0 : index
    %18 = vector.load %arg5[%c0_10, %c0_11] : memref<32x32xf32, #tpu.memory_space<vmem>>, vector<32x32xf32>
    %cst_12 = arith.constant dense<0.000000e+00> : vector<24x32xf32>
    %19 = tpu.matmul %17, %18, %cst_12 {dimension_numbers = #tpu.dot_dimension_numbers<[1], [0], [0], [1], [0, 0, 1, 1], [], []>} : vector<24x32xf32>, vector<32x32xf32>, vector<24x32xf32> -> vector<24x32xf32>
    %c0_13 = arith.constant 0 : index
    %c0_14 = arith.constant 0 : index
    %20 = vector.load %arg6[%c0_13, %c0_14] : memref<128x32xf32, #tpu.memory_space<vmem>>, vector<128x32xf32>
    %cst_15 = arith.constant dense<0.000000e+00> : vector<24x32xf32>
    %21 = tpu.matmul %16, %20, %cst_15 {dimension_numbers = #tpu.dot_dimension_numbers<[1], [0], [0], [1], [0, 0, 1, 1], [], []>} : vector<24x128xf32>, vector<128x32xf32>, vector<24x32xf32> -> vector<24x32xf32>
    %22 = arith.addf %19, %21 : vector<24x32xf32>
    %c0_16 = arith.constant 0 : index
    %c0_17 = arith.constant 0 : index
    %23 = vector.load %arg7[%c0_16, %c0_17] : memref<1x32xf32, #tpu.memory_space<vmem>>, vector<1x32xf32>
    %24 = vector.broadcast %23 : vector<1x32xf32> to vector<24x32xf32>
    %25 = arith.addf %22, %24 : vector<24x32xf32>
    %c0_18 = arith.constant 0 : index
    %c0_19 = arith.constant 0 : index
    %26 = vector.load %arg0[%c0_18, %c0_19] : memref<24x32xf32, #tpu.memory_space<vmem>>, vector<24x32xf32>
    %27 = arith.mulf %2, %25 : vector<24x32xf32>
    %28 = arith.addf %26, %27 : vector<24x32xf32>
    %c0_20 = arith.constant 0 : index
    %c0_21 = arith.constant 0 : index
    %29 = vector.load %arg8[%c0_20, %c0_21] : memref<24x32xf32, #tpu.memory_space<vmem>>, vector<24x32xf32>
    tpu.vector_store %arg8[%c0_20, %c0_21], %28 {strides = array<i32>} : memref<24x32xf32, #tpu.memory_space<vmem>>, vector<24x32xf32>,
    return
  }
}

</mosaic_0001>

<llo_original>
// kernel: tile.48
$region0: #{tile.48}
  #allocation0 [shape = 's32[1]{0}', space=sflag, size = 0x4, scoped, tag = 'scoped memory for tile.48']
  %s0 = inlined_call_operand.vmem [shape: f32[16], index: 0, kind: input, shape index: {}]
  %s1 = inlined_call_operand.vmem [shape: f32[2,16], index: 1, kind: output, shape index: {}]
  // Predicated region
  $region2: #{tile.48} parent=0 // pred_check
    _
  $region3: #{tile.48} parent=0 // pred_check_branch
    %3 = sbr.rel (0) target = $region5
  $region4: #{tile.48} parent=0 // pred_region
    _
  $region5: #{tile.48} parent=0 // pred_fallthru
    _
  %v4 = vld [vmem:[%s0] ss:$0 sm:$0xff]
  %5 = vst [vmem:[%s1] sm:$0x3] %v4

// kernel: tile.49
$region0: #{tile.49}
  %s0 = inlined_call_operand.vmem [shape: f32[2,16], index: 0, kind: input, shape index: {}]
  %s1 = inlined_call_operand.vmem [shape: f32[32], index: 1, kind: output, shape index: {}]
  $region1: #{tile.49} parent=0
    #allocation0 [shape = 'u8[4096]{0}', space=vmem, size = 0x1000, scoped, tag = 'scoped mem for output reshape']
    #allocation1 [shape = 'u8[4096]{0}', space=vmem, size = 0x1000, scoped, tag = 'scoped mem for input reshape']
    %s3 = sshll.u32 1, 2
    %s4 = ssub.s32 %s3, 1
    %v5 = vld [vmem:[%s0] sm:%s4]
    %6 = vst [vmem:[#allocation1] sm:%s4] %v5
    %v7 = vld [vmem:[#allocation1] sm:$0x1]
    %vm8 = vcmask 130048
    %9 = vst.msk [vmem:[#allocation0] sm:$0x1] %vm8, %v7
    %s10 = scalar_lea.vmem [#allocation1], 1
    %v11 = vld [vmem:[%s10] sm:$0x1]
    %12 = vrot.lane.b32.xlu0 %v11, 16
    %v13 = vpop.permute.xlu0 %12
    %vm14 = vcmask 261248
    %15 = vst.msk [vmem:[#allocation0] sm:$0x1] %vm14, %v13
    %s17 = sshll.u32 1, 1
    %s18 = ssub.s32 %s17, 1
    %v20 = vld [vmem:[#allocation0] sm:%s18]
    %s21 = sshll.u32 1, 1
    %s22 = ssub.s32 %s21, 1
    %23 = vst [vmem:[%s1] sm:%s22] %v20

// kernel: flux_forward.8
$region0: #{flux_forward.8}
  #allocation0 [shape = 'u32[]', space=smem, size = 0x4, offset = 0x4, fixed_abs, tag = 'smem constant byte address 0x4 - core index']
  #allocation1 [shape = 'u32[144,128]{1,0:T(1,128)}', space=vmem, size = 0x12000, scoped, tag = 'internal scratch']
  %s0 = inlined_call_operand.vmem [shape: f32[16,16], index: 0, kind: input, shape index: {}]
  %s1 = inlined_call_operand.vmem [shape: f32[16,32], index: 1, kind: input, shape index: {}]
  %s2 = inlined_call_operand.vmem [shape: f32[1,32], index: 2, kind: input, shape index: {}]
  %s3 = inlined_call_operand.vmem [shape: f32[8,12], index: 3, kind: input, shape index: {}]
  %s4 = inlined_call_operand.vmem [shape: f32[12,32], index: 4, kind: input, shape index: {}]
  %s5 = inlined_call_operand.vmem [shape: f32[1,32], index: 5, kind: input, shape index: {}]
  %s6 = inlined_call_operand.vmem [shape: f32[2,256], index: 6, kind: input, shape index: {}]
  %s7 = inlined_call_operand.vmem [shape: f32[256,32], index: 7, kind: input, shape index: {}]
  %s8 = inlined_call_operand.vmem [shape: f32[1,32], index: 8, kind: input, shape index: {}]
  %s9 = inlined_call_operand.vmem [shape: f32[32,32], index: 9, kind: input, shape index: {}]
  %s10 = inlined_call_operand.vmem [shape: f32[1,32], index: 10, kind: input, shape index: {}]
  %s11 = inlined_call_operand.vmem [shape: f32[2,8], index: 11, kind: input, shape index: {}]
  %s12 = inlined_call_operand.vmem [shape: f32[8,32], index: 12, kind: input, shape index: {}]
  %s13 = inlined_call_operand.vmem [shape: f32[1,32], index: 13, kind: input, shape index: {}]
  %s14 = inlined_call_operand.vmem [shape: f32[32,32], index: 14, kind: input, shape index: {}]
  %s15 = inlined_call_operand.vmem [shape: f32[1,32], index: 15, kind: input, shape index: {}]
  %s16 = inlined_call_operand.vmem [shape: f32[16,32], index: 16, kind: output, shape index: {0}]
  %s17 = inlined_call_operand.vmem [shape: f32[8,32], index: 17, kind: output, shape index: {1}]
  %s18 = inlined_call_operand.vmem [shape: f32[2,32], index: 18, kind: output, shape index: {2}]
  %19 = xla_tuple %s16, %s17, %s18
  %s20 = sld [smem:[#allocation0]]
  $region90: #{flux_forward.8} parent=0
    _
  %s22 = ssub.s32 1, %s20
  %s23 = scalar_select 0, %s22, %s20
  // Predicated region
  $region2: #{flux_forward.8} parent=0 // pred_check
    _
  $region3: #{flux_forward.8} parent=0 // pred_check_branch
    %25 = sbr.rel (0) target = $region5
  $region4: #{flux_forward.8} parent=0 // pred_region
    _
  $region5: #{flux_forward.8} parent=0 // pred_fallthru
    _
  // Predicated region
  $region6: #{flux_forward.8} parent=0 // pred_check
    _
  $region7: #{flux_forward.8} parent=0 // pred_check_branch
    %27 = sbr.rel (0) target = $region9
  $region8: #{flux_forward.8} parent=0 // pred_region
    _
  $region9: #{flux_forward.8} parent=0 // pred_fallthru
    _
  // Predicated region
  $region10: #{flux_forward.8} parent=0 // pred_check
    _
  $region11: #{flux_forward.8} parent=0 // pred_check_branch
    %29 = sbr.rel (0) target = $region13
  $region12: #{flux_forward.8} parent=0 // pred_region
    _
  $region13: #{flux_forward.8} parent=0 // pred_fallthru
    _
  // Predicated region
  $region14: #{flux_forward.8} parent=0 // pred_check
    _
  $region15: #{flux_forward.8} parent=0 // pred_check_branch
    %31 = sbr.rel (0) target = $region17
  $region16: #{flux_forward.8} parent=0 // pred_region
    _
  $region17: #{flux_forward.8} parent=0 // pred_fallthru
    _
  // Predicated region
  $region18: #{flux_forward.8} parent=0 // pred_check
    _
  $region19: #{flux_forward.8} parent=0 // pred_check_branch
    %33 = sbr.rel (0) target = $region21
  $region20: #{flux_forward.8} parent=0 // pred_region
    _
  $region21: #{flux_forward.8} parent=0 // pred_fallthru
    _
  // Predicated region
  $region22: #{flux_forward.8} parent=0 // pred_check
    _
  $region23: #{flux_forward.8} parent=0 // pred_check_branch
    %35 = sbr.rel (0) target = $region25
  $region24: #{flux_forward.8} parent=0 // pred_region
    _
  $region25: #{flux_forward.8} parent=0 // pred_fallthru
    _
  // Predicated region
  $region26: #{flux_forward.8} parent=0 // pred_check
    _
  $region27: #{flux_forward.8} parent=0 // pred_check_branch
    %37 = sbr.rel (0) target = $region29
  $region28: #{flux_forward.8} parent=0 // pred_region
    _
  $region29: #{flux_forward.8} parent=0 // pred_fallthru
    _
  // Predicated region
  $region30: #{flux_forward.8} parent=0 // pred_check
    _
  $region31: #{flux_forward.8} parent=0 // pred_check_branch
    %39 = sbr.rel (0) target = $region33
  $region32: #{flux_forward.8} parent=0 // pred_region
    _
  $region33: #{flux_forward.8} parent=0 // pred_fallthru
    _
  // Predicated region
  $region34: #{flux_forward.8} parent=0 // pred_check
    _
  $region35: #{flux_forward.8} parent=0 // pred_check_branch
    %41 = sbr.rel (0) target = $region37
  $region36: #{flux_forward.8} parent=0 // pred_region
    _
  $region37: #{flux_forward.8} parent=0 // pred_fallthru
    _
  // Predicated region
  $region38: #{flux_forward.8} parent=0 // pred_check
    _
  $region39: #{flux_forward.8} parent=0 // pred_check_branch
    %43 = sbr.rel (0) target = $region41
  $region40: #{flux_forward.8} parent=0 // pred_region
    _
  $region41: #{flux_forward.8} parent=0 // pred_fallthru
    _
  // Predicated region
  $region42: #{flux_forward.8} parent=0 // pred_check
    _
  $region43: #{flux_forward.8} parent=0 // pred_check_branch
    %45 = sbr.rel (0) target = $region45
  $region44: #{flux_forward.8} parent=0 // pred_region
    _
  $region45: #{flux_forward.8} parent=0 // pred_fallthru
    _
  // Predicated region
  $region46: #{flux_forward.8} parent=0 // pred_check
    _
  $region47: #{flux_forward.8} parent=0 // pred_check_branch
    %47 = sbr.rel (0) target = $region49
  $region48: #{flux_forward.8} parent=0 // pred_region
    _
  $region49: #{flux_forward.8} parent=0 // pred_fallthru
    _
  // Predicated region
  $region50: #{flux_forward.8} parent=0 // pred_check
    _
  $region51: #{flux_forward.8} parent=0 // pred_check_branch
    %49 = sbr.rel (0) target = $region53
  $region52: #{flux_forward.8} parent=0 // pred_region
    _
  $region53: #{flux_forward.8} parent=0 // pred_fallthru
    _
  // Predicated region
  $region54: #{flux_forward.8} parent=0 // pred_check
    _
  $region55: #{flux_forward.8} parent=0 // pred_check_branch
    %51 = sbr.rel (0) target = $region57
  $region56: #{flux_forward.8} parent=0 // pred_region
    _
  $region57: #{flux_forward.8} parent=0 // pred_fallthru
    _
  // Predicated region
  $region58: #{flux_forward.8} parent=0 // pred_check
    _
  $region59: #{flux_forward.8} parent=0 // pred_check_branch
    %53 = sbr.rel (0) target = $region61
  $region60: #{flux_forward.8} parent=0 // pred_region
    _
  $region61: #{flux_forward.8} parent=0 // pred_fallthru
    _
  // Predicated region
  $region62: #{flux_forward.8} parent=0 // pred_check
    _
  $region63: #{flux_forward.8} parent=0 // pred_check_branch
    %55 = sbr.rel (0) target = $region65
  $region64: #{flux_forward.8} parent=0 // pred_region
    _
  $region65: #{flux_forward.8} parent=0 // pred_fallthru
    _
  %v56 = vld [vmem:[%s0] sm:$0xff]
  %v57 = vld [vmem:[%s0 + $0x8] sm:$0xff]
  %v58 = vld [vmem:[%s1] sm:$0xff]
  %v59 = vld [vmem:[%s1 + $0x8] sm:$0xff]
  %v60 = vld [vmem:[%s2] sm:$0x1]
  %v62 = vlaneseq
  %v63 = vshrl.u32 %v62, 7
  %v64 = vsub.s32 0, %v63
  %v65 = vrot.slane %v60, %v64
  %vm67 = vcmask 130048
  %v69 = vsel %vm67, %v56, 0
  %v72 = vsel %vm67, %v57, 0
  %74 = vmatprep.subr.mxu0 0.0
  %75 = vmatpush1.msra.mxu0 0.0
  %76 = vmatprep.subr.mxu0 0.0
  %77 = vmatpush1.msra.mxu0 0.0
  %78 = vmatprep.subr.mxu0 0.0
  %79 = vmatpush1.msra.mxu0 0.0
  %80 = vmatprep.subr.mxu0 0.0
  %81 = vmatpush1.msra.mxu0 0.0
  %82 = vmatprep.subr.mxu0 0.0
  %83 = vmatpush1.msra.mxu0 0.0
  %84 = vmatprep.subr.mxu0 0.0
  %85 = vmatpush1.msra.mxu0 0.0
  %86 = vmatprep.subr.mxu0 0.0
  %87 = vmatpush1.msra.mxu0 0.0
  %88 = vmatprep.subr.mxu0 0.0
  %89 = vmatpush1.msra.mxu0 0.0
  %90 = vmatprep.subr.mxu0 0.0
  %91 = vmatpush1.msra.mxu0 0.0
  %92 = vmatprep.subr.mxu0 0.0
  %93 = vmatpush1.msra.mxu0 0.0
  %94 = vmatprep.subr.mxu0 0.0
  %95 = vmatpush1.msra.mxu0 0.0
  %96 = vmatprep.subr.mxu0 0.0
  %97 = vmatpush1.msra.mxu0 0.0
  %98 = vmatprep.subr.mxu0 0.0
  %99 = vmatpush1.msra.mxu0 0.0
  %100 = vmatprep.subr.mxu0 0.0
  %101 = vmatpush1.msra.mxu0 0.0
  %102 = vmatprep.subr.mxu0 0.0
  %103 = vmatpush1.msra.mxu0 %v59
  %104 = vmatprep.subr.mxu0 0.0
  %105 = vmatpush1.msra.mxu0 %v58
  %106 = vmatprep.subr.mxu0 0.0
  %107 = vmatpush2.msra.mxu0 0.0
  %108 = vmatprep.subr.mxu0 0.0
  %109 = vmatpush2.msra.mxu0 0.0
  %110 = vmatprep.subr.mxu0 0.0
  %111 = vmatpush2.msra.mxu0 0.0
  %112 = vmatprep.subr.mxu0 0.0
  %113 = vmatpush2.msra.mxu0 0.0
  %114 = vmatprep.subr.mxu0 0.0
  %115 = vmatpush2.msra.mxu0 0.0
  %116 = vmatprep.subr.mxu0 0.0
  %117 = vmatpush2.msra.mxu0 0.0
  %118 = vmatprep.subr.mxu0 0.0
  %119 = vmatpush2.msra.mxu0 0.0
  %120 = vmatprep.subr.mxu0 0.0
  %121 = vmatpush2.msra.mxu0 0.0
  %122 = vmatprep.subr.mxu0 0.0
  %123 = vmatpush2.msra.mxu0 0.0
  %124 = vmatprep.subr.mxu0 0.0
  %125 = vmatpush2.msra.mxu0 0.0
  %126 = vmatprep.subr.mxu0 0.0
  %127 = vmatpush2.msra.mxu0 0.0
  %128 = vmatprep.subr.mxu0 0.0
  %129 = vmatpush2.msra.mxu0 0.0
  %130 = vmatprep.subr.mxu0 0.0
  %131 = vmatpush2.msra.mxu0 0.0
  %132 = vmatprep.subr.mxu0 0.0
  %133 = vmatpush2.msra.mxu0 0.0
  %134 = vmatprep.subr.mxu0 0.0
  %135 = vmatpush2.msra.mxu0 0.0
  %136 = vmatprep.subr.mxu0 0.0
  %137 = vmatpush2.msra.mxu0 0.0
  %138 = vmatprep.mubr.f32.mxu0 0.0
  %139 = vmatmul.mubr.f32.gmra.mxu0 %v69
  %v140 = vpop.f32.mrf.mxu0
  %v141 = vadd.f32 %v65, %v140
  %v142 = vpop.f32.mrf.mxu0
  %143 = vmatprep.mubr.f32.mxu0 0.0
  %144 = vmatmul.mubr.f32.gmra.mxu0 %v72
  %v145 = vpop.f32.mrf.mxu0
  %v146 = vadd.f32 %v65, %v145
  %v147 = vpop.f32.mrf.mxu0
  %148 = vdwg.mxu0
  %vm149 = vcmask 261120
  %150 = vst.msk [vmem:[%s16] sm:$0xff] %vm149, %v141
  %151 = vst.msk [vmem:[%s16 + $0x8] sm:$0xff] %vm149, %v146
  %v152 = vld [vmem:[%s3] sm:$0xff]
  %v153 = vld [vmem:[%s4] sm:$0xff]
  %v154 = vld [vmem:[%s4 + $0x8] sm:$0xf]
  %v155 = vld [vmem:[%s5] sm:$0x1]
  %v157 = vlaneseq
  %v158 = vshrl.u32 %v157, 7
  %v159 = vsub.s32 0, %v158
  %v160 = vrot.slane %v155, %v159
  %vm162 = vcmask 97280
  %v164 = vsel %vm162, %v152, 0
  %vm166 = vcmask 1043456
  %v168 = vsel %vm166, %v154, 0
  %170 = vmatprep.subr.mxu0 0.0
  %171 = vmatpush1.msra.mxu0 0.0
  %172 = vmatprep.subr.mxu0 0.0
  %173 = vmatpush1.msra.mxu0 0.0
  %174 = vmatprep.subr.mxu0 0.0
  %175 = vmatpush1.msra.mxu0 0.0
  %176 = vmatprep.subr.mxu0 0.0
  %177 = vmatpush1.msra.mxu0 0.0
  %178 = vmatprep.subr.mxu0 0.0
  %179 = vmatpush1.msra.mxu0 0.0
  %180 = vmatprep.subr.mxu0 0.0
  %181 = vmatpush1.msra.mxu0 0.0
  %182 = vmatprep.subr.mxu0 0.0
  %183 = vmatpush1.msra.mxu0 0.0
  %184 = vmatprep.subr.mxu0 0.0
  %185 = vmatpush1.msra.mxu0 0.0
  %186 = vmatprep.subr.mxu0 0.0
  %187 = vmatpush1.msra.mxu0 0.0
  %188 = vmatprep.subr.mxu0 0.0
  %189 = vmatpush1.msra.mxu0 0.0
  %190 = vmatprep.subr.mxu0 0.0
  %191 = vmatpush1.msra.mxu0 0.0
  %192 = vmatprep.subr.mxu0 0.0
  %193 = vmatpush1.msra.mxu0 0.0
  %194 = vmatprep.subr.mxu0 0.0
  %195 = vmatpush1.msra.mxu0 0.0
  %196 = vmatprep.subr.mxu0 0.0
  %197 = vmatpush1.msra.mxu0 0.0
  %198 = vmatprep.subr.mxu0 0.0
  %199 = vmatpush1.msra.mxu0 %v168
  %200 = vmatprep.subr.mxu0 0.0
  %201 = vmatpush1.msra.mxu0 %v153
  %202 = vmatprep.subr.mxu0 0.0
  %203 = vmatpush2.msra.mxu0 0.0
  %204 = vmatprep.subr.mxu0 0.0
  %205 = vmatpush2.msra.mxu0 0.0
  %206 = vmatprep.subr.mxu0 0.0
  %207 = vmatpush2.msra.mxu0 0.0
  %208 = vmatprep.subr.mxu0 0.0
  %209 = vmatpush2.msra.mxu0 0.0
  %210 = vmatprep.subr.mxu0 0.0
  %211 = vmatpush2.msra.mxu0 0.0
  %212 = vmatprep.subr.mxu0 0.0
  %213 = vmatpush2.msra.mxu0 0.0
  %214 = vmatprep.subr.mxu0 0.0
  %215 = vmatpush2.msra.mxu0 0.0
  %216 = vmatprep.subr.mxu0 0.0
  %217 = vmatpush2.msra.mxu0 0.0
  %218 = vmatprep.subr.mxu0 0.0
  %219 = vmatpush2.msra.mxu0 0.0
  %220 = vmatprep.subr.mxu0 0.0
  %221 = vmatpush2.msra.mxu0 0.0
  %222 = vmatprep.subr.mxu0 0.0
  %223 = vmatpush2.msra.mxu0 0.0
  %224 = vmatprep.subr.mxu0 0.0
  %225 = vmatpush2.msra.mxu0 0.0
  %226 = vmatprep.subr.mxu0 0.0
  %227 = vmatpush2.msra.mxu0 0.0
  %228 = vmatprep.subr.mxu0 0.0
  %229 = vmatpush2.msra.mxu0 0.0
  %230 = vmatprep.subr.mxu0 0.0
  %231 = vmatpush2.msra.mxu0 0.0
  %232 = vmatprep.subr.mxu0 0.0
  %233 = vmatpush2.msra.mxu0 0.0
  %234 = vmatprep.mubr.f32.mxu0 0.0
  %235 = vmatmul.mubr.f32.gmra.mxu0 %v164
  %v236 = vpop.f32.mrf.mxu0
  %v237 = vadd.f32 %v160, %v236
  %v238 = vpop.f32.mrf.mxu0
  %239 = vdwg.mxu0
  %240 = vst.msk [vmem:[%s17] sm:$0xff] %vm149, %v237
  %v241 = vld [vmem:[%s6] sm:$0xf]
  %v242 = vld [vmem:[%s7] sm:$0xff]
  %v243 = vld [vmem:[%s7 + $0x8] sm:$0xff]
  %v244 = vld [vmem:[%s7 + $0x10] sm:$0xff]
  %v245 = vld [vmem:[%s7 + $0x18] sm:$0xff]
  %v246 = vld [vmem:[%s7 + $0x20] sm:$0xff]
  %v247 = vld [vmem:[%s7 + $0x28] sm:$0xff]
  %v248 = vld [vmem:[%s7 + $0x30] sm:$0xff]
  %v249 = vld [vmem:[%s7 + $0x38] sm:$0xff]
  %v250 = vld [vmem:[%s7 + $0x40] sm:$0xff]
  %v251 = vld [vmem:[%s7 + $0x48] sm:$0xff]
  %v252 = vld [vmem:[%s7 + $0x50] sm:$0xff]
  %v253 = vld [vmem:[%s7 + $0x58] sm:$0xff]
  %v254 = vld [vmem:[%s7 + $0x60] sm:$0xff]
  %v255 = vld [vmem:[%s7 + $0x68] sm:$0xff]
  %v256 = vld [vmem:[%s7 + $0x70] sm:$0xff]
  %v257 = vld [vmem:[%s7 + $0x78] sm:$0xff]
  %v258 = vld [vmem:[%s7 + $0x80] sm:$0xff]
  %v259 = vld [vmem:[%s7 + $0x88] sm:$0xff]
  %v260 = vld [vmem:[%s7 + $0x90] sm:$0xff]
  %v261 = vld [vmem:[%s7 + $0x98] sm:$0xff]
  %v262 = vld [vmem:[%s7 + $0xa0] sm:$0xff]
  %v263 = vld [vmem:[%s7 + $0xa8] sm:$0xff]
  %v264 = vld [vmem:[%s7 + $0xb0] sm:$0xff]
  %v265 = vld [vmem:[%s7 + $0xb8] sm:$0xff]
  %v266 = vld [vmem:[%s7 + $0xc0] sm:$0xff]
  %v267 = vld [vmem:[%s7 + $0xc8] sm:$0xff]
  %v268 = vld [vmem:[%s7 + $0xd0] sm:$0xff]
  %v269 = vld [vmem:[%s7 + $0xd8] sm:$0xff]
  %v270 = vld [vmem:[%s7 + $0xe0] sm:$0xff]
  %v271 = vld [vmem:[%s7 + $0xe8] sm:$0xff]
  %v272 = vld [vmem:[%s7 + $0xf0] sm:$0xff]
  %v273 = vld [vmem:[%s7 + $0xf8] sm:$0xff]
  %v274 = vld [vmem:[%s8] sm:$0x1]
  %v276 = vlaneseq
  %v277 = vshrl.u32 %v276, 7
  %v278 = vsub.s32 0, %v277
  %v279 = vrot.slane %v274, %v278
  %v283 = vunpack.c.l.s4 1983009808
  %v284 = vunpack.c.0.s8 %v283
  %v285 = vlaneseq
  %v286 = vshrl.u32 %v285, 7
  %v287 = vsub.s32 %v284, %v286
  %v288 = vrot.slane %v241, %v287
  %v289 = vcombine.high %v288, %v288
  %292 = vmatprep.subr.mxu0 0.0
  %293 = vmatpush1.msra.mxu0 %v257
  %294 = vmatprep.subr.mxu0 0.0
  %295 = vmatpush1.msra.mxu0 %v256
  %296 = vmatprep.subr.mxu0 0.0
  %297 = vmatpush1.msra.mxu0 %v255
  %298 = vmatprep.subr.mxu0 0.0
  %299 = vmatpush1.msra.mxu0 %v254
  %300 = vmatprep.subr.mxu0 0.0
  %301 = vmatpush1.msra.mxu0 %v253
  %302 = vmatprep.subr.mxu0 0.0
  %303 = vmatpush1.msra.mxu0 %v252
  %304 = vmatprep.subr.mxu0 0.0
  %305 = vmatpush1.msra.mxu0 %v251
  %306 = vmatprep.subr.mxu0 0.0
  %307 = vmatpush1.msra.mxu0 %v250
  %308 = vmatprep.subr.mxu0 0.0
  %309 = vmatpush1.msra.mxu0 %v249
  %310 = vmatprep.subr.mxu0 0.0
  %311 = vmatpush1.msra.mxu0 %v248
  %312 = vmatprep.subr.mxu0 0.0
  %313 = vmatpush1.msra.mxu0 %v247
  %314 = vmatprep.subr.mxu0 0.0
  %315 = vmatpush1.msra.mxu0 %v246
  %316 = vmatprep.subr.mxu0 0.0
  %317 = vmatpush1.msra.mxu0 %v245
  %318 = vmatprep.subr.mxu0 0.0
  %319 = vmatpush1.msra.mxu0 %v244
  %320 = vmatprep.subr.mxu0 0.0
  %321 = vmatpush1.msra.mxu0 %v243
  %322 = vmatprep.subr.mxu0 0.0
  %323 = vmatpush1.msra.mxu0 %v242
  %324 = vmatprep.subr.mxu0 0.0
  %325 = vmatpush2.msra.mxu0 %v273
  %326 = vmatprep.subr.mxu0 0.0
  %327 = vmatpush2.msra.mxu0 %v272
  %328 = vmatprep.subr.mxu0 0.0
  %329 = vmatpush2.msra.mxu0 %v271
  %330 = vmatprep.subr.mxu0 0.0
  %331 = vmatpush2.msra.mxu0 %v270
  %332 = vmatprep.subr.mxu0 0.0
  %333 = vmatpush2.msra.mxu0 %v269
  %334 = vmatprep.subr.mxu0 0.0
  %335 = vmatpush2.msra.mxu0 %v268
  %336 = vmatprep.subr.mxu0 0.0
  %337 = vmatpush2.msra.mxu0 %v267
  %338 = vmatprep.subr.mxu0 0.0
  %339 = vmatpush2.msra.mxu0 %v266
  %340 = vmatprep.subr.mxu0 0.0
  %341 = vmatpush2.msra.mxu0 %v265
  %342 = vmatprep.subr.mxu0 0.0
  %343 = vmatpush2.msra.mxu0 %v264
  %344 = vmatprep.subr.mxu0 0.0
  %345 = vmatpush2.msra.mxu0 %v263
  %346 = vmatprep.subr.mxu0 0.0
  %347 = vmatpush2.msra.mxu0 %v262
  %348 = vmatprep.subr.mxu0 0.0
  %349 = vmatpush2.msra.mxu0 %v261
  %350 = vmatprep.subr.mxu0 0.0
  %351 = vmatpush2.msra.mxu0 %v260
  %352 = vmatprep.subr.mxu0 0.0
  %353 = vmatpush2.msra.mxu0 %v259
  %354 = vmatprep.subr.mxu0 0.0
  %355 = vmatpush2.msra.mxu0 %v258
  %356 = vmatprep.mubr.f32.mxu0 %v289
  %357 = vmatmul.mubr.f32.gmra.mxu0 %v288
  %v358 = vpop.f32.mrf.mxu0
  %v359 = vadd.f32 %v279, %v358
  %v360 = vpop.f32.mrf.mxu0
  %361 = vdwg.mxu0
  %v362 = vxor.u32 %v359, 2147483648
  %v363 = vmul.f32 %v362, 1.442695
  %v364 = vpow.pop %v363
  %v365 = vadd.f32 %v364, 1.0
  %v366 = vrcp.pop %v365
  %v367 = vmul.f32 1.0, %v366
  %v368 = vmul.f32 %v359, %v367
  %v369 = vld [vmem:[%s9] sm:$0xff]
  %v370 = vld [vmem:[%s9 + $0x8] sm:$0xff]
  %v371 = vld [vmem:[%s9 + $0x10] sm:$0xff]
  %v372 = vld [vmem:[%s9 + $0x18] sm:$0xff]
  %v373 = vld [vmem:[%s10] sm:$0x1]
  %v375 = vlaneseq
  %v376 = vshrl.u32 %v375, 7
  %v377 = vsub.s32 0, %v376
  %v378 = vrot.slane %v373, %v377
  %v381 = vsel %vm149, %v368, 0
  %383 = vmatprep.subr.mxu0 0.0
  %384 = vmatpush1.msra.mxu0 0.0
  %385 = vmatprep.subr.mxu0 0.0
  %386 = vmatpush1.msra.mxu0 0.0
  %387 = vmatprep.subr.mxu0 0.0
  %388 = vmatpush1.msra.mxu0 0.0
  %389 = vmatprep.subr.mxu0 0.0
  %390 = vmatpush1.msra.mxu0 0.0
  %391 = vmatprep.subr.mxu0 0.0
  %392 = vmatpush1.msra.mxu0 0.0
  %393 = vmatprep.subr.mxu0 0.0
  %394 = vmatpush1.msra.mxu0 0.0
  %395 = vmatprep.subr.mxu0 0.0
  %396 = vmatpush1.msra.mxu0 0.0
  %397 = vmatprep.subr.mxu0 0.0
  %398 = vmatpush1.msra.mxu0 0.0
  %399 = vmatprep.subr.mxu0 0.0
  %400 = vmatpush1.msra.mxu0 0.0
  %401 = vmatprep.subr.mxu0 0.0
  %402 = vmatpush1.msra.mxu0 0.0
  %403 = vmatprep.subr.mxu0 0.0
  %404 = vmatpush1.msra.mxu0 0.0
  %405 = vmatprep.subr.mxu0 0.0
  %406 = vmatpush1.msra.mxu0 0.0
  %407 = vmatprep.subr.mxu0 0.0
  %408 = vmatpush1.msra.mxu0 %v372
  %409 = vmatprep.subr.mxu0 0.0
  %410 = vmatpush1.msra.mxu0 %v371
  %411 = vmatprep.subr.mxu0 0.0
  %412 = vmatpush1.msra.mxu0 %v370
  %413 = vmatprep.subr.mxu0 0.0
  %414 = vmatpush1.msra.mxu0 %v369
  %415 = vmatprep.subr.mxu0 0.0
  %416 = vmatpush2.msra.mxu0 0.0
  %417 = vmatprep.subr.mxu0 0.0
  %418 = vmatpush2.msra.mxu0 0.0
  %419 = vmatprep.subr.mxu0 0.0
  %420 = vmatpush2.msra.mxu0 0.0
  %421 = vmatprep.subr.mxu0 0.0
  %422 = vmatpush2.msra.mxu0 0.0
  %423 = vmatprep.subr.mxu0 0.0
  %424 = vmatpush2.msra.mxu0 0.0
  %425 = vmatprep.subr.mxu0 0.0
  %426 = vmatpush2.msra.mxu0 0.0
  %427 = vmatprep.subr.mxu0 0.0
  %428 = vmatpush2.msra.mxu0 0.0
  %429 = vmatprep.subr.mxu0 0.0
  %430 = vmatpush2.msra.mxu0 0.0
  %431 = vmatprep.subr.mxu0 0.0
  %432 = vmatpush2.msra.mxu0 0.0
  %433 = vmatprep.subr.mxu0 0.0
  %434 = vmatpush2.msra.mxu0 0.0
  %435 = vmatprep.subr.mxu0 0.0
  %436 = vmatpush2.msra.mxu0 0.0
  %437 = vmatprep.subr.mxu0 0.0
  %438 = vmatpush2.msra.mxu0 0.0
  %439 = vmatprep.subr.mxu0 0.0
  %440 = vmatpush2.msra.mxu0 0.0
  %441 = vmatprep.subr.mxu0 0.0
  %442 = vmatpush2.msra.mxu0 0.0
  %443 = vmatprep.subr.mxu0 0.0
  %444 = vmatpush2.msra.mxu0 0.0
  %445 = vmatprep.subr.mxu0 0.0
  %446 = vmatpush2.msra.mxu0 0.0
  %447 = vmatprep.mubr.f32.mxu0 0.0
  %448 = vmatmul.mubr.f32.gmra.mxu0 %v381
  %v449 = vpop.f32.mrf.mxu0
  %v450 = vadd.f32 %v378, %v449
  %v451 = vpop.f32.mrf.mxu0
  %452 = vdwg.mxu0
  %v453 = vld [vmem:[%s11] sm:$0x3]
  %v454 = vld [vmem:[%s12] sm:$0xff]
  %v455 = vld [vmem:[%s13] sm:$0x1]
  %v457 = vlaneseq
  %v458 = vshrl.u32 %v457, 7
  %v459 = vsub.s32 0, %v458
  %v460 = vrot.slane %v455, %v459
  %vm462 = vcmask 64512
  %v464 = vsel %vm462, %v453, 0
  %466 = vmatprep.subr.mxu0 0.0
  %467 = vmatpush1.msra.mxu0 0.0
  %468 = vmatprep.subr.mxu0 0.0
  %469 = vmatpush1.msra.mxu0 0.0
  %470 = vmatprep.subr.mxu0 0.0
  %471 = vmatpush1.msra.mxu0 0.0
  %472 = vmatprep.subr.mxu0 0.0
  %473 = vmatpush1.msra.mxu0 0.0
  %474 = vmatprep.subr.mxu0 0.0
  %475 = vmatpush1.msra.mxu0 0.0
  %476 = vmatprep.subr.mxu0 0.0
  %477 = vmatpush1.msra.mxu0 0.0
  %478 = vmatprep.subr.mxu0 0.0
  %479 = vmatpush1.msra.mxu0 0.0
  %480 = vmatprep.subr.mxu0 0.0
  %481 = vmatpush1.msra.mxu0 0.0
  %482 = vmatprep.subr.mxu0 0.0
  %483 = vmatpush1.msra.mxu0 0.0
  %484 = vmatprep.subr.mxu0 0.0
  %485 = vmatpush1.msra.mxu0 0.0
  %486 = vmatprep.subr.mxu0 0.0
  %487 = vmatpush1.msra.mxu0 0.0
  %488 = vmatprep.subr.mxu0 0.0
  %489 = vmatpush1.msra.mxu0 0.0
  %490 = vmatprep.subr.mxu0 0.0
  %491 = vmatpush1.msra.mxu0 0.0
  %492 = vmatprep.subr.mxu0 0.0
  %493 = vmatpush1.msra.mxu0 0.0
  %494 = vmatprep.subr.mxu0 0.0
  %495 = vmatpush1.msra.mxu0 0.0
  %496 = vmatprep.subr.mxu0 0.0
  %497 = vmatpush1.msra.mxu0 %v454
  %498 = vmatprep.subr.mxu0 0.0
  %499 = vmatpush2.msra.mxu0 0.0
  %500 = vmatprep.subr.mxu0 0.0
  %501 = vmatpush2.msra.mxu0 0.0
  %502 = vmatprep.subr.mxu0 0.0
  %503 = vmatpush2.msra.mxu0 0.0
  %504 = vmatprep.subr.mxu0 0.0
  %505 = vmatpush2.msra.mxu0 0.0
  %506 = vmatprep.subr.mxu0 0.0
  %507 = vmatpush2.msra.mxu0 0.0
  %508 = vmatprep.subr.mxu0 0.0
  %509 = vmatpush2.msra.mxu0 0.0
  %510 = vmatprep.subr.mxu0 0.0
  %511 = vmatpush2.msra.mxu0 0.0
  %512 = vmatprep.subr.mxu0 0.0
  %513 = vmatpush2.msra.mxu0 0.0
  %514 = vmatprep.subr.mxu0 0.0
  %515 = vmatpush2.msra.mxu0 0.0
  %516 = vmatprep.subr.mxu0 0.0
  %517 = vmatpush2.msra.mxu0 0.0
  %518 = vmatprep.subr.mxu0 0.0
  %519 = vmatpush2.msra.mxu0 0.0
  %520 = vmatprep.subr.mxu0 0.0
  %521 = vmatpush2.msra.mxu0 0.0
  %522 = vmatprep.subr.mxu0 0.0
  %523 = vmatpush2.msra.mxu0 0.0
  %524 = vmatprep.subr.mxu0 0.0
  %525 = vmatpush2.msra.mxu0 0.0
  %526 = vmatprep.subr.mxu0 0.0
  %527 = vmatpush2.msra.mxu0 0.0
  %528 = vmatprep.subr.mxu0 0.0
  %529 = vmatpush2.msra.mxu0 0.0
  %530 = vmatprep.mubr.f32.mxu0 0.0
  %531 = vmatmul.mubr.f32.gmra.mxu0 %v464
  %v532 = vpop.f32.mrf.mxu0
  %v533 = vadd.f32 %v460, %v532
  %v534 = vpop.f32.mrf.mxu0
  %535 = vdwg.mxu0
  %v536 = vxor.u32 %v533, 2147483648
  %v537 = vmul.f32 %v536, 1.442695
  %v538 = vpow.pop %v537
  %v539 = vadd.f32 %v538, 1.0
  %v540 = vrcp.pop %v539
  %v541 = vmul.f32 1.0, %v540
  %v542 = vmul.f32 %v533, %v541
  %v543 = vld [vmem:[%s14] sm:$0xff]
  %v544 = vld [vmem:[%s14 + $0x8] sm:$0xff]
  %v545 = vld [vmem:[%s14 + $0x10] sm:$0xff]
  %v546 = vld [vmem:[%s14 + $0x18] sm:$0xff]
  %v547 = vld [vmem:[%s15] sm:$0x1]
  %v549 = vlaneseq
  %v550 = vshrl.u32 %v549, 7
  %v551 = vsub.s32 0, %v550
  %v552 = vrot.slane %v547, %v551
  %v555 = vsel %vm149, %v542, 0
  %557 = vmatprep.subr.mxu0 0.0
  %558 = vmatpush1.msra.mxu0 0.0
  %559 = vmatprep.subr.mxu0 0.0
  %560 = vmatpush1.msra.mxu0 0.0
  %561 = vmatprep.subr.mxu0 0.0
  %562 = vmatpush1.msra.mxu0 0.0
  %563 = vmatprep.subr.mxu0 0.0
  %564 = vmatpush1.msra.mxu0 0.0
  %565 = vmatprep.subr.mxu0 0.0
  %566 = vmatpush1.msra.mxu0 0.0
  %567 = vmatprep.subr.mxu0 0.0
  %568 = vmatpush1.msra.mxu0 0.0
  %569 = vmatprep.subr.mxu0 0.0
  %570 = vmatpush1.msra.mxu0 0.0
  %571 = vmatprep.subr.mxu0 0.0
  %572 = vmatpush1.msra.mxu0 0.0
  %573 = vmatprep.subr.mxu0 0.0
  %574 = vmatpush1.msra.mxu0 0.0
  %575 = vmatprep.subr.mxu0 0.0
  %576 = vmatpush1.msra.mxu0 0.0
  %577 = vmatprep.subr.mxu0 0.0
  %578 = vmatpush1.msra.mxu0 0.0
  %579 = vmatprep.subr.mxu0 0.0
  %580 = vmatpush1.msra.mxu0 0.0
  %581 = vmatprep.subr.mxu0 0.0
  %582 = vmatpush1.msra.mxu0 %v546
  %583 = vmatprep.subr.mxu0 0.0
  %584 = vmatpush1.msra.mxu0 %v545
  %585 = vmatprep.subr.mxu0 0.0
  %586 = vmatpush1.msra.mxu0 %v544
  %587 = vmatprep.subr.mxu0 0.0
  %588 = vmatpush1.msra.mxu0 %v543
  %589 = vmatprep.subr.mxu0 0.0
  %590 = vmatpush2.msra.mxu0 0.0
  %591 = vmatprep.subr.mxu0 0.0
  %592 = vmatpush2.msra.mxu0 0.0
  %593 = vmatprep.subr.mxu0 0.0
  %594 = vmatpush2.msra.mxu0 0.0
  %595 = vmatprep.subr.mxu0 0.0
  %596 = vmatpush2.msra.mxu0 0.0
  %597 = vmatprep.subr.mxu0 0.0
  %598 = vmatpush2.msra.mxu0 0.0
  %599 = vmatprep.subr.mxu0 0.0
  %600 = vmatpush2.msra.mxu0 0.0
  %601 = vmatprep.subr.mxu0 0.0
  %602 = vmatpush2.msra.mxu0 0.0
  %603 = vmatprep.subr.mxu0 0.0
  %604 = vmatpush2.msra.mxu0 0.0
  %605 = vmatprep.subr.mxu0 0.0
  %606 = vmatpush2.msra.mxu0 0.0
  %607 = vmatprep.subr.mxu0 0.0
  %608 = vmatpush2.msra.mxu0 0.0
  %609 = vmatprep.subr.mxu0 0.0
  %610 = vmatpush2.msra.mxu0 0.0
  %611 = vmatprep.subr.mxu0 0.0
  %612 = vmatpush2.msra.mxu0 0.0
  %613 = vmatprep.subr.mxu0 0.0
  %614 = vmatpush2.msra.mxu0 0.0
  %615 = vmatprep.subr.mxu0 0.0
  %616 = vmatpush2.msra.mxu0 0.0
  %617 = vmatprep.subr.mxu0 0.0
  %618 = vmatpush2.msra.mxu0 0.0
  %619 = vmatprep.subr.mxu0 0.0
  %620 = vmatpush2.msra.mxu0 0.0
  %621 = vmatprep.mubr.f32.mxu0 0.0
  %622 = vmatmul.mubr.f32.gmra.mxu0 %v555
  %v623 = vpop.f32.mrf.mxu0
  %v624 = vadd.f32 %v552, %v623
  %v625 = vpop.f32.mrf.mxu0
  %626 = vdwg.mxu0
  %v627 = vadd.f32 %v450, %v624
  %vm628 = vcmask 254976
  %629 = vst.msk [vmem:[%s18] sm:$0x3] %vm628, %v627
  // Predicated region
  $region66: #{flux_forward.8} parent=0 // pred_check
    _
  $region67: #{flux_forward.8} parent=0 // pred_check_branch
    %631 = sbr.rel (0) target = $region69
  $region68: #{flux_forward.8} parent=0 // pred_region
    _
  $region69: #{flux_forward.8} parent=0 // pred_fallthru
    _
  // Predicated region
  $region70: #{flux_forward.8} parent=0 // pred_check
    _
  $region71: #{flux_forward.8} parent=0 // pred_check_branch
    %633 = sbr.rel (0) target = $region73
  $region72: #{flux_forward.8} parent=0 // pred_region
    _
  $region73: #{flux_forward.8} parent=0 // pred_fallthru
    _
  // Predicated region
  $region74: #{flux_forward.8} parent=0 // pred_check
    _
  $region75: #{flux_forward.8} parent=0 // pred_check_branch
    %635 = sbr.rel (0) target = $region77
  $region76: #{flux_forward.8} parent=0 // pred_region
    _
  $region77: #{flux_forward.8} parent=0 // pred_fallthru
    _
  // Predicated region
  $region78: #{flux_forward.8} parent=0 // pred_check
    _
  $region79: #{flux_forward.8} parent=0 // pred_check_branch
    %637 = sbr.rel (0) target = $region81
  $region80: #{flux_forward.8} parent=0 // pred_region
    _
  $region81: #{flux_forward.8} parent=0 // pred_fallthru
    _
  // Predicated region
  $region82: #{flux_forward.8} parent=0 // pred_check
    _
  $region83: #{flux_forward.8} parent=0 // pred_check_branch
    %639 = sbr.rel (0) target = $region85
  $region84: #{flux_forward.8} parent=0 // pred_region
    _
  $region85: #{flux_forward.8} parent=0 // pred_fallthru
    _
  // Predicated region
  $region86: #{flux_forward.8} parent=0 // pred_check
    _
  $region87: #{flux_forward.8} parent=0 // pred_check_branch
    %641 = sbr.rel (0) target = $region89
  $region88: #{flux_forward.8} parent=0 // pred_region
    _
  $region89: #{flux_forward.8} parent=0 // pred_fallthru
    _

// kernel: flux_forward.9
$region0: #{flux_forward.9}
  #allocation0 [shape = 'u32[]', space=smem, size = 0x4, offset = 0x4, fixed_abs, tag = 'smem constant byte address 0x4 - core index']
  #allocation1 [shape = 'u32[144,128]{1,0:T(1,128)}', space=vmem, size = 0x12000, scoped, tag = 'internal scratch']
  %s0 = inlined_call_operand.vmem [shape: f32[2,32], index: 0, kind: input, shape index: {}]
  %s1 = inlined_call_operand.vmem [shape: f32[32,384], index: 1, kind: input, shape index: {}]
  %s2 = inlined_call_operand.vmem [shape: f32[1,384], index: 2, kind: input, shape index: {}]
  %s3 = inlined_call_operand.vmem [shape: f32[16,32], index: 3, kind: input, shape index: {}]
  %s4 = inlined_call_operand.vmem [shape: f32[16,2], index: 4, kind: input, shape index: {}]
  %s5 = inlined_call_operand.vmem [shape: f32[8,32], index: 5, kind: input, shape index: {}]
  %s6 = inlined_call_operand.vmem [shape: f32[8,2], index: 6, kind: input, shape index: {}]
  %s7 = inlined_call_operand.vmem [shape: f32[32,96], index: 7, kind: input, shape index: {}]
  %s8 = inlined_call_operand.vmem [shape: f32[1,96], index: 8, kind: input, shape index: {}]
  %s9 = inlined_call_operand.vmem [shape: f32[32,96], index: 9, kind: input, shape index: {}]
  %s10 = inlined_call_operand.vmem [shape: f32[1,96], index: 10, kind: input, shape index: {}]
  %s11 = inlined_call_operand.vmem [shape: f32[96,96], index: 11, kind: input, shape index: {}]
  %s12 = inlined_call_operand.vmem [shape: f32[1,96], index: 12, kind: input, shape index: {}]
  %s13 = inlined_call_operand.vmem [shape: f32[1,96], index: 13, kind: input, shape index: {}]
  %s14 = inlined_call_operand.vmem [shape: f32[1,96], index: 14, kind: input, shape index: {}]
  %s15 = inlined_call_operand.vmem [shape: f32[16,96], index: 15, kind: output, shape index: {0}]
  %s16 = inlined_call_operand.vmem [shape: f32[8,96], index: 16, kind: output, shape index: {1}]
  %s17 = inlined_call_operand.vmem [shape: f32[2,384], index: 17, kind: output, shape index: {2}]
  %18 = xla_tuple %s15, %s16, %s17
  %s19 = sld [smem:[#allocation0]]
  $region86: #{flux_forward.9} parent=0
    _
  %s21 = ssub.s32 1, %s19
  %s22 = scalar_select 0, %s21, %s19
  // Predicated region
  $region2: #{flux_forward.9} parent=0 // pred_check
    _
  $region3: #{flux_forward.9} parent=0 // pred_check_branch
    %24 = sbr.rel (0) target = $region5
  $region4: #{flux_forward.9} parent=0 // pred_region
    _
  $region5: #{flux_forward.9} parent=0 // pred_fallthru
    _
  // Predicated region
  $region6: #{flux_forward.9} parent=0 // pred_check
    _
  $region7: #{flux_forward.9} parent=0 // pred_check_branch
    %26 = sbr.rel (0) target = $region9
  $region8: #{flux_forward.9} parent=0 // pred_region
    _
  $region9: #{flux_forward.9} parent=0 // pred_fallthru
    _
  // Predicated region
  $region10: #{flux_forward.9} parent=0 // pred_check
    _
  $region11: #{flux_forward.9} parent=0 // pred_check_branch
    %28 = sbr.rel (0) target = $region13
  $region12: #{flux_forward.9} parent=0 // pred_region
    _
  $region13: #{flux_forward.9} parent=0 // pred_fallthru
    _
  // Predicated region
  $region14: #{flux_forward.9} parent=0 // pred_check
    _
  $region15: #{flux_forward.9} parent=0 // pred_check_branch
    %30 = sbr.rel (0) target = $region17
  $region16: #{flux_forward.9} parent=0 // pred_region
    _
  $region17: #{flux_forward.9} parent=0 // pred_fallthru
    _
  // Predicated region
  $region18: #{flux_forward.9} parent=0 // pred_check
    _
  $region19: #{flux_forward.9} parent=0 // pred_check_branch
    %32 = sbr.rel (0) target = $region21
  $region20: #{flux_forward.9} parent=0 // pred_region
    _
  $region21: #{flux_forward.9} parent=0 // pred_fallthru
    _
  // Predicated region
  $region22: #{flux_forward.9} parent=0 // pred_check
    _
  $region23: #{flux_forward.9} parent=0 // pred_check_branch
    %34 = sbr.rel (0) target = $region25
  $region24: #{flux_forward.9} parent=0 // pred_region
    _
  $region25: #{flux_forward.9} parent=0 // pred_fallthru
    _
  // Predicated region
  $region26: #{flux_forward.9} parent=0 // pred_check
    _
  $region27: #{flux_forward.9} parent=0 // pred_check_branch
    %36 = sbr.rel (0) target = $region29
  $region28: #{flux_forward.9} parent=0 // pred_region
    _
  $region29: #{flux_forward.9} parent=0 // pred_fallthru
    _
  // Predicated region
  $region30: #{flux_forward.9} parent=0 // pred_check
    _
  $region31: #{flux_forward.9} parent=0 // pred_check_branch
    %38 = sbr.rel (0) target = $region33
  $region32: #{flux_forward.9} parent=0 // pred_region
    _
  $region33: #{flux_forward.9} parent=0 // pred_fallthru
    _
  // Predicated region
  $region34: #{flux_forward.9} parent=0 // pred_check
    _
  $region35: #{flux_forward.9} parent=0 // pred_check_branch
    %40 = sbr.rel (0) target = $region37
  $region36: #{flux_forward.9} parent=0 // pred_region
    _
  $region37: #{flux_forward.9} parent=0 // pred_fallthru
    _
  // Predicated region
  $region38: #{flux_forward.9} parent=0 // pred_check
    _
  $region39: #{flux_forward.9} parent=0 // pred_check_branch
    %42 = sbr.rel (0) target = $region41
  $region40: #{flux_forward.9} parent=0 // pred_region
    _
  $region41: #{flux_forward.9} parent=0 // pred_fallthru
    _
  // Predicated region
  $region42: #{flux_forward.9} parent=0 // pred_check
    _
  $region43: #{flux_forward.9} parent=0 // pred_check_branch
    %44 = sbr.rel (0) target = $region45
  $region44: #{flux_forward.9} parent=0 // pred_region
    _
  $region45: #{flux_forward.9} parent=0 // pred_fallthru
    _
  // Predicated region
  $region46: #{flux_forward.9} parent=0 // pred_check
    _
  $region47: #{flux_forward.9} parent=0 // pred_check_branch
    %46 = sbr.rel (0) target = $region49
  $region48: #{flux_forward.9} parent=0 // pred_region
    _
  $region49: #{flux_forward.9} parent=0 // pred_fallthru
    _
  // Predicated region
  $region50: #{flux_forward.9} parent=0 // pred_check
    _
  $region51: #{flux_forward.9} parent=0 // pred_check_branch
    %48 = sbr.rel (0) target = $region53
  $region52: #{flux_forward.9} parent=0 // pred_region
    _
  $region53: #{flux_forward.9} parent=0 // pred_fallthru
    _
  // Predicated region
  $region54: #{flux_forward.9} parent=0 // pred_check
    _
  $region55: #{flux_forward.9} parent=0 // pred_check_branch
    %50 = sbr.rel (0) target = $region57
  $region56: #{flux_forward.9} parent=0 // pred_region
    _
  $region57: #{flux_forward.9} parent=0 // pred_fallthru
    _
  // Predicated region
  $region58: #{flux_forward.9} parent=0 // pred_check
    _
  $region59: #{flux_forward.9} parent=0 // pred_check_branch
    %52 = sbr.rel (0) target = $region61
  $region60: #{flux_forward.9} parent=0 // pred_region
    _
  $region61: #{flux_forward.9} parent=0 // pred_fallthru
    _
  %v53 = vld [vmem:[%s0] sm:$0x3]
  %v54 = vxor.u32 %v53, 2147483648
  %v55 = vmul.f32 %v54, 1.442695
  %v56 = vpow.pop %v55
  %v57 = vadd.f32 %v56, 1.0
  %v58 = vrcp.pop %v57
  %v59 = vmul.f32 1.0, %v58
  %v60 = vmul.f32 %v53, %v59
  %v61 = vld [vmem:[%s1] sm:$0xff]
  %v62 = vld [vmem:[%s1 + $0x8] sm:$0xff]
  %v63 = vld [vmem:[%s1 + $0x10] sm:$0xff]
  %v64 = vld [vmem:[%s1 + $0x18] sm:$0xff]
  %v65 = vld [vmem:[%s1 + $0x20] sm:$0xff]
  %v66 = vld [vmem:[%s1 + $0x28] sm:$0xff]
  %v67 = vld [vmem:[%s1 + $0x30] sm:$0xff]
  %v68 = vld [vmem:[%s1 + $0x38] sm:$0xff]
  %v69 = vld [vmem:[%s1 + $0x40] sm:$0xff]
  %v70 = vld [vmem:[%s1 + $0x48] sm:$0xff]
  %v71 = vld [vmem:[%s1 + $0x50] sm:$0xff]
  %v72 = vld [vmem:[%s1 + $0x58] sm:$0xff]
  %v73 = vld [vmem:[%s2] sm:$0x7]
  %v75 = vlaneseq
  %v76 = vshrl.u32 %v75, 7
  %v77 = vsub.s32 0, %v76
  %v78 = vrot.slane %v73, %v77
  %v79 = vlaneseq
  %v80 = vshrl.u32 %v79, 7
  %v81 = vsub.s32 1, %v80
  %v82 = vrot.slane %v73, %v81
  %v83 = vlaneseq
  %v84 = vshrl.u32 %v83, 7
  %v85 = vsub.s32 2, %v84
  %v86 = vrot.slane %v73, %v85
  %vm90 = vcmask 261120
  %v92 = vsel %vm90, %v60, 0
  %94 = vmatprep.subr.mxu0 0.0
  %95 = vmatpush1.msra.mxu0 0.0
  %96 = vmatprep.subr.mxu0 0.0
  %97 = vmatpush1.msra.mxu0 0.0
  %98 = vmatprep.subr.mxu0 0.0
  %99 = vmatpush1.msra.mxu0 0.0
  %100 = vmatprep.subr.mxu0 0.0
  %101 = vmatpush1.msra.mxu0 0.0
  %102 = vmatprep.subr.mxu0 0.0
  %103 = vmatpush1.msra.mxu0 0.0
  %104 = vmatprep.subr.mxu0 0.0
  %105 = vmatpush1.msra.mxu0 0.0
  %106 = vmatprep.subr.mxu0 0.0
  %107 = vmatpush1.msra.mxu0 0.0
  %108 = vmatprep.subr.mxu0 0.0
  %109 = vmatpush1.msra.mxu0 0.0
  %110 = vmatprep.subr.mxu0 0.0
  %111 = vmatpush1.msra.mxu0 0.0
  %112 = vmatprep.subr.mxu0 0.0
  %113 = vmatpush1.msra.mxu0 0.0
  %114 = vmatprep.subr.mxu0 0.0
  %115 = vmatpush1.msra.mxu0 0.0
  %116 = vmatprep.subr.mxu0 0.0
  %117 = vmatpush1.msra.mxu0 0.0
  %118 = vmatprep.subr.mxu0 %v71
  %119 = vmatpush1.msra.mxu0 %v70
  %120 = vmatprep.subr.mxu0 %v68
  %121 = vmatpush1.msra.mxu0 %v67
  %122 = vmatprep.subr.mxu0 %v65
  %123 = vmatpush1.msra.mxu0 %v64
  %124 = vmatprep.subr.mxu0 %v62
  %125 = vmatpush1.msra.mxu0 %v61
  %126 = vmatprep.subr.mxu0 0.0
  %127 = vmatpush2.msra.mxu0 0.0
  %128 = vmatprep.subr.mxu0 0.0
  %129 = vmatpush2.msra.mxu0 0.0
  %130 = vmatprep.subr.mxu0 0.0
  %131 = vmatpush2.msra.mxu0 0.0
  %132 = vmatprep.subr.mxu0 0.0
  %133 = vmatpush2.msra.mxu0 0.0
  %134 = vmatprep.subr.mxu0 0.0
  %135 = vmatpush2.msra.mxu0 0.0
  %136 = vmatprep.subr.mxu0 0.0
  %137 = vmatpush2.msra.mxu0 0.0
  %138 = vmatprep.subr.mxu0 0.0
  %139 = vmatpush2.msra.mxu0 0.0
  %140 = vmatprep.subr.mxu0 0.0
  %141 = vmatpush2.msra.mxu0 0.0
  %142 = vmatprep.subr.mxu0 0.0
  %143 = vmatpush2.msra.mxu0 0.0
  %144 = vmatprep.subr.mxu0 0.0
  %145 = vmatpush2.msra.mxu0 0.0
  %146 = vmatprep.subr.mxu0 0.0
  %147 = vmatpush2.msra.mxu0 0.0
  %148 = vmatprep.subr.mxu0 0.0
  %149 = vmatpush2.msra.mxu0 0.0
  %150 = vmatprep.subr.mxu0 0.0
  %151 = vmatpush2.msra.mxu0 0.0
  %152 = vmatprep.subr.mxu0 0.0
  %153 = vmatpush2.msra.mxu0 0.0
  %154 = vmatprep.subr.mxu0 0.0
  %155 = vmatpush2.msra.mxu0 0.0
  %156 = vmatprep.subr.mxu0 0.0
  %157 = vmatpush2.msra.mxu0 0.0
  %158 = vmatprep.mubr.f32.mxu0 0.0
  %159 = vmatmul.mubr.f32.gmra.mxu0 %v92
  %v160 = vpop.f32.mrf.mxu0
  %v161 = vadd.f32 %v78, %v160
  %v162 = vpop.f32.mrf.mxu0
  %v163 = vadd.f32 %v82, %v162
  %164 = vdwg.mxu0
  %165 = vmatprep.subr.mxu0 0.0
  %166 = vmatpush1.msra.mxu0 0.0
  %167 = vmatprep.subr.mxu0 0.0
  %168 = vmatpush1.msra.mxu0 0.0
  %169 = vmatprep.subr.mxu0 0.0
  %170 = vmatpush1.msra.mxu0 0.0
  %171 = vmatprep.subr.mxu0 0.0
  %172 = vmatpush1.msra.mxu0 0.0
  %173 = vmatprep.subr.mxu0 0.0
  %174 = vmatpush1.msra.mxu0 0.0
  %175 = vmatprep.subr.mxu0 0.0
  %176 = vmatpush1.msra.mxu0 0.0
  %177 = vmatprep.subr.mxu0 0.0
  %178 = vmatpush1.msra.mxu0 0.0
  %179 = vmatprep.subr.mxu0 0.0
  %180 = vmatpush1.msra.mxu0 0.0
  %181 = vmatprep.subr.mxu0 0.0
  %182 = vmatpush1.msra.mxu0 0.0
  %183 = vmatprep.subr.mxu0 0.0
  %184 = vmatpush1.msra.mxu0 0.0
  %185 = vmatprep.subr.mxu0 0.0
  %186 = vmatpush1.msra.mxu0 0.0
  %187 = vmatprep.subr.mxu0 0.0
  %188 = vmatpush1.msra.mxu0 0.0
  %189 = vmatprep.subr.mxu0 0.0
  %190 = vmatpush1.msra.mxu0 %v72
  %191 = vmatprep.subr.mxu0 0.0
  %192 = vmatpush1.msra.mxu0 %v69
  %193 = vmatprep.subr.mxu0 0.0
  %194 = vmatpush1.msra.mxu0 %v66
  %195 = vmatprep.subr.mxu0 0.0
  %196 = vmatpush1.msra.mxu0 %v63
  %197 = vmatprep.subr.mxu0 0.0
  %198 = vmatpush2.msra.mxu0 0.0
  %199 = vmatprep.subr.mxu0 0.0
  %200 = vmatpush2.msra.mxu0 0.0
  %201 = vmatprep.subr.mxu0 0.0
  %202 = vmatpush2.msra.mxu0 0.0
  %203 = vmatprep.subr.mxu0 0.0
  %204 = vmatpush2.msra.mxu0 0.0
  %205 = vmatprep.subr.mxu0 0.0
  %206 = vmatpush2.msra.mxu0 0.0
  %207 = vmatprep.subr.mxu0 0.0
  %208 = vmatpush2.msra.mxu0 0.0
  %209 = vmatprep.subr.mxu0 0.0
  %210 = vmatpush2.msra.mxu0 0.0
  %211 = vmatprep.subr.mxu0 0.0
  %212 = vmatpush2.msra.mxu0 0.0
  %213 = vmatprep.subr.mxu0 0.0
  %214 = vmatpush2.msra.mxu0 0.0
  %215 = vmatprep.subr.mxu0 0.0
  %216 = vmatpush2.msra.mxu0 0.0
  %217 = vmatprep.subr.mxu0 0.0
  %218 = vmatpush2.msra.mxu0 0.0
  %219 = vmatprep.subr.mxu0 0.0
  %220 = vmatpush2.msra.mxu0 0.0
  %221 = vmatprep.subr.mxu0 0.0
  %222 = vmatpush2.msra.mxu0 0.0
  %223 = vmatprep.subr.mxu0 0.0
  %224 = vmatpush2.msra.mxu0 0.0
  %225 = vmatprep.subr.mxu0 0.0
  %226 = vmatpush2.msra.mxu0 0.0
  %227 = vmatprep.subr.mxu0 0.0
  %228 = vmatpush2.msra.mxu0 0.0
  %229 = vmatprep.mubr.f32.mxu0 0.0
  %230 = vmatmul.mubr.f32.gmra.mxu0 %v92
  %v231 = vpop.f32.mrf.mxu0
  %v232 = vadd.f32 %v86, %v231
  %v233 = vpop.f32.mrf.mxu0
  %234 = vdwg.mxu0
  %v238 = vcombine.low %v161, %v163
  %v240 = vunpack.c.l.s4 1983009808
  %v241 = vunpack.c.0.s8 %v240
  %v242 = vlaneseq
  %v243 = vshrl.u32 %v242, 7
  %v244 = vsub.s32 %v241, %v243
  %v245 = vrot.slane %v238, %v244
  %v247 = vunpack.c.l.s4 1983009808
  %v248 = vunpack.c.0.s8 %v247
  %v249 = vlaneseq
  %v250 = vshrl.u32 %v249, 7
  %v251 = vsub.s32 %v248, %v250
  %v252 = vrot.slane %v232, %v251
  %v253 = vcombine.low %v245, %v252
  %255 = vst [vmem:[%s17] sm:$0x3f] %v253
  %v256 = vld [vmem:[%s11] sm:$0xff]
  %v257 = vld [vmem:[%s11 + $0x8] sm:$0xff]
  %v258 = vld [vmem:[%s11 + $0x10] sm:$0xff]
  %v259 = vld [vmem:[%s11 + $0x18] sm:$0xff]
  %v260 = vld [vmem:[%s11 + $0x20] sm:$0xff]
  %v261 = vld [vmem:[%s11 + $0x28] sm:$0xff]
  %v262 = vld [vmem:[%s11 + $0x30] sm:$0xff]
  %v263 = vld [vmem:[%s11 + $0x38] sm:$0xff]
  %v264 = vld [vmem:[%s11 + $0x40] sm:$0xff]
  %v265 = vld [vmem:[%s11 + $0x48] sm:$0xff]
  %v266 = vld [vmem:[%s11 + $0x50] sm:$0xff]
  %v267 = vld [vmem:[%s11 + $0x58] sm:$0xff]
  %v268 = vld [vmem:[%s12] sm:$0x1]
  %v269 = vld [vmem:[%s3] sm:$0xff]
  %v270 = vld [vmem:[%s3 + $0x8] sm:$0xff]
  %v271 = vld [vmem:[%s4] sm:$0xff]
  %v272 = vld [vmem:[%s4 + $0x8] sm:$0xff]
  %v273 = vld [vmem:[%s7] sm:$0xff]
  %v274 = vld [vmem:[%s7 + $0x8] sm:$0xff]
  %v275 = vld [vmem:[%s7 + $0x10] sm:$0xff]
  %v276 = vld [vmem:[%s7 + $0x18] sm:$0xff]
  %v277 = vld [vmem:[%s8] sm:$0x1]
  %v278 = vld [vmem:[%s13] sm:$0x1]
  %vm279 = vcmask 15360
  %v281 = vsel %vm279, %v271, 0
  %v284 = vsel %vm279, %v272, 0
  %vm286 = vcmask 1041408
  %v287 = vsel %vm286, %v161, 0
  %289 = vmatprep.subr.mxu0 0.0
  %290 = vmatpush1.msra.mxu0 0.0
  %291 = vmatprep.subr.mxu0 0.0
  %292 = vmatpush1.msra.mxu0 0.0
  %293 = vmatprep.subr.mxu0 0.0
  %294 = vmatpush1.msra.mxu0 0.0
  %295 = vmatprep.subr.mxu0 0.0
  %296 = vmatpush1.msra.mxu0 0.0
  %297 = vmatprep.subr.mxu0 0.0
  %298 = vmatpush1.msra.mxu0 0.0
  %299 = vmatprep.subr.mxu0 0.0
  %300 = vmatpush1.msra.mxu0 0.0
  %301 = vmatprep.subr.mxu0 0.0
  %302 = vmatpush1.msra.mxu0 0.0
  %303 = vmatprep.subr.mxu0 0.0
  %304 = vmatpush1.msra.mxu0 0.0
  %305 = vmatprep.subr.mxu0 0.0
  %306 = vmatpush1.msra.mxu0 0.0
  %307 = vmatprep.subr.mxu0 0.0
  %308 = vmatpush1.msra.mxu0 0.0
  %309 = vmatprep.subr.mxu0 0.0
  %310 = vmatpush1.msra.mxu0 0.0
  %311 = vmatprep.subr.mxu0 0.0
  %312 = vmatpush1.msra.mxu0 0.0
  %313 = vmatprep.subr.mxu0 0.0
  %314 = vmatpush1.msra.mxu0 0.0
  %315 = vmatprep.subr.mxu0 0.0
  %316 = vmatpush1.msra.mxu0 0.0
  %317 = vmatprep.subr.mxu0 0.0
  %318 = vmatpush1.msra.mxu0 0.0
  %319 = vmatprep.subr.mxu0 0.0
  %320 = vmatpush1.msra.mxu0 %v287
  %321 = vmatprep.subr.mxu0 0.0
  %322 = vmatpush2.msra.mxu0 0.0
  %323 = vmatprep.subr.mxu0 0.0
  %324 = vmatpush2.msra.mxu0 0.0
  %325 = vmatprep.subr.mxu0 0.0
  %326 = vmatpush2.msra.mxu0 0.0
  %327 = vmatprep.subr.mxu0 0.0
  %328 = vmatpush2.msra.mxu0 0.0
  %329 = vmatprep.subr.mxu0 0.0
  %330 = vmatpush2.msra.mxu0 0.0
  %331 = vmatprep.subr.mxu0 0.0
  %332 = vmatpush2.msra.mxu0 0.0
  %333 = vmatprep.subr.mxu0 0.0
  %334 = vmatpush2.msra.mxu0 0.0
  %335 = vmatprep.subr.mxu0 0.0
  %336 = vmatpush2.msra.mxu0 0.0
  %337 = vmatprep.subr.mxu0 0.0
  %338 = vmatpush2.msra.mxu0 0.0
  %339 = vmatprep.subr.mxu0 0.0
  %340 = vmatpush2.msra.mxu0 0.0
  %341 = vmatprep.subr.mxu0 0.0
  %342 = vmatpush2.msra.mxu0 0.0
  %343 = vmatprep.subr.mxu0 0.0
  %344 = vmatpush2.msra.mxu0 0.0
  %345 = vmatprep.subr.mxu0 0.0
  %346 = vmatpush2.msra.mxu0 0.0
  %347 = vmatprep.subr.mxu0 0.0
  %348 = vmatpush2.msra.mxu0 0.0
  %349 = vmatprep.subr.mxu0 0.0
  %350 = vmatpush2.msra.mxu0 0.0
  %351 = vmatprep.subr.mxu0 0.0
  %352 = vmatpush2.msra.mxu0 0.0
  %353 = vmatprep.mubr.f32.mxu0 0.0
  %354 = vmatmul.mubr.f32.gmra.mxu0 %v281
  %v355 = vpop.f32.mrf.mxu0
  %v356 = vadd.f32 0.0, %v355
  %v357 = vpop.f32.mrf.mxu0
  %358 = vmatprep.mubr.f32.mxu0 0.0
  %359 = vmatmul.mubr.f32.gmra.mxu0 %v284
  %v360 = vpop.f32.mrf.mxu0
  %v361 = vadd.f32 0.0, %v360
  %v362 = vpop.f32.mrf.mxu0
  %363 = vdwg.mxu0
  %v364 = vadd.f32 %v356, 1.0
  %v365 = vadd.f32 %v361, 1.0
  %v366 = vsel %vm90, %v269, 0.0
  %367 = vadd.xlane.f32.xlu0 %v366
  %v368 = vpop.xlane.xlu0 %367
  %v369 = vsel %vm90, %v270, 0.0
  %370 = vadd.xlane.f32.xlu0 %v369
  %v371 = vpop.xlane.xlu0 %370
  %v372 = vrcp.pop 32.0
  %v373 = vmul.f32 %v368, %v372
  %v374 = vmul.f32 %v371, %v372
  %v375 = vsub.f32 %v269, %v373
  %v376 = vsub.f32 %v270, %v374
  %v377 = vmul.f32 %v375, %v375
  %v378 = vmul.f32 %v376, %v376
  %v379 = vsel %vm90, %v377, 0.0
  %380 = vadd.xlane.f32.xlu0 %v379
  %v381 = vpop.xlane.xlu0 %380
  %v382 = vsel %vm90, %v378, 0.0
  %383 = vadd.xlane.f32.xlu0 %v382
  %v384 = vpop.xlane.xlu0 %383
  %v385 = vmul.f32 %v381, %v372
  %v386 = vmul.f32 %v384, %v372
  %v387 = vadd.f32 %v385, 1e-06
  %v388 = vadd.f32 %v386, 1e-06
  %v389 = vrsqrt.pop %v387
  %v390 = vrsqrt.pop %v388
  %v391 = vmul.f32 %v375, %v389
  %v392 = vmul.f32 %v376, %v390
  %395 = vrot.lane.b32.xlu0 %v391, 32
  %v396 = vpop.permute.xlu0 %395
  %397 = vrot.lane.b32.xlu0 %v392, 32
  %v398 = vpop.permute.xlu0 %397
  %v401 = vmul.f32 %v364, %v396
  %v402 = vmul.f32 %v365, %v398
  %405 = vrot.lane.b32.xlu0 %v356, 32
  %v406 = vpop.permute.xlu0 %405
  %407 = vrot.lane.b32.xlu0 %v361, 32
  %v408 = vpop.permute.xlu0 %407
  %v411 = vadd.f32 %v401, %v406
  %v412 = vadd.f32 %v402, %v408
  %v414 = vlaneseq
  %v415 = vshrl.u32 %v414, 7
  %v416 = vsub.s32 0, %v415
  %v417 = vrot.slane %v277, %v416
  %421 = vrot.lane.b32.xlu0 %v411, 96
  %v422 = vpop.permute.xlu0 %421
  %423 = vrot.lane.b32.xlu0 %v412, 96
  %v424 = vpop.permute.xlu0 %423
  %v425 = vsel %vm90, %v422, 0
  %v427 = vsel %vm90, %v424, 0
  %429 = vmatprep.subr.mxu0 0.0
  %430 = vmatpush1.msra.mxu0 0.0
  %431 = vmatprep.subr.mxu0 0.0
  %432 = vmatpush1.msra.mxu0 0.0
  %433 = vmatprep.subr.mxu0 0.0
  %434 = vmatpush1.msra.mxu0 0.0
  %435 = vmatprep.subr.mxu0 0.0
  %436 = vmatpush1.msra.mxu0 0.0
  %437 = vmatprep.subr.mxu0 0.0
  %438 = vmatpush1.msra.mxu0 0.0
  %439 = vmatprep.subr.mxu0 0.0
  %440 = vmatpush1.msra.mxu0 0.0
  %441 = vmatprep.subr.mxu0 0.0
  %442 = vmatpush1.msra.mxu0 0.0
  %443 = vmatprep.subr.mxu0 0.0
  %444 = vmatpush1.msra.mxu0 0.0
  %445 = vmatprep.subr.mxu0 0.0
  %446 = vmatpush1.msra.mxu0 0.0
  %447 = vmatprep.subr.mxu0 0.0
  %448 = vmatpush1.msra.mxu0 0.0
  %449 = vmatprep.subr.mxu0 0.0
  %450 = vmatpush1.msra.mxu0 0.0
  %451 = vmatprep.subr.mxu0 0.0
  %452 = vmatpush1.msra.mxu0 0.0
  %453 = vmatprep.subr.mxu0 0.0
  %454 = vmatpush1.msra.mxu0 %v276
  %455 = vmatprep.subr.mxu0 0.0
  %456 = vmatpush1.msra.mxu0 %v275
  %457 = vmatprep.subr.mxu0 0.0
  %458 = vmatpush1.msra.mxu0 %v274
  %459 = vmatprep.subr.mxu0 0.0
  %460 = vmatpush1.msra.mxu0 %v273
  %461 = vmatprep.subr.mxu0 0.0
  %462 = vmatpush2.msra.mxu0 0.0
  %463 = vmatprep.subr.mxu0 0.0
  %464 = vmatpush2.msra.mxu0 0.0
  %465 = vmatprep.subr.mxu0 0.0
  %466 = vmatpush2.msra.mxu0 0.0
  %467 = vmatprep.subr.mxu0 0.0
  %468 = vmatpush2.msra.mxu0 0.0
  %469 = vmatprep.subr.mxu0 0.0
  %470 = vmatpush2.msra.mxu0 0.0
  %471 = vmatprep.subr.mxu0 0.0
  %472 = vmatpush2.msra.mxu0 0.0
  %473 = vmatprep.subr.mxu0 0.0
  %474 = vmatpush2.msra.mxu0 0.0
  %475 = vmatprep.subr.mxu0 0.0
  %476 = vmatpush2.msra.mxu0 0.0
  %477 = vmatprep.subr.mxu0 0.0
  %478 = vmatpush2.msra.mxu0 0.0
  %479 = vmatprep.subr.mxu0 0.0
  %480 = vmatpush2.msra.mxu0 0.0
  %481 = vmatprep.subr.mxu0 0.0
  %482 = vmatpush2.msra.mxu0 0.0
  %483 = vmatprep.subr.mxu0 0.0
  %484 = vmatpush2.msra.mxu0 0.0
  %485 = vmatprep.subr.mxu0 0.0
  %486 = vmatpush2.msra.mxu0 0.0
  %487 = vmatprep.subr.mxu0 0.0
  %488 = vmatpush2.msra.mxu0 0.0
  %489 = vmatprep.subr.mxu0 0.0
  %490 = vmatpush2.msra.mxu0 0.0
  %491 = vmatprep.subr.mxu0 0.0
  %492 = vmatpush2.msra.mxu0 0.0
  %493 = vmatprep.mubr.f32.mxu0 0.0
  %494 = vmatmul.mubr.f32.gmra.mxu0 %v425
  %v495 = vpop.f32.mrf.mxu0
  %v496 = vadd.f32 %v417, %v495
  %v497 = vpop.f32.mrf.mxu0
  %498 = vmatprep.mubr.f32.mxu0 0.0
  %499 = vmatmul.mubr.f32.gmra.mxu0 %v427
  %v500 = vpop.f32.mrf.mxu0
  %v501 = vadd.f32 %v417, %v500
  %v502 = vpop.f32.mrf.mxu0
  %503 = vdwg.mxu0
  %v504 = vmul.f32 %v496, %v496
  %v505 = vmul.f32 %v501, %v501
  %vm506 = vcmask 785408
  %v508 = vsel %vm506, %v504, 0
  %v511 = vsel %vm506, %v505, 0
  %513 = vmatprep.subr.mxu0 0.0
  %514 = vmatpush1.msra.mxu0 0.0
  %515 = vmatprep.subr.mxu0 0.0
  %516 = vmatpush1.msra.mxu0 0.0
  %517 = vmatprep.subr.mxu0 0.0
  %518 = vmatpush1.msra.mxu0 0.0
  %519 = vmatprep.subr.mxu0 0.0
  %520 = vmatpush1.msra.mxu0 0.0
  %521 = vmatprep.subr.mxu0 0.0
  %522 = vmatpush1.msra.mxu0 %v267
  %523 = vmatprep.subr.mxu0 0.0
  %524 = vmatpush1.msra.mxu0 %v266
  %525 = vmatprep.subr.mxu0 0.0
  %526 = vmatpush1.msra.mxu0 %v265
  %527 = vmatprep.subr.mxu0 0.0
  %528 = vmatpush1.msra.mxu0 %v264
  %529 = vmatprep.subr.mxu0 0.0
  %530 = vmatpush1.msra.mxu0 %v263
  %531 = vmatprep.subr.mxu0 0.0
  %532 = vmatpush1.msra.mxu0 %v262
  %533 = vmatprep.subr.mxu0 0.0
  %534 = vmatpush1.msra.mxu0 %v261
  %535 = vmatprep.subr.mxu0 0.0
  %536 = vmatpush1.msra.mxu0 %v260
  %537 = vmatprep.subr.mxu0 0.0
  %538 = vmatpush1.msra.mxu0 %v259
  %539 = vmatprep.subr.mxu0 0.0
  %540 = vmatpush1.msra.mxu0 %v258
  %541 = vmatprep.subr.mxu0 0.0
  %542 = vmatpush1.msra.mxu0 %v257
  %543 = vmatprep.subr.mxu0 0.0
  %544 = vmatpush1.msra.mxu0 %v256
  %545 = vmatprep.subr.mxu0 0.0
  %546 = vmatpush2.msra.mxu0 0.0
  %547 = vmatprep.subr.mxu0 0.0
  %548 = vmatpush2.msra.mxu0 0.0
  %549 = vmatprep.subr.mxu0 0.0
  %550 = vmatpush2.msra.mxu0 0.0
  %551 = vmatprep.subr.mxu0 0.0
  %552 = vmatpush2.msra.mxu0 0.0
  %553 = vmatprep.subr.mxu0 0.0
  %554 = vmatpush2.msra.mxu0 0.0
  %555 = vmatprep.subr.mxu0 0.0
  %556 = vmatpush2.msra.mxu0 0.0
  %557 = vmatprep.subr.mxu0 0.0
  %558 = vmatpush2.msra.mxu0 0.0
  %559 = vmatprep.subr.mxu0 0.0
  %560 = vmatpush2.msra.mxu0 0.0
  %561 = vmatprep.subr.mxu0 0.0
  %562 = vmatpush2.msra.mxu0 0.0
  %563 = vmatprep.subr.mxu0 0.0
  %564 = vmatpush2.msra.mxu0 0.0
  %565 = vmatprep.subr.mxu0 0.0
  %566 = vmatpush2.msra.mxu0 0.0
  %567 = vmatprep.subr.mxu0 0.0
  %568 = vmatpush2.msra.mxu0 0.0
  %569 = vmatprep.subr.mxu0 0.0
  %570 = vmatpush2.msra.mxu0 0.0
  %571 = vmatprep.subr.mxu0 0.0
  %572 = vmatpush2.msra.mxu0 0.0
  %573 = vmatprep.subr.mxu0 0.0
  %574 = vmatpush2.msra.mxu0 0.0
  %575 = vmatprep.subr.mxu0 0.0
  %576 = vmatpush2.msra.mxu0 0.0
  %577 = vmatprep.mubr.f32.mxu0 0.0
  %578 = vmatmul.mubr.f32.gmra.mxu0 %v508
  %v579 = vpop.f32.mrf.mxu0
  %v580 = vadd.f32 1e-06, %v579
  %v581 = vpop.f32.mrf.mxu0
  %582 = vmatprep.mubr.f32.mxu0 0.0
  %583 = vmatmul.mubr.f32.gmra.mxu0 %v511
  %v584 = vpop.f32.mrf.mxu0
  %v585 = vadd.f32 1e-06, %v584
  %v586 = vpop.f32.mrf.mxu0
  %587 = vdwg.mxu0
  %v588 = vrsqrt.pop %v580
  %v589 = vrsqrt.pop %v585
  %vm590 = vcmp.gt.f32.partialorder %v268, 0.5
  %v592 = vlaneseq
  %v593 = vshrl.u32 %v592, 7
  %v594 = vsub.s32 0, %v593
  %v595 = vrot.slane %v278, %v594
  %v597 = vmul.f32 %v588, %v595
  %v598 = vmul.f32 %v589, %v595
  %v599 = vsel %vm590, 1, 0
  %v600 = vlaneseq
  %v601 = vshrl.u32 %v600, 7
  %v602 = vsub.s32 0, %v601
  %v603 = vrot.slane %v599, %v602
  %vm604 = vcmp.eq.s32.totalorder %v603, 1
  %v605 = vsel %vm604, %v597, 1.0
  %v606 = vsel %vm604, %v598, 1.0
  %v607 = vmul.f32 %v496, %v605
  %v608 = vmul.f32 %v501, %v606
  %609 = vst.msk [vmem:[%s15] sm:$0xff] %vm506, %v607
  %610 = vst.msk [vmem:[%s15 + $0x8] sm:$0xff] %vm506, %v608
  %v611 = vld [vmem:[%s5] sm:$0xff]
  %v612 = vld [vmem:[%s6] sm:$0xff]
  %v613 = vld [vmem:[%s9] sm:$0xff]
  %v614 = vld [vmem:[%s9 + $0x8] sm:$0xff]
  %v615 = vld [vmem:[%s9 + $0x10] sm:$0xff]
  %v616 = vld [vmem:[%s9 + $0x18] sm:$0xff]
  %v617 = vld [vmem:[%s10] sm:$0x1]
  %v618 = vld [vmem:[%s14] sm:$0x1]
  %619 = vrot.lane.b32.xlu0 %v163, 64
  %v620 = vpop.permute.xlu0 %619
  %v622 = vsel %vm279, %v612, 0
  %v624 = vsel %vm286, %v620, 0
  %626 = vmatprep.subr.mxu0 0.0
  %627 = vmatpush1.msra.mxu0 0.0
  %628 = vmatprep.subr.mxu0 0.0
  %629 = vmatpush1.msra.mxu0 0.0
  %630 = vmatprep.subr.mxu0 0.0
  %631 = vmatpush1.msra.mxu0 0.0
  %632 = vmatprep.subr.mxu0 0.0
  %633 = vmatpush1.msra.mxu0 0.0
  %634 = vmatprep.subr.mxu0 0.0
  %635 = vmatpush1.msra.mxu0 0.0
  %636 = vmatprep.subr.mxu0 0.0
  %637 = vmatpush1.msra.mxu0 0.0
  %638 = vmatprep.subr.mxu0 0.0
  %639 = vmatpush1.msra.mxu0 0.0
  %640 = vmatprep.subr.mxu0 0.0
  %641 = vmatpush1.msra.mxu0 0.0
  %642 = vmatprep.subr.mxu0 0.0
  %643 = vmatpush1.msra.mxu0 0.0
  %644 = vmatprep.subr.mxu0 0.0
  %645 = vmatpush1.msra.mxu0 0.0
  %646 = vmatprep.subr.mxu0 0.0
  %647 = vmatpush1.msra.mxu0 0.0
  %648 = vmatprep.subr.mxu0 0.0
  %649 = vmatpush1.msra.mxu0 0.0
  %650 = vmatprep.subr.mxu0 0.0
  %651 = vmatpush1.msra.mxu0 0.0
  %652 = vmatprep.subr.mxu0 0.0
  %653 = vmatpush1.msra.mxu0 0.0
  %654 = vmatprep.subr.mxu0 0.0
  %655 = vmatpush1.msra.mxu0 0.0
  %656 = vmatprep.subr.mxu0 0.0
  %657 = vmatpush1.msra.mxu0 %v624
  %658 = vmatprep.subr.mxu0 0.0
  %659 = vmatpush2.msra.mxu0 0.0
  %660 = vmatprep.subr.mxu0 0.0
  %661 = vmatpush2.msra.mxu0 0.0
  %662 = vmatprep.subr.mxu0 0.0
  %663 = vmatpush2.msra.mxu0 0.0
  %664 = vmatprep.subr.mxu0 0.0
  %665 = vmatpush2.msra.mxu0 0.0
  %666 = vmatprep.subr.mxu0 0.0
  %667 = vmatpush2.msra.mxu0 0.0
  %668 = vmatprep.subr.mxu0 0.0
  %669 = vmatpush2.msra.mxu0 0.0
  %670 = vmatprep.subr.mxu0 0.0
  %671 = vmatpush2.msra.mxu0 0.0
  %672 = vmatprep.subr.mxu0 0.0
  %673 = vmatpush2.msra.mxu0 0.0
  %674 = vmatprep.subr.mxu0 0.0
  %675 = vmatpush2.msra.mxu0 0.0
  %676 = vmatprep.subr.mxu0 0.0
  %677 = vmatpush2.msra.mxu0 0.0
  %678 = vmatprep.subr.mxu0 0.0
  %679 = vmatpush2.msra.mxu0 0.0
  %680 = vmatprep.subr.mxu0 0.0
  %681 = vmatpush2.msra.mxu0 0.0
  %682 = vmatprep.subr.mxu0 0.0
  %683 = vmatpush2.msra.mxu0 0.0
  %684 = vmatprep.subr.mxu0 0.0
  %685 = vmatpush2.msra.mxu0 0.0
  %686 = vmatprep.subr.mxu0 0.0
  %687 = vmatpush2.msra.mxu0 0.0
  %688 = vmatprep.subr.mxu0 0.0
  %689 = vmatpush2.msra.mxu0 0.0
  %690 = vmatprep.mubr.f32.mxu0 0.0
  %691 = vmatmul.mubr.f32.gmra.mxu0 %v622
  %v692 = vpop.f32.mrf.mxu0
  %v693 = vadd.f32 0.0, %v692
  %v694 = vpop.f32.mrf.mxu0
  %695 = vdwg.mxu0
  %v696 = vadd.f32 %v693, 1.0
  %v697 = vsel %vm90, %v611, 0.0
  %698 = vadd.xlane.f32.xlu0 %v697
  %v699 = vpop.xlane.xlu0 %698
  %v700 = vmul.f32 %v699, %v372
  %v701 = vsub.f32 %v611, %v700
  %v702 = vmul.f32 %v701, %v701
  %v703 = vsel %vm90, %v702, 0.0
  %704 = vadd.xlane.f32.xlu0 %v703
  %v705 = vpop.xlane.xlu0 %704
  %v706 = vmul.f32 %v705, %v372
  %v707 = vadd.f32 %v706, 1e-06
  %v708 = vrsqrt.pop %v707
  %v709 = vmul.f32 %v701, %v708
  %711 = vrot.lane.b32.xlu0 %v709, 32
  %v712 = vpop.permute.xlu0 %711
  %v714 = vmul.f32 %v696, %v712
  %716 = vrot.lane.b32.xlu0 %v693, 32
  %v717 = vpop.permute.xlu0 %716
  %v719 = vadd.f32 %v714, %v717
  %v721 = vlaneseq
  %v722 = vshrl.u32 %v721, 7
  %v723 = vsub.s32 0, %v722
  %v724 = vrot.slane %v617, %v723
  %727 = vrot.lane.b32.xlu0 %v719, 96
  %v728 = vpop.permute.xlu0 %727
  %v729 = vsel %vm90, %v728, 0
  %731 = vmatprep.subr.mxu0 0.0
  %732 = vmatpush1.msra.mxu0 0.0
  %733 = vmatprep.subr.mxu0 0.0
  %734 = vmatpush1.msra.mxu0 0.0
  %735 = vmatprep.subr.mxu0 0.0
  %736 = vmatpush1.msra.mxu0 0.0
  %737 = vmatprep.subr.mxu0 0.0
  %738 = vmatpush1.msra.mxu0 0.0
  %739 = vmatprep.subr.mxu0 0.0
  %740 = vmatpush1.msra.mxu0 0.0
  %741 = vmatprep.subr.mxu0 0.0
  %742 = vmatpush1.msra.mxu0 0.0
  %743 = vmatprep.subr.mxu0 0.0
  %744 = vmatpush1.msra.mxu0 0.0
  %745 = vmatprep.subr.mxu0 0.0
  %746 = vmatpush1.msra.mxu0 0.0
  %747 = vmatprep.subr.mxu0 0.0
  %748 = vmatpush1.msra.mxu0 0.0
  %749 = vmatprep.subr.mxu0 0.0
  %750 = vmatpush1.msra.mxu0 0.0
  %751 = vmatprep.subr.mxu0 0.0
  %752 = vmatpush1.msra.mxu0 0.0
  %753 = vmatprep.subr.mxu0 0.0
  %754 = vmatpush1.msra.mxu0 0.0
  %755 = vmatprep.subr.mxu0 0.0
  %756 = vmatpush1.msra.mxu0 %v616
  %757 = vmatprep.subr.mxu0 0.0
  %758 = vmatpush1.msra.mxu0 %v615
  %759 = vmatprep.subr.mxu0 0.0
  %760 = vmatpush1.msra.mxu0 %v614
  %761 = vmatprep.subr.mxu0 0.0
  %762 = vmatpush1.msra.mxu0 %v613
  %763 = vmatprep.subr.mxu0 0.0
  %764 = vmatpush2.msra.mxu0 0.0
  %765 = vmatprep.subr.mxu0 0.0
  %766 = vmatpush2.msra.mxu0 0.0
  %767 = vmatprep.subr.mxu0 0.0
  %768 = vmatpush2.msra.mxu0 0.0
  %769 = vmatprep.subr.mxu0 0.0
  %770 = vmatpush2.msra.mxu0 0.0
  %771 = vmatprep.subr.mxu0 0.0
  %772 = vmatpush2.msra.mxu0 0.0
  %773 = vmatprep.subr.mxu0 0.0
  %774 = vmatpush2.msra.mxu0 0.0
  %775 = vmatprep.subr.mxu0 0.0
  %776 = vmatpush2.msra.mxu0 0.0
  %777 = vmatprep.subr.mxu0 0.0
  %778 = vmatpush2.msra.mxu0 0.0
  %779 = vmatprep.subr.mxu0 0.0
  %780 = vmatpush2.msra.mxu0 0.0
  %781 = vmatprep.subr.mxu0 0.0
  %782 = vmatpush2.msra.mxu0 0.0
  %783 = vmatprep.subr.mxu0 0.0
  %784 = vmatpush2.msra.mxu0 0.0
  %785 = vmatprep.subr.mxu0 0.0
  %786 = vmatpush2.msra.mxu0 0.0
  %787 = vmatprep.subr.mxu0 0.0
  %788 = vmatpush2.msra.mxu0 0.0
  %789 = vmatprep.subr.mxu0 0.0
  %790 = vmatpush2.msra.mxu0 0.0
  %791 = vmatprep.subr.mxu0 0.0
  %792 = vmatpush2.msra.mxu0 0.0
  %793 = vmatprep.subr.mxu0 0.0
  %794 = vmatpush2.msra.mxu0 0.0
  %795 = vmatprep.mubr.f32.mxu0 0.0
  %796 = vmatmul.mubr.f32.gmra.mxu0 %v729
  %v797 = vpop.f32.mrf.mxu0
  %v798 = vadd.f32 %v724, %v797
  %v799 = vpop.f32.mrf.mxu0
  %800 = vdwg.mxu0
  %v801 = vmul.f32 %v798, %v798
  %v803 = vsel %vm506, %v801, 0
  %805 = vmatprep.subr.mxu0 0.0
  %806 = vmatpush1.msra.mxu0 0.0
  %807 = vmatprep.subr.mxu0 0.0
  %808 = vmatpush1.msra.mxu0 0.0
  %809 = vmatprep.subr.mxu0 0.0
  %810 = vmatpush1.msra.mxu0 0.0
  %811 = vmatprep.subr.mxu0 0.0
  %812 = vmatpush1.msra.mxu0 0.0
  %813 = vmatprep.subr.mxu0 0.0
  %814 = vmatpush1.msra.mxu0 %v267
  %815 = vmatprep.subr.mxu0 0.0
  %816 = vmatpush1.msra.mxu0 %v266
  %817 = vmatprep.subr.mxu0 0.0
  %818 = vmatpush1.msra.mxu0 %v265
  %819 = vmatprep.subr.mxu0 0.0
  %820 = vmatpush1.msra.mxu0 %v264
  %821 = vmatprep.subr.mxu0 0.0
  %822 = vmatpush1.msra.mxu0 %v263
  %823 = vmatprep.subr.mxu0 0.0
  %824 = vmatpush1.msra.mxu0 %v262
  %825 = vmatprep.subr.mxu0 0.0
  %826 = vmatpush1.msra.mxu0 %v261
  %827 = vmatprep.subr.mxu0 0.0
  %828 = vmatpush1.msra.mxu0 %v260
  %829 = vmatprep.subr.mxu0 0.0
  %830 = vmatpush1.msra.mxu0 %v259
  %831 = vmatprep.subr.mxu0 0.0
  %832 = vmatpush1.msra.mxu0 %v258
  %833 = vmatprep.subr.mxu0 0.0
  %834 = vmatpush1.msra.mxu0 %v257
  %835 = vmatprep.subr.mxu0 0.0
  %836 = vmatpush1.msra.mxu0 %v256
  %837 = vmatprep.subr.mxu0 0.0
  %838 = vmatpush2.msra.mxu0 0.0
  %839 = vmatprep.subr.mxu0 0.0
  %840 = vmatpush2.msra.mxu0 0.0
  %841 = vmatprep.subr.mxu0 0.0
  %842 = vmatpush2.msra.mxu0 0.0
  %843 = vmatprep.subr.mxu0 0.0
  %844 = vmatpush2.msra.mxu0 0.0
  %845 = vmatprep.subr.mxu0 0.0
  %846 = vmatpush2.msra.mxu0 0.0
  %847 = vmatprep.subr.mxu0 0.0
  %848 = vmatpush2.msra.mxu0 0.0
  %849 = vmatprep.subr.mxu0 0.0
  %850 = vmatpush2.msra.mxu0 0.0
  %851 = vmatprep.subr.mxu0 0.0
  %852 = vmatpush2.msra.mxu0 0.0
  %853 = vmatprep.subr.mxu0 0.0
  %854 = vmatpush2.msra.mxu0 0.0
  %855 = vmatprep.subr.mxu0 0.0
  %856 = vmatpush2.msra.mxu0 0.0
  %857 = vmatprep.subr.mxu0 0.0
  %858 = vmatpush2.msra.mxu0 0.0
  %859 = vmatprep.subr.mxu0 0.0
  %860 = vmatpush2.msra.mxu0 0.0
  %861 = vmatprep.subr.mxu0 0.0
  %862 = vmatpush2.msra.mxu0 0.0
  %863 = vmatprep.subr.mxu0 0.0
  %864 = vmatpush2.msra.mxu0 0.0
  %865 = vmatprep.subr.mxu0 0.0
  %866 = vmatpush2.msra.mxu0 0.0
  %867 = vmatprep.subr.mxu0 0.0
  %868 = vmatpush2.msra.mxu0 0.0
  %869 = vmatprep.mubr.f32.mxu0 0.0
  %870 = vmatmul.mubr.f32.gmra.mxu0 %v803
  %v871 = vpop.f32.mrf.mxu0
  %v872 = vadd.f32 1e-06, %v871
  %v873 = vpop.f32.mrf.mxu0
  %874 = vdwg.mxu0
  %v875 = vrsqrt.pop %v872
  %v877 = vlaneseq
  %v878 = vshrl.u32 %v877, 7
  %v879 = vsub.s32 0, %v878
  %v880 = vrot.slane %v618, %v879
  %v882 = vmul.f32 %v875, %v880
  %v883 = vsel %vm604, %v882, 1.0
  %v884 = vmul.f32 %v798, %v883
  %885 = vst.msk [vmem:[%s16] sm:$0xff] %vm506, %v884
  // Predicated region
  $region62: #{flux_forward.9} parent=0 // pred_check
    _
  $region63: #{flux_forward.9} parent=0 // pred_check_branch
    %887 = sbr.rel (0) target = $region65
  $region64: #{flux_forward.9} parent=0 // pred_region
    _
  $region65: #{flux_forward.9} parent=0 // pred_fallthru
    _
  // Predicated region
  $region66: #{flux_forward.9} parent=0 // pred_check
    _
  $region67: #{flux_forward.9} parent=0 // pred_check_branch
    %889 = sbr.rel (0) target = $region69
  $region68: #{flux_forward.9} parent=0 // pred_region
    _
  $region69: #{flux_forward.9} parent=0 // pred_fallthru
    _
  // Predicated region
  $region70: #{flux_forward.9} parent=0 // pred_check
    _
  $region71: #{flux_forward.9} parent=0 // pred_check_branch
    %891 = sbr.rel (0) target = $region73
  $region72: #{flux_forward.9} parent=0 // pred_region
    _
  $region73: #{flux_forward.9} parent=0 // pred_fallthru
    _
  // Predicated region
  $region74: #{flux_forward.9} parent=0 // pred_check
    _
  $region75: #{flux_forward.9} parent=0 // pred_check_branch
    %893 = sbr.rel (0) target = $region77
  $region76: #{flux_forward.9} parent=0 // pred_region
    _
  $region77: #{flux_forward.9} parent=0 // pred_fallthru
    _
  // Predicated region
  $region78: #{flux_forward.9} parent=0 // pred_check
    _
  $region79: #{flux_forward.9} parent=0 // pred_check_branch
    %895 = sbr.rel (0) target = $region81
  $region80: #{flux_forward.9} parent=0 // pred_region
    _
  $region81: #{flux_forward.9} parent=0 // pred_fallthru
    _
  // Predicated region
  $region82: #{flux_forward.9} parent=0 // pred_check
    _
  $region83: #{flux_forward.9} parent=0 // pred_check_branch
    %897 = sbr.rel (0) target = $region85
  $region84: #{flux_forward.9} parent=0 // pred_region
    _
  $region85: #{flux_forward.9} parent=0 // pred_fallthru
    _

// kernel: flux_forward.10
$region0: #{flux_forward.10}
  #allocation0 [shape = 'u32[]', space=smem, size = 0x4, offset = 0x4, fixed_abs, tag = 'smem constant byte address 0x4 - core index']
  #allocation1 [shape = 'u32[144,128]{1,0:T(1,128)}', space=vmem, size = 0x12000, scoped, tag = 'internal scratch']
  %s0 = inlined_call_operand.vmem [shape: f32[4,12,16], index: 0, kind: input, shape index: {}]
  %s1 = inlined_call_operand.vmem [shape: f32[4,12,16], index: 1, kind: input, shape index: {}]
  %s2 = inlined_call_operand.vmem [shape: f32[4,12,16], index: 2, kind: input, shape index: {}]
  %s3 = inlined_call_operand.vmem [shape: f32[4,1,12], index: 3, kind: input, shape index: {}]
  %s4 = inlined_call_operand.vmem [shape: f32[2,12,32], index: 4, kind: output, shape index: {}]
  %s5 = sld [smem:[#allocation0]]
  $region26: #{flux_forward.10} parent=0
    _
  %s7 = ssub.s32 1, %s5
  %s8 = scalar_select 0, %s7, %s5
  // Predicated region
  $region2: #{flux_forward.10} parent=0 // pred_check
    _
  $region3: #{flux_forward.10} parent=0 // pred_check_branch
    %10 = sbr.rel (0) target = $region5
  $region4: #{flux_forward.10} parent=0 // pred_region
    _
  $region5: #{flux_forward.10} parent=0 // pred_fallthru
    _
  // Predicated region
  $region6: #{flux_forward.10} parent=0 // pred_check
    _
  $region7: #{flux_forward.10} parent=0 // pred_check_branch
    %12 = sbr.rel (0) target = $region9
  $region8: #{flux_forward.10} parent=0 // pred_region
    _
  $region9: #{flux_forward.10} parent=0 // pred_fallthru
    _
  // Predicated region
  $region10: #{flux_forward.10} parent=0 // pred_check
    _
  $region11: #{flux_forward.10} parent=0 // pred_check_branch
    %14 = sbr.rel (0) target = $region13
  $region12: #{flux_forward.10} parent=0 // pred_region
    _
  $region13: #{flux_forward.10} parent=0 // pred_fallthru
    _
  // Predicated region
  $region14: #{flux_forward.10} parent=0 // pred_check
    _
  $region15: #{flux_forward.10} parent=0 // pred_check_branch
    %16 = sbr.rel (0) target = $region17
  $region16: #{flux_forward.10} parent=0 // pred_region
    _
  $region17: #{flux_forward.10} parent=0 // pred_fallthru
    _
  %v17 = vld [vmem:[%s0] sm:$0xff]
  %v18 = vld [vmem:[%s0 + $0x8] sm:$0xf]
  %v19 = vld [vmem:[%s0 + $0x10] sm:$0xff]
  %v20 = vld [vmem:[%s0 + $0x18] sm:$0xf]
  %v21 = vld [vmem:[%s0 + $0x20] sm:$0xff]
  %v22 = vld [vmem:[%s0 + $0x28] sm:$0xf]
  %v23 = vld [vmem:[%s0 + $0x30] sm:$0xff]
  %v24 = vld [vmem:[%s0 + $0x38] sm:$0xf]
  %v25 = vld [vmem:[%s1] sm:$0xff]
  %v26 = vld [vmem:[%s1 + $0x8] sm:$0xf]
  %v27 = vld [vmem:[%s1 + $0x10] sm:$0xff]
  %v28 = vld [vmem:[%s1 + $0x18] sm:$0xf]
  %v29 = vld [vmem:[%s1 + $0x20] sm:$0xff]
  %v30 = vld [vmem:[%s1 + $0x28] sm:$0xf]
  %v31 = vld [vmem:[%s1 + $0x30] sm:$0xff]
  %v32 = vld [vmem:[%s1 + $0x38] sm:$0xf]
  %v33 = vld [vmem:[%s2] sm:$0xff]
  %v34 = vld [vmem:[%s2 + $0x8] sm:$0xf]
  %v35 = vld [vmem:[%s2 + $0x10] sm:$0xff]
  %v36 = vld [vmem:[%s2 + $0x18] sm:$0xf]
  %v37 = vld [vmem:[%s2 + $0x20] sm:$0xff]
  %v38 = vld [vmem:[%s2 + $0x28] sm:$0xf]
  %v39 = vld [vmem:[%s2 + $0x30] sm:$0xff]
  %v40 = vld [vmem:[%s2 + $0x38] sm:$0xf]
  %vm41 = vcmask 130048
  %v43 = vsel %vm41, %v17, 0
  %v46 = vsel %vm41, %v18, 0
  %v49 = vsel %vm41, %v25, 0
  %v52 = vsel %vm41, %v26, 0
  %54 = vmatprep.subr.mxu0 0.0
  %55 = vmatpush1.xpose.msra.mxu0 0.0
  %56 = vmatprep.subr.mxu0 0.0
  %57 = vmatpush1.xpose.msra.mxu0 0.0
  %58 = vmatprep.subr.mxu0 0.0
  %59 = vmatpush1.xpose.msra.mxu0 0.0
  %60 = vmatprep.subr.mxu0 0.0
  %61 = vmatpush1.xpose.msra.mxu0 0.0
  %62 = vmatprep.subr.mxu0 0.0
  %63 = vmatpush1.xpose.msra.mxu0 0.0
  %64 = vmatprep.subr.mxu0 0.0
  %65 = vmatpush1.xpose.msra.mxu0 0.0
  %66 = vmatprep.subr.mxu0 0.0
  %67 = vmatpush1.xpose.msra.mxu0 0.0
  %68 = vmatprep.subr.mxu0 0.0
  %69 = vmatpush1.xpose.msra.mxu0 0.0
  %70 = vmatprep.subr.mxu0 0.0
  %71 = vmatpush1.xpose.msra.mxu0 0.0
  %72 = vmatprep.subr.mxu0 0.0
  %73 = vmatpush1.xpose.msra.mxu0 0.0
  %74 = vmatprep.subr.mxu0 0.0
  %75 = vmatpush1.xpose.msra.mxu0 0.0
  %76 = vmatprep.subr.mxu0 0.0
  %77 = vmatpush1.xpose.msra.mxu0 0.0
  %78 = vmatprep.subr.mxu0 0.0
  %79 = vmatpush1.xpose.msra.mxu0 0.0
  %80 = vmatprep.subr.mxu0 0.0
  %81 = vmatpush1.xpose.msra.mxu0 0.0
  %82 = vmatprep.subr.mxu0 0.0
  %83 = vmatpush1.xpose.msra.mxu0 %v52
  %84 = vmatprep.subr.mxu0 0.0
  %85 = vmatpush1.xpose.msra.mxu0 %v49
  %86 = vmatprep.subr.mxu0 0.0
  %87 = vmatpush2.xpose.msra.mxu0 0.0
  %88 = vmatprep.subr.mxu0 0.0
  %89 = vmatpush2.xpose.msra.mxu0 0.0
  %90 = vmatprep.subr.mxu0 0.0
  %91 = vmatpush2.xpose.msra.mxu0 0.0
  %92 = vmatprep.subr.mxu0 0.0
  %93 = vmatpush2.xpose.msra.mxu0 0.0
  %94 = vmatprep.subr.mxu0 0.0
  %95 = vmatpush2.xpose.msra.mxu0 0.0
  %96 = vmatprep.subr.mxu0 0.0
  %97 = vmatpush2.xpose.msra.mxu0 0.0
  %98 = vmatprep.subr.mxu0 0.0
  %99 = vmatpush2.xpose.msra.mxu0 0.0
  %100 = vmatprep.subr.mxu0 0.0
  %101 = vmatpush2.xpose.msra.mxu0 0.0
  %102 = vmatprep.subr.mxu0 0.0
  %103 = vmatpush2.xpose.msra.mxu0 0.0
  %104 = vmatprep.subr.mxu0 0.0
  %105 = vmatpush2.xpose.msra.mxu0 0.0
  %106 = vmatprep.subr.mxu0 0.0
  %107 = vmatpush2.xpose.msra.mxu0 0.0
  %108 = vmatprep.subr.mxu0 0.0
  %109 = vmatpush2.xpose.msra.mxu0 0.0
  %110 = vmatprep.subr.mxu0 0.0
  %111 = vmatpush2.xpose.msra.mxu0 0.0
  %112 = vmatprep.subr.mxu0 0.0
  %113 = vmatpush2.xpose.msra.mxu0 0.0
  %114 = vmatprep.subr.mxu0 0.0
  %115 = vmatpush2.xpose.msra.mxu0 0.0
  %116 = vmatprep.subr.mxu0 0.0
  %117 = vmatpush2.xpose.msra.mxu0 0.0
  %118 = vmatprep.mubr.f32.mxu0 0.0
  %119 = vmatmul.mubr.f32.gmra.mxu0 %v43
  %v120 = vpop.f32.mrf.mxu0
  %v121 = vadd.f32 0.0, %v120
  %v122 = vpop.f32.mrf.mxu0
  %123 = vmatprep.mubr.f32.mxu0 0.0
  %124 = vmatmul.mubr.f32.gmra.mxu0 %v46
  %v125 = vpop.f32.mrf.mxu0
  %v126 = vadd.f32 0.0, %v125
  %v127 = vpop.f32.mrf.mxu0
  %128 = vdwg.mxu0
  %v130 = vsel %vm41, %v19, 0
  %v133 = vsel %vm41, %v20, 0
  %v136 = vsel %vm41, %v27, 0
  %v139 = vsel %vm41, %v28, 0
  %141 = vmatprep.subr.mxu0 0.0
  %142 = vmatpush1.xpose.msra.mxu0 0.0
  %143 = vmatprep.subr.mxu0 0.0
  %144 = vmatpush1.xpose.msra.mxu0 0.0
  %145 = vmatprep.subr.mxu0 0.0
  %146 = vmatpush1.xpose.msra.mxu0 0.0
  %147 = vmatprep.subr.mxu0 0.0
  %148 = vmatpush1.xpose.msra.mxu0 0.0
  %149 = vmatprep.subr.mxu0 0.0
  %150 = vmatpush1.xpose.msra.mxu0 0.0
  %151 = vmatprep.subr.mxu0 0.0
  %152 = vmatpush1.xpose.msra.mxu0 0.0
  %153 = vmatprep.subr.mxu0 0.0
  %154 = vmatpush1.xpose.msra.mxu0 0.0
  %155 = vmatprep.subr.mxu0 0.0
  %156 = vmatpush1.xpose.msra.mxu0 0.0
  %157 = vmatprep.subr.mxu0 0.0
  %158 = vmatpush1.xpose.msra.mxu0 0.0
  %159 = vmatprep.subr.mxu0 0.0
  %160 = vmatpush1.xpose.msra.mxu0 0.0
  %161 = vmatprep.subr.mxu0 0.0
  %162 = vmatpush1.xpose.msra.mxu0 0.0
  %163 = vmatprep.subr.mxu0 0.0
  %164 = vmatpush1.xpose.msra.mxu0 0.0
  %165 = vmatprep.subr.mxu0 0.0
  %166 = vmatpush1.xpose.msra.mxu0 0.0
  %167 = vmatprep.subr.mxu0 0.0
  %168 = vmatpush1.xpose.msra.mxu0 0.0
  %169 = vmatprep.subr.mxu0 0.0
  %170 = vmatpush1.xpose.msra.mxu0 %v139
  %171 = vmatprep.subr.mxu0 0.0
  %172 = vmatpush1.xpose.msra.mxu0 %v136
  %173 = vmatprep.subr.mxu0 0.0
  %174 = vmatpush2.xpose.msra.mxu0 0.0
  %175 = vmatprep.subr.mxu0 0.0
  %176 = vmatpush2.xpose.msra.mxu0 0.0
  %177 = vmatprep.subr.mxu0 0.0
  %178 = vmatpush2.xpose.msra.mxu0 0.0
  %179 = vmatprep.subr.mxu0 0.0
  %180 = vmatpush2.xpose.msra.mxu0 0.0
  %181 = vmatprep.subr.mxu0 0.0
  %182 = vmatpush2.xpose.msra.mxu0 0.0
  %183 = vmatprep.subr.mxu0 0.0
  %184 = vmatpush2.xpose.msra.mxu0 0.0
  %185 = vmatprep.subr.mxu0 0.0
  %186 = vmatpush2.xpose.msra.mxu0 0.0
  %187 = vmatprep.subr.mxu0 0.0
  %188 = vmatpush2.xpose.msra.mxu0 0.0
  %189 = vmatprep.subr.mxu0 0.0
  %190 = vmatpush2.xpose.msra.mxu0 0.0
  %191 = vmatprep.subr.mxu0 0.0
  %192 = vmatpush2.xpose.msra.mxu0 0.0
  %193 = vmatprep.subr.mxu0 0.0
  %194 = vmatpush2.xpose.msra.mxu0 0.0
  %195 = vmatprep.subr.mxu0 0.0
  %196 = vmatpush2.xpose.msra.mxu0 0.0
  %197 = vmatprep.subr.mxu0 0.0
  %198 = vmatpush2.xpose.msra.mxu0 0.0
  %199 = vmatprep.subr.mxu0 0.0
  %200 = vmatpush2.xpose.msra.mxu0 0.0
  %201 = vmatprep.subr.mxu0 0.0
  %202 = vmatpush2.xpose.msra.mxu0 0.0
  %203 = vmatprep.subr.mxu0 0.0
  %204 = vmatpush2.xpose.msra.mxu0 0.0
  %205 = vmatprep.mubr.f32.mxu0 0.0
  %206 = vmatmul.mubr.f32.gmra.mxu0 %v130
  %v207 = vpop.f32.mrf.mxu0
  %v208 = vadd.f32 0.0, %v207
  %v209 = vpop.f32.mrf.mxu0
  %210 = vmatprep.mubr.f32.mxu0 0.0
  %211 = vmatmul.mubr.f32.gmra.mxu0 %v133
  %v212 = vpop.f32.mrf.mxu0
  %v213 = vadd.f32 0.0, %v212
  %v214 = vpop.f32.mrf.mxu0
  %215 = vdwg.mxu0
  %v217 = vsel %vm41, %v21, 0
  %v220 = vsel %vm41, %v22, 0
  %v223 = vsel %vm41, %v29, 0
  %v226 = vsel %vm41, %v30, 0
  %228 = vmatprep.subr.mxu0 0.0
  %229 = vmatpush1.xpose.msra.mxu0 0.0
  %230 = vmatprep.subr.mxu0 0.0
  %231 = vmatpush1.xpose.msra.mxu0 0.0
  %232 = vmatprep.subr.mxu0 0.0
  %233 = vmatpush1.xpose.msra.mxu0 0.0
  %234 = vmatprep.subr.mxu0 0.0
  %235 = vmatpush1.xpose.msra.mxu0 0.0
  %236 = vmatprep.subr.mxu0 0.0
  %237 = vmatpush1.xpose.msra.mxu0 0.0
  %238 = vmatprep.subr.mxu0 0.0
  %239 = vmatpush1.xpose.msra.mxu0 0.0
  %240 = vmatprep.subr.mxu0 0.0
  %241 = vmatpush1.xpose.msra.mxu0 0.0
  %242 = vmatprep.subr.mxu0 0.0
  %243 = vmatpush1.xpose.msra.mxu0 0.0
  %244 = vmatprep.subr.mxu0 0.0
  %245 = vmatpush1.xpose.msra.mxu0 0.0
  %246 = vmatprep.subr.mxu0 0.0
  %247 = vmatpush1.xpose.msra.mxu0 0.0
  %248 = vmatprep.subr.mxu0 0.0
  %249 = vmatpush1.xpose.msra.mxu0 0.0
  %250 = vmatprep.subr.mxu0 0.0
  %251 = vmatpush1.xpose.msra.mxu0 0.0
  %252 = vmatprep.subr.mxu0 0.0
  %253 = vmatpush1.xpose.msra.mxu0 0.0
  %254 = vmatprep.subr.mxu0 0.0
  %255 = vmatpush1.xpose.msra.mxu0 0.0
  %256 = vmatprep.subr.mxu0 0.0
  %257 = vmatpush1.xpose.msra.mxu0 %v226
  %258 = vmatprep.subr.mxu0 0.0
  %259 = vmatpush1.xpose.msra.mxu0 %v223
  %260 = vmatprep.subr.mxu0 0.0
  %261 = vmatpush2.xpose.msra.mxu0 0.0
  %262 = vmatprep.subr.mxu0 0.0
  %263 = vmatpush2.xpose.msra.mxu0 0.0
  %264 = vmatprep.subr.mxu0 0.0
  %265 = vmatpush2.xpose.msra.mxu0 0.0
  %266 = vmatprep.subr.mxu0 0.0
  %267 = vmatpush2.xpose.msra.mxu0 0.0
  %268 = vmatprep.subr.mxu0 0.0
  %269 = vmatpush2.xpose.msra.mxu0 0.0
  %270 = vmatprep.subr.mxu0 0.0
  %271 = vmatpush2.xpose.msra.mxu0 0.0
  %272 = vmatprep.subr.mxu0 0.0
  %273 = vmatpush2.xpose.msra.mxu0 0.0
  %274 = vmatprep.subr.mxu0 0.0
  %275 = vmatpush2.xpose.msra.mxu0 0.0
  %276 = vmatprep.subr.mxu0 0.0
  %277 = vmatpush2.xpose.msra.mxu0 0.0
  %278 = vmatprep.subr.mxu0 0.0
  %279 = vmatpush2.xpose.msra.mxu0 0.0
  %280 = vmatprep.subr.mxu0 0.0
  %281 = vmatpush2.xpose.msra.mxu0 0.0
  %282 = vmatprep.subr.mxu0 0.0
  %283 = vmatpush2.xpose.msra.mxu0 0.0
  %284 = vmatprep.subr.mxu0 0.0
  %285 = vmatpush2.xpose.msra.mxu0 0.0
  %286 = vmatprep.subr.mxu0 0.0
  %287 = vmatpush2.xpose.msra.mxu0 0.0
  %288 = vmatprep.subr.mxu0 0.0
  %289 = vmatpush2.xpose.msra.mxu0 0.0
  %290 = vmatprep.subr.mxu0 0.0
  %291 = vmatpush2.xpose.msra.mxu0 0.0
  %292 = vmatprep.mubr.f32.mxu0 0.0
  %293 = vmatmul.mubr.f32.gmra.mxu0 %v217
  %v294 = vpop.f32.mrf.mxu0
  %v295 = vadd.f32 0.0, %v294
  %v296 = vpop.f32.mrf.mxu0
  %297 = vmatprep.mubr.f32.mxu0 0.0
  %298 = vmatmul.mubr.f32.gmra.mxu0 %v220
  %v299 = vpop.f32.mrf.mxu0
  %v300 = vadd.f32 0.0, %v299
  %v301 = vpop.f32.mrf.mxu0
  %302 = vdwg.mxu0
  %v304 = vsel %vm41, %v23, 0
  %v307 = vsel %vm41, %v24, 0
  %v310 = vsel %vm41, %v31, 0
  %v313 = vsel %vm41, %v32, 0
  %315 = vmatprep.subr.mxu0 0.0
  %316 = vmatpush1.xpose.msra.mxu0 0.0
  %317 = vmatprep.subr.mxu0 0.0
  %318 = vmatpush1.xpose.msra.mxu0 0.0
  %319 = vmatprep.subr.mxu0 0.0
  %320 = vmatpush1.xpose.msra.mxu0 0.0
  %321 = vmatprep.subr.mxu0 0.0
  %322 = vmatpush1.xpose.msra.mxu0 0.0
  %323 = vmatprep.subr.mxu0 0.0
  %324 = vmatpush1.xpose.msra.mxu0 0.0
  %325 = vmatprep.subr.mxu0 0.0
  %326 = vmatpush1.xpose.msra.mxu0 0.0
  %327 = vmatprep.subr.mxu0 0.0
  %328 = vmatpush1.xpose.msra.mxu0 0.0
  %329 = vmatprep.subr.mxu0 0.0
  %330 = vmatpush1.xpose.msra.mxu0 0.0
  %331 = vmatprep.subr.mxu0 0.0
  %332 = vmatpush1.xpose.msra.mxu0 0.0
  %333 = vmatprep.subr.mxu0 0.0
  %334 = vmatpush1.xpose.msra.mxu0 0.0
  %335 = vmatprep.subr.mxu0 0.0
  %336 = vmatpush1.xpose.msra.mxu0 0.0
  %337 = vmatprep.subr.mxu0 0.0
  %338 = vmatpush1.xpose.msra.mxu0 0.0
  %339 = vmatprep.subr.mxu0 0.0
  %340 = vmatpush1.xpose.msra.mxu0 0.0
  %341 = vmatprep.subr.mxu0 0.0
  %342 = vmatpush1.xpose.msra.mxu0 0.0
  %343 = vmatprep.subr.mxu0 0.0
  %344 = vmatpush1.xpose.msra.mxu0 %v313
  %345 = vmatprep.subr.mxu0 0.0
  %346 = vmatpush1.xpose.msra.mxu0 %v310
  %347 = vmatprep.subr.mxu0 0.0
  %348 = vmatpush2.xpose.msra.mxu0 0.0
  %349 = vmatprep.subr.mxu0 0.0
  %350 = vmatpush2.xpose.msra.mxu0 0.0
  %351 = vmatprep.subr.mxu0 0.0
  %352 = vmatpush2.xpose.msra.mxu0 0.0
  %353 = vmatprep.subr.mxu0 0.0
  %354 = vmatpush2.xpose.msra.mxu0 0.0
  %355 = vmatprep.subr.mxu0 0.0
  %356 = vmatpush2.xpose.msra.mxu0 0.0
  %357 = vmatprep.subr.mxu0 0.0
  %358 = vmatpush2.xpose.msra.mxu0 0.0
  %359 = vmatprep.subr.mxu0 0.0
  %360 = vmatpush2.xpose.msra.mxu0 0.0
  %361 = vmatprep.subr.mxu0 0.0
  %362 = vmatpush2.xpose.msra.mxu0 0.0
  %363 = vmatprep.subr.mxu0 0.0
  %364 = vmatpush2.xpose.msra.mxu0 0.0
  %365 = vmatprep.subr.mxu0 0.0
  %366 = vmatpush2.xpose.msra.mxu0 0.0
  %367 = vmatprep.subr.mxu0 0.0
  %368 = vmatpush2.xpose.msra.mxu0 0.0
  %369 = vmatprep.subr.mxu0 0.0
  %370 = vmatpush2.xpose.msra.mxu0 0.0
  %371 = vmatprep.subr.mxu0 0.0
  %372 = vmatpush2.xpose.msra.mxu0 0.0
  %373 = vmatprep.subr.mxu0 0.0
  %374 = vmatpush2.xpose.msra.mxu0 0.0
  %375 = vmatprep.subr.mxu0 0.0
  %376 = vmatpush2.xpose.msra.mxu0 0.0
  %377 = vmatprep.subr.mxu0 0.0
  %378 = vmatpush2.xpose.msra.mxu0 0.0
  %379 = vmatprep.mubr.f32.mxu0 0.0
  %380 = vmatmul.mubr.f32.gmra.mxu0 %v304
  %v381 = vpop.f32.mrf.mxu0
  %v382 = vadd.f32 0.0, %v381
  %v383 = vpop.f32.mrf.mxu0
  %384 = vmatprep.mubr.f32.mxu0 0.0
  %385 = vmatmul.mubr.f32.gmra.mxu0 %v307
  %v386 = vpop.f32.mrf.mxu0
  %v387 = vadd.f32 0.0, %v386
  %v388 = vpop.f32.mrf.mxu0
  %389 = vdwg.mxu0
  %v390 = vmul.f32 %v121, 0.25
  %v391 = vmul.f32 %v126, 0.25
  %v392 = vmul.f32 %v208, 0.25
  %v393 = vmul.f32 %v213, 0.25
  %v394 = vmul.f32 %v295, 0.25
  %v395 = vmul.f32 %v300, 0.25
  %v396 = vmul.f32 %v382, 0.25
  %v397 = vmul.f32 %v387, 0.25
  %v398 = vld [vmem:[%s3] sm:$0x1]
  %v399 = vld [vmem:[%s3 + $0x1] sm:$0x1]
  %v400 = vld [vmem:[%s3 + $0x2] sm:$0x1]
  %v401 = vld [vmem:[%s3 + $0x3] sm:$0x1]
  %vm402 = vcmp.gt.f32.partialorder %v398, 0.5
  %vm403 = vcmp.gt.f32.partialorder %v399, 0.5
  %vm404 = vcmp.gt.f32.partialorder %v400, 0.5
  %vm405 = vcmp.gt.f32.partialorder %v401, 0.5
  %v406 = vsel %vm402, 1, 0
  %v407 = vsel %vm403, 1, 0
  %v408 = vsel %vm404, 1, 0
  %v409 = vsel %vm405, 1, 0
  %v410 = vlaneseq
  %v411 = vshrl.u32 %v410, 7
  %v412 = vsub.s32 0, %v411
  %v413 = vrot.slane %v406, %v412
  %v414 = vlaneseq
  %v415 = vshrl.u32 %v414, 7
  %v416 = vsub.s32 0, %v415
  %v417 = vrot.slane %v407, %v416
  %v418 = vlaneseq
  %v419 = vshrl.u32 %v418, 7
  %v420 = vsub.s32 0, %v419
  %v421 = vrot.slane %v408, %v420
  %v422 = vlaneseq
  %v423 = vshrl.u32 %v422, 7
  %v424 = vsub.s32 0, %v423
  %v425 = vrot.slane %v409, %v424
  %vm426 = vcmp.eq.s32.totalorder %v413, 1
  %vm427 = vcmp.eq.s32.totalorder %v417, 1
  %vm428 = vcmp.eq.s32.totalorder %v421, 1
  %vm429 = vcmp.eq.s32.totalorder %v425, 1
  %v430 = vsel %vm426, %v390, -1e+30
  %v431 = vsel %vm426, %v391, -1e+30
  %v432 = vsel %vm427, %v392, -1e+30
  %v433 = vsel %vm427, %v393, -1e+30
  %v434 = vsel %vm428, %v394, -1e+30
  %v435 = vsel %vm428, %v395, -1e+30
  %v436 = vsel %vm429, %v396, -1e+30
  %v437 = vsel %vm429, %v397, -1e+30
  %vm438 = vcmask 97280
  %v439 = vsel %vm438, %v430, -inf
  %440 = vmax.xlane.f32.xlu0 %v439
  %v441 = vpop.xlane.xlu0 %440
  %vm442 = vcmask 93184
  %v443 = vsel %vm442, %v431, -inf
  %444 = vmax.xlane.f32.xlu0 %v443
  %v445 = vpop.xlane.xlu0 %444
  %v446 = vsel %vm438, %v432, -inf
  %447 = vmax.xlane.f32.xlu0 %v446
  %v448 = vpop.xlane.xlu0 %447
  %v449 = vsel %vm442, %v433, -inf
  %450 = vmax.xlane.f32.xlu0 %v449
  %v451 = vpop.xlane.xlu0 %450
  %v452 = vsel %vm438, %v434, -inf
  %453 = vmax.xlane.f32.xlu0 %v452
  %v454 = vpop.xlane.xlu0 %453
  %v455 = vsel %vm442, %v435, -inf
  %456 = vmax.xlane.f32.xlu0 %v455
  %v457 = vpop.xlane.xlu0 %456
  %v458 = vsel %vm438, %v436, -inf
  %459 = vmax.xlane.f32.xlu0 %v458
  %v460 = vpop.xlane.xlu0 %459
  %v461 = vsel %vm442, %v437, -inf
  %462 = vmax.xlane.f32.xlu0 %v461
  %v463 = vpop.xlane.xlu0 %462
  %v464 = vsub.f32 %v430, %v441
  %v465 = vsub.f32 %v431, %v445
  %v466 = vsub.f32 %v432, %v448
  %v467 = vsub.f32 %v433, %v451
  %v468 = vsub.f32 %v434, %v454
  %v469 = vsub.f32 %v435, %v457
  %v470 = vsub.f32 %v436, %v460
  %v471 = vsub.f32 %v437, %v463
  %v472 = vmul.f32 %v464, 1.442695
  %v473 = vpow.pop %v472
  %v474 = vmul.f32 %v465, 1.442695
  %v475 = vpow.pop %v474
  %v476 = vmul.f32 %v466, 1.442695
  %v477 = vpow.pop %v476
  %v478 = vmul.f32 %v467, 1.442695
  %v479 = vpow.pop %v478
  %v480 = vmul.f32 %v468, 1.442695
  %v481 = vpow.pop %v480
  %v482 = vmul.f32 %v469, 1.442695
  %v483 = vpow.pop %v482
  %v484 = vmul.f32 %v470, 1.442695
  %v485 = vpow.pop %v484
  %v486 = vmul.f32 %v471, 1.442695
  %v487 = vpow.pop %v486
  %v488 = vsel %vm438, %v473, 0.0
  %489 = vadd.xlane.f32.xlu0 %v488
  %v490 = vpop.xlane.xlu0 %489
  %v491 = vsel %vm442, %v475, 0.0
  %492 = vadd.xlane.f32.xlu0 %v491
  %v493 = vpop.xlane.xlu0 %492
  %v494 = vsel %vm438, %v477, 0.0
  %495 = vadd.xlane.f32.xlu0 %v494
  %v496 = vpop.xlane.xlu0 %495
  %v497 = vsel %vm442, %v479, 0.0
  %498 = vadd.xlane.f32.xlu0 %v497
  %v499 = vpop.xlane.xlu0 %498
  %v500 = vsel %vm438, %v481, 0.0
  %501 = vadd.xlane.f32.xlu0 %v500
  %v502 = vpop.xlane.xlu0 %501
  %v503 = vsel %vm442, %v483, 0.0
  %504 = vadd.xlane.f32.xlu0 %v503
  %v505 = vpop.xlane.xlu0 %504
  %v506 = vsel %vm438, %v485, 0.0
  %507 = vadd.xlane.f32.xlu0 %v506
  %v508 = vpop.xlane.xlu0 %507
  %v509 = vsel %vm442, %v487, 0.0
  %510 = vadd.xlane.f32.xlu0 %v509
  %v511 = vpop.xlane.xlu0 %510
  %v512 = vrcp.pop %v490
  %v513 = vrcp.pop %v493
  %v514 = vrcp.pop %v496
  %v515 = vrcp.pop %v499
  %v516 = vrcp.pop %v502
  %v517 = vrcp.pop %v505
  %v518 = vrcp.pop %v508
  %v519 = vrcp.pop %v511
  %v520 = vmul.f32 %v473, %v512
  %v521 = vmul.f32 %v475, %v513
  %v522 = vmul.f32 %v477, %v514
  %v523 = vmul.f32 %v479, %v515
  %v524 = vmul.f32 %v481, %v516
  %v525 = vmul.f32 %v483, %v517
  %v526 = vmul.f32 %v485, %v518
  %v527 = vmul.f32 %v487, %v519
  %v529 = vsel %vm438, %v520, 0
  %v532 = vsel %vm438, %v521, 0
  %vm534 = vcmask 1043456
  %v536 = vsel %vm534, %v34, 0
  %538 = vmatprep.subr.mxu0 0.0
  %539 = vmatpush1.msra.mxu0 0.0
  %540 = vmatprep.subr.mxu0 0.0
  %541 = vmatpush1.msra.mxu0 0.0
  %542 = vmatprep.subr.mxu0 0.0
  %543 = vmatpush1.msra.mxu0 0.0
  %544 = vmatprep.subr.mxu0 0.0
  %545 = vmatpush1.msra.mxu0 0.0
  %546 = vmatprep.subr.mxu0 0.0
  %547 = vmatpush1.msra.mxu0 0.0
  %548 = vmatprep.subr.mxu0 0.0
  %549 = vmatpush1.msra.mxu0 0.0
  %550 = vmatprep.subr.mxu0 0.0
  %551 = vmatpush1.msra.mxu0 0.0
  %552 = vmatprep.subr.mxu0 0.0
  %553 = vmatpush1.msra.mxu0 0.0
  %554 = vmatprep.subr.mxu0 0.0
  %555 = vmatpush1.msra.mxu0 0.0
  %556 = vmatprep.subr.mxu0 0.0
  %557 = vmatpush1.msra.mxu0 0.0
  %558 = vmatprep.subr.mxu0 0.0
  %559 = vmatpush1.msra.mxu0 0.0
  %560 = vmatprep.subr.mxu0 0.0
  %561 = vmatpush1.msra.mxu0 0.0
  %562 = vmatprep.subr.mxu0 0.0
  %563 = vmatpush1.msra.mxu0 0.0
  %564 = vmatprep.subr.mxu0 0.0
  %565 = vmatpush1.msra.mxu0 0.0
  %566 = vmatprep.subr.mxu0 0.0
  %567 = vmatpush1.msra.mxu0 %v536
  %568 = vmatprep.subr.mxu0 0.0
  %569 = vmatpush1.msra.mxu0 %v33
  %570 = vmatprep.subr.mxu0 0.0
  %571 = vmatpush2.msra.mxu0 0.0
  %572 = vmatprep.subr.mxu0 0.0
  %573 = vmatpush2.msra.mxu0 0.0
  %574 = vmatprep.subr.mxu0 0.0
  %575 = vmatpush2.msra.mxu0 0.0
  %576 = vmatprep.subr.mxu0 0.0
  %577 = vmatpush2.msra.mxu0 0.0
  %578 = vmatprep.subr.mxu0 0.0
  %579 = vmatpush2.msra.mxu0 0.0
  %580 = vmatprep.subr.mxu0 0.0
  %581 = vmatpush2.msra.mxu0 0.0
  %582 = vmatprep.subr.mxu0 0.0
  %583 = vmatpush2.msra.mxu0 0.0
  %584 = vmatprep.subr.mxu0 0.0
  %585 = vmatpush2.msra.mxu0 0.0
  %586 = vmatprep.subr.mxu0 0.0
  %587 = vmatpush2.msra.mxu0 0.0
  %588 = vmatprep.subr.mxu0 0.0
  %589 = vmatpush2.msra.mxu0 0.0
  %590 = vmatprep.subr.mxu0 0.0
  %591 = vmatpush2.msra.mxu0 0.0
  %592 = vmatprep.subr.mxu0 0.0
  %593 = vmatpush2.msra.mxu0 0.0
  %594 = vmatprep.subr.mxu0 0.0
  %595 = vmatpush2.msra.mxu0 0.0
  %596 = vmatprep.subr.mxu0 0.0
  %597 = vmatpush2.msra.mxu0 0.0
  %598 = vmatprep.subr.mxu0 0.0
  %599 = vmatpush2.msra.mxu0 0.0
  %600 = vmatprep.subr.mxu0 0.0
  %601 = vmatpush2.msra.mxu0 0.0
  %602 = vmatprep.mubr.f32.mxu0 0.0
  %603 = vmatmul.mubr.f32.gmra.mxu0 %v529
  %v604 = vpop.f32.mrf.mxu0
  %v605 = vadd.f32 0.0, %v604
  %v606 = vpop.f32.mrf.mxu0
  %607 = vmatprep.mubr.f32.mxu0 0.0
  %608 = vmatmul.mubr.f32.gmra.mxu0 %v532
  %v609 = vpop.f32.mrf.mxu0
  %v610 = vadd.f32 0.0, %v609
  %v611 = vpop.f32.mrf.mxu0
  %612 = vdwg.mxu0
  %v614 = vsel %vm438, %v522, 0
  %v617 = vsel %vm438, %v523, 0
  %v620 = vsel %vm534, %v36, 0
  %622 = vmatprep.subr.mxu0 0.0
  %623 = vmatpush1.msra.mxu0 0.0
  %624 = vmatprep.subr.mxu0 0.0
  %625 = vmatpush1.msra.mxu0 0.0
  %626 = vmatprep.subr.mxu0 0.0
  %627 = vmatpush1.msra.mxu0 0.0
  %628 = vmatprep.subr.mxu0 0.0
  %629 = vmatpush1.msra.mxu0 0.0
  %630 = vmatprep.subr.mxu0 0.0
  %631 = vmatpush1.msra.mxu0 0.0
  %632 = vmatprep.subr.mxu0 0.0
  %633 = vmatpush1.msra.mxu0 0.0
  %634 = vmatprep.subr.mxu0 0.0
  %635 = vmatpush1.msra.mxu0 0.0
  %636 = vmatprep.subr.mxu0 0.0
  %637 = vmatpush1.msra.mxu0 0.0
  %638 = vmatprep.subr.mxu0 0.0
  %639 = vmatpush1.msra.mxu0 0.0
  %640 = vmatprep.subr.mxu0 0.0
  %641 = vmatpush1.msra.mxu0 0.0
  %642 = vmatprep.subr.mxu0 0.0
  %643 = vmatpush1.msra.mxu0 0.0
  %644 = vmatprep.subr.mxu0 0.0
  %645 = vmatpush1.msra.mxu0 0.0
  %646 = vmatprep.subr.mxu0 0.0
  %647 = vmatpush1.msra.mxu0 0.0
  %648 = vmatprep.subr.mxu0 0.0
  %649 = vmatpush1.msra.mxu0 0.0
  %650 = vmatprep.subr.mxu0 0.0
  %651 = vmatpush1.msra.mxu0 %v620
  %652 = vmatprep.subr.mxu0 0.0
  %653 = vmatpush1.msra.mxu0 %v35
  %654 = vmatprep.subr.mxu0 0.0
  %655 = vmatpush2.msra.mxu0 0.0
  %656 = vmatprep.subr.mxu0 0.0
  %657 = vmatpush2.msra.mxu0 0.0
  %658 = vmatprep.subr.mxu0 0.0
  %659 = vmatpush2.msra.mxu0 0.0
  %660 = vmatprep.subr.mxu0 0.0
  %661 = vmatpush2.msra.mxu0 0.0
  %662 = vmatprep.subr.mxu0 0.0
  %663 = vmatpush2.msra.mxu0 0.0
  %664 = vmatprep.subr.mxu0 0.0
  %665 = vmatpush2.msra.mxu0 0.0
  %666 = vmatprep.subr.mxu0 0.0
  %667 = vmatpush2.msra.mxu0 0.0
  %668 = vmatprep.subr.mxu0 0.0
  %669 = vmatpush2.msra.mxu0 0.0
  %670 = vmatprep.subr.mxu0 0.0
  %671 = vmatpush2.msra.mxu0 0.0
  %672 = vmatprep.subr.mxu0 0.0
  %673 = vmatpush2.msra.mxu0 0.0
  %674 = vmatprep.subr.mxu0 0.0
  %675 = vmatpush2.msra.mxu0 0.0
  %676 = vmatprep.subr.mxu0 0.0
  %677 = vmatpush2.msra.mxu0 0.0
  %678 = vmatprep.subr.mxu0 0.0
  %679 = vmatpush2.msra.mxu0 0.0
  %680 = vmatprep.subr.mxu0 0.0
  %681 = vmatpush2.msra.mxu0 0.0
  %682 = vmatprep.subr.mxu0 0.0
  %683 = vmatpush2.msra.mxu0 0.0
  %684 = vmatprep.subr.mxu0 0.0
  %685 = vmatpush2.msra.mxu0 0.0
  %686 = vmatprep.mubr.f32.mxu0 0.0
  %687 = vmatmul.mubr.f32.gmra.mxu0 %v614
  %v688 = vpop.f32.mrf.mxu0
  %v689 = vadd.f32 0.0, %v688
  %v690 = vpop.f32.mrf.mxu0
  %691 = vmatprep.mubr.f32.mxu0 0.0
  %692 = vmatmul.mubr.f32.gmra.mxu0 %v617
  %v693 = vpop.f32.mrf.mxu0
  %v694 = vadd.f32 0.0, %v693
  %v695 = vpop.f32.mrf.mxu0
  %696 = vdwg.mxu0
  %v698 = vsel %vm438, %v524, 0
  %v701 = vsel %vm438, %v525, 0
  %v704 = vsel %vm534, %v38, 0
  %706 = vmatprep.subr.mxu0 0.0
  %707 = vmatpush1.msra.mxu0 0.0
  %708 = vmatprep.subr.mxu0 0.0
  %709 = vmatpush1.msra.mxu0 0.0
  %710 = vmatprep.subr.mxu0 0.0
  %711 = vmatpush1.msra.mxu0 0.0
  %712 = vmatprep.subr.mxu0 0.0
  %713 = vmatpush1.msra.mxu0 0.0
  %714 = vmatprep.subr.mxu0 0.0
  %715 = vmatpush1.msra.mxu0 0.0
  %716 = vmatprep.subr.mxu0 0.0
  %717 = vmatpush1.msra.mxu0 0.0
  %718 = vmatprep.subr.mxu0 0.0
  %719 = vmatpush1.msra.mxu0 0.0
  %720 = vmatprep.subr.mxu0 0.0
  %721 = vmatpush1.msra.mxu0 0.0
  %722 = vmatprep.subr.mxu0 0.0
  %723 = vmatpush1.msra.mxu0 0.0
  %724 = vmatprep.subr.mxu0 0.0
  %725 = vmatpush1.msra.mxu0 0.0
  %726 = vmatprep.subr.mxu0 0.0
  %727 = vmatpush1.msra.mxu0 0.0
  %728 = vmatprep.subr.mxu0 0.0
  %729 = vmatpush1.msra.mxu0 0.0
  %730 = vmatprep.subr.mxu0 0.0
  %731 = vmatpush1.msra.mxu0 0.0
  %732 = vmatprep.subr.mxu0 0.0
  %733 = vmatpush1.msra.mxu0 0.0
  %734 = vmatprep.subr.mxu0 0.0
  %735 = vmatpush1.msra.mxu0 %v704
  %736 = vmatprep.subr.mxu0 0.0
  %737 = vmatpush1.msra.mxu0 %v37
  %738 = vmatprep.subr.mxu0 0.0
  %739 = vmatpush2.msra.mxu0 0.0
  %740 = vmatprep.subr.mxu0 0.0
  %741 = vmatpush2.msra.mxu0 0.0
  %742 = vmatprep.subr.mxu0 0.0
  %743 = vmatpush2.msra.mxu0 0.0
  %744 = vmatprep.subr.mxu0 0.0
  %745 = vmatpush2.msra.mxu0 0.0
  %746 = vmatprep.subr.mxu0 0.0
  %747 = vmatpush2.msra.mxu0 0.0
  %748 = vmatprep.subr.mxu0 0.0
  %749 = vmatpush2.msra.mxu0 0.0
  %750 = vmatprep.subr.mxu0 0.0
  %751 = vmatpush2.msra.mxu0 0.0
  %752 = vmatprep.subr.mxu0 0.0
  %753 = vmatpush2.msra.mxu0 0.0
  %754 = vmatprep.subr.mxu0 0.0
  %755 = vmatpush2.msra.mxu0 0.0
  %756 = vmatprep.subr.mxu0 0.0
  %757 = vmatpush2.msra.mxu0 0.0
  %758 = vmatprep.subr.mxu0 0.0
  %759 = vmatpush2.msra.mxu0 0.0
  %760 = vmatprep.subr.mxu0 0.0
  %761 = vmatpush2.msra.mxu0 0.0
  %762 = vmatprep.subr.mxu0 0.0
  %763 = vmatpush2.msra.mxu0 0.0
  %764 = vmatprep.subr.mxu0 0.0
  %765 = vmatpush2.msra.mxu0 0.0
  %766 = vmatprep.subr.mxu0 0.0
  %767 = vmatpush2.msra.mxu0 0.0
  %768 = vmatprep.subr.mxu0 0.0
  %769 = vmatpush2.msra.mxu0 0.0
  %770 = vmatprep.mubr.f32.mxu0 0.0
  %771 = vmatmul.mubr.f32.gmra.mxu0 %v698
  %v772 = vpop.f32.mrf.mxu0
  %v773 = vadd.f32 0.0, %v772
  %v774 = vpop.f32.mrf.mxu0
  %775 = vmatprep.mubr.f32.mxu0 0.0
  %776 = vmatmul.mubr.f32.gmra.mxu0 %v701
  %v777 = vpop.f32.mrf.mxu0
  %v778 = vadd.f32 0.0, %v777
  %v779 = vpop.f32.mrf.mxu0
  %780 = vdwg.mxu0
  %v782 = vsel %vm438, %v526, 0
  %v785 = vsel %vm438, %v527, 0
  %v788 = vsel %vm534, %v40, 0
  %790 = vmatprep.subr.mxu0 0.0
  %791 = vmatpush1.msra.mxu0 0.0
  %792 = vmatprep.subr.mxu0 0.0
  %793 = vmatpush1.msra.mxu0 0.0
  %794 = vmatprep.subr.mxu0 0.0
  %795 = vmatpush1.msra.mxu0 0.0
  %796 = vmatprep.subr.mxu0 0.0
  %797 = vmatpush1.msra.mxu0 0.0
  %798 = vmatprep.subr.mxu0 0.0
  %799 = vmatpush1.msra.mxu0 0.0
  %800 = vmatprep.subr.mxu0 0.0
  %801 = vmatpush1.msra.mxu0 0.0
  %802 = vmatprep.subr.mxu0 0.0
  %803 = vmatpush1.msra.mxu0 0.0
  %804 = vmatprep.subr.mxu0 0.0
  %805 = vmatpush1.msra.mxu0 0.0
  %806 = vmatprep.subr.mxu0 0.0
  %807 = vmatpush1.msra.mxu0 0.0
  %808 = vmatprep.subr.mxu0 0.0
  %809 = vmatpush1.msra.mxu0 0.0
  %810 = vmatprep.subr.mxu0 0.0
  %811 = vmatpush1.msra.mxu0 0.0
  %812 = vmatprep.subr.mxu0 0.0
  %813 = vmatpush1.msra.mxu0 0.0
  %814 = vmatprep.subr.mxu0 0.0
  %815 = vmatpush1.msra.mxu0 0.0
  %816 = vmatprep.subr.mxu0 0.0
  %817 = vmatpush1.msra.mxu0 0.0
  %818 = vmatprep.subr.mxu0 0.0
  %819 = vmatpush1.msra.mxu0 %v788
  %820 = vmatprep.subr.mxu0 0.0
  %821 = vmatpush1.msra.mxu0 %v39
  %822 = vmatprep.subr.mxu0 0.0
  %823 = vmatpush2.msra.mxu0 0.0
  %824 = vmatprep.subr.mxu0 0.0
  %825 = vmatpush2.msra.mxu0 0.0
  %826 = vmatprep.subr.mxu0 0.0
  %827 = vmatpush2.msra.mxu0 0.0
  %828 = vmatprep.subr.mxu0 0.0
  %829 = vmatpush2.msra.mxu0 0.0
  %830 = vmatprep.subr.mxu0 0.0
  %831 = vmatpush2.msra.mxu0 0.0
  %832 = vmatprep.subr.mxu0 0.0
  %833 = vmatpush2.msra.mxu0 0.0
  %834 = vmatprep.subr.mxu0 0.0
  %835 = vmatpush2.msra.mxu0 0.0
  %836 = vmatprep.subr.mxu0 0.0
  %837 = vmatpush2.msra.mxu0 0.0
  %838 = vmatprep.subr.mxu0 0.0
  %839 = vmatpush2.msra.mxu0 0.0
  %840 = vmatprep.subr.mxu0 0.0
  %841 = vmatpush2.msra.mxu0 0.0
  %842 = vmatprep.subr.mxu0 0.0
  %843 = vmatpush2.msra.mxu0 0.0
  %844 = vmatprep.subr.mxu0 0.0
  %845 = vmatpush2.msra.mxu0 0.0
  %846 = vmatprep.subr.mxu0 0.0
  %847 = vmatpush2.msra.mxu0 0.0
  %848 = vmatprep.subr.mxu0 0.0
  %849 = vmatpush2.msra.mxu0 0.0
  %850 = vmatprep.subr.mxu0 0.0
  %851 = vmatpush2.msra.mxu0 0.0
  %852 = vmatprep.subr.mxu0 0.0
  %853 = vmatpush2.msra.mxu0 0.0
  %854 = vmatprep.mubr.f32.mxu0 0.0
  %855 = vmatmul.mubr.f32.gmra.mxu0 %v782
  %v856 = vpop.f32.mrf.mxu0
  %v857 = vadd.f32 0.0, %v856
  %v858 = vpop.f32.mrf.mxu0
  %859 = vmatprep.mubr.f32.mxu0 0.0
  %860 = vmatmul.mubr.f32.gmra.mxu0 %v785
  %v861 = vpop.f32.mrf.mxu0
  %v862 = vadd.f32 0.0, %v861
  %v863 = vpop.f32.mrf.mxu0
  %864 = vdwg.mxu0
  %869 = vrot.lane.b32.xlu0 %v689, 16
  %v870 = vpop.permute.xlu0 %869
  %871 = vrot.lane.b32.xlu0 %v694, 16
  %v872 = vpop.permute.xlu0 %871
  %873 = vrot.lane.b32.xlu0 %v857, 16
  %v874 = vpop.permute.xlu0 %873
  %875 = vrot.lane.b32.xlu0 %v862, 16
  %v876 = vpop.permute.xlu0 %875
  %v881 = vsel %vm41, %v605, %v870
  %v882 = vsel %vm41, %v610, %v872
  %v883 = vsel %vm41, %v773, %v874
  %v884 = vsel %vm41, %v778, %v876
  %vm885 = vcmask 261120
  %886 = vst.msk [vmem:[%s4] sm:$0xff] %vm885, %v881
  %vm887 = vcmask 257024
  %888 = vst.msk [vmem:[%s4 + $0x8] sm:$0xf] %vm887, %v882
  %889 = vst.msk [vmem:[%s4 + $0x10] sm:$0xff] %vm885, %v883
  %890 = vst.msk [vmem:[%s4 + $0x18] sm:$0xf] %vm887, %v884
  // Predicated region
  $region18: #{flux_forward.10} parent=0 // pred_check
    _
  $region19: #{flux_forward.10} parent=0 // pred_check_branch
    %892 = sbr.rel (0) target = $region21
  $region20: #{flux_forward.10} parent=0 // pred_region
    _
  $region21: #{flux_forward.10} parent=0 // pred_fallthru
    _
  // Predicated region
  $region22: #{flux_forward.10} parent=0 // pred_check
    _
  $region23: #{flux_forward.10} parent=0 // pred_check_branch
    %894 = sbr.rel (0) target = $region25
  $region24: #{flux_forward.10} parent=0 // pred_region
    _
  $region25: #{flux_forward.10} parent=0 // pred_fallthru
    _

// kernel: flux_forward.11
$region0: #{flux_forward.11}
  #allocation0 [shape = 'u32[]', space=smem, size = 0x4, offset = 0x4, fixed_abs, tag = 'smem constant byte address 0x4 - core index']
  #allocation1 [shape = 'u32[144,128]{1,0:T(1,128)}', space=vmem, size = 0x12000, scoped, tag = 'internal scratch']
  %s0 = inlined_call_operand.vmem [shape: f32[2,384], index: 0, kind: input, shape index: {}]
  %s1 = inlined_call_operand.vmem [shape: f32[16,32], index: 1, kind: input, shape index: {}]
  %s2 = inlined_call_operand.vmem [shape: f32[16,32], index: 2, kind: input, shape index: {}]
  %s3 = inlined_call_operand.vmem [shape: f32[16,2], index: 3, kind: input, shape index: {}]
  %s4 = inlined_call_operand.vmem [shape: f32[32,32], index: 4, kind: input, shape index: {}]
  %s5 = inlined_call_operand.vmem [shape: f32[1,32], index: 5, kind: input, shape index: {}]
  %s6 = inlined_call_operand.vmem [shape: f32[32,128], index: 6, kind: input, shape index: {}]
  %s7 = inlined_call_operand.vmem [shape: f32[1,128], index: 7, kind: input, shape index: {}]
  %s8 = inlined_call_operand.vmem [shape: f32[128,32], index: 8, kind: input, shape index: {}]
  %s9 = inlined_call_operand.vmem [shape: f32[1,32], index: 9, kind: input, shape index: {}]
  %s10 = inlined_call_operand.vmem [shape: f32[8,32], index: 10, kind: input, shape index: {}]
  %s11 = inlined_call_operand.vmem [shape: f32[8,32], index: 11, kind: input, shape index: {}]
  %s12 = inlined_call_operand.vmem [shape: f32[8,2], index: 12, kind: input, shape index: {}]
  %s13 = inlined_call_operand.vmem [shape: f32[32,32], index: 13, kind: input, shape index: {}]
  %s14 = inlined_call_operand.vmem [shape: f32[1,32], index: 14, kind: input, shape index: {}]
  %s15 = inlined_call_operand.vmem [shape: f32[32,128], index: 15, kind: input, shape index: {}]
  %s16 = inlined_call_operand.vmem [shape: f32[1,128], index: 16, kind: input, shape index: {}]
  %s17 = inlined_call_operand.vmem [shape: f32[128,32], index: 17, kind: input, shape index: {}]
  %s18 = inlined_call_operand.vmem [shape: f32[1,32], index: 18, kind: input, shape index: {}]
  %s19 = inlined_call_operand.vmem [shape: f32[16,32], index: 19, kind: output, shape index: {0}]
  %s20 = inlined_call_operand.vmem [shape: f32[8,32], index: 20, kind: output, shape index: {1}]
  %21 = xla_tuple %s19, %s20
  %s22 = sld [smem:[#allocation0]]
  $region94: #{flux_forward.11} parent=0
    _
  %s24 = ssub.s32 1, %s22
  %s25 = scalar_select 0, %s24, %s22
  // Predicated region
  $region2: #{flux_forward.11} parent=0 // pred_check
    _
  $region3: #{flux_forward.11} parent=0 // pred_check_branch
    %27 = sbr.rel (0) target = $region5
  $region4: #{flux_forward.11} parent=0 // pred_region
    _
  $region5: #{flux_forward.11} parent=0 // pred_fallthru
    _
  // Predicated region
  $region6: #{flux_forward.11} parent=0 // pred_check
    _
  $region7: #{flux_forward.11} parent=0 // pred_check_branch
    %29 = sbr.rel (0) target = $region9
  $region8: #{flux_forward.11} parent=0 // pred_region
    _
  $region9: #{flux_forward.11} parent=0 // pred_fallthru
    _
  // Predicated region
  $region10: #{flux_forward.11} parent=0 // pred_check
    _
  $region11: #{flux_forward.11} parent=0 // pred_check_branch
    %31 = sbr.rel (0) target = $region13
  $region12: #{flux_forward.11} parent=0 // pred_region
    _
  $region13: #{flux_forward.11} parent=0 // pred_fallthru
    _
  // Predicated region
  $region14: #{flux_forward.11} parent=0 // pred_check
    _
  $region15: #{flux_forward.11} parent=0 // pred_check_branch
    %33 = sbr.rel (0) target = $region17
  $region16: #{flux_forward.11} parent=0 // pred_region
    _
  $region17: #{flux_forward.11} parent=0 // pred_fallthru
    _
  // Predicated region
  $region18: #{flux_forward.11} parent=0 // pred_check
    _
  $region19: #{flux_forward.11} parent=0 // pred_check_branch
    %35 = sbr.rel (0) target = $region21
  $region20: #{flux_forward.11} parent=0 // pred_region
    _
  $region21: #{flux_forward.11} parent=0 // pred_fallthru
    _
  // Predicated region
  $region22: #{flux_forward.11} parent=0 // pred_check
    _
  $region23: #{flux_forward.11} parent=0 // pred_check_branch
    %37 = sbr.rel (0) target = $region25
  $region24: #{flux_forward.11} parent=0 // pred_region
    _
  $region25: #{flux_forward.11} parent=0 // pred_fallthru
    _
  // Predicated region
  $region26: #{flux_forward.11} parent=0 // pred_check
    _
  $region27: #{flux_forward.11} parent=0 // pred_check_branch
    %39 = sbr.rel (0) target = $region29
  $region28: #{flux_forward.11} parent=0 // pred_region
    _
  $region29: #{flux_forward.11} parent=0 // pred_fallthru
    _
  // Predicated region
  $region30: #{flux_forward.11} parent=0 // pred_check
    _
  $region31: #{flux_forward.11} parent=0 // pred_check_branch
    %41 = sbr.rel (0) target = $region33
  $region32: #{flux_forward.11} parent=0 // pred_region
    _
  $region33: #{flux_forward.11} parent=0 // pred_fallthru
    _
  // Predicated region
  $region34: #{flux_forward.11} parent=0 // pred_check
    _
  $region35: #{flux_forward.11} parent=0 // pred_check_branch
    %43 = sbr.rel (0) target = $region37
  $region36: #{flux_forward.11} parent=0 // pred_region
    _
  $region37: #{flux_forward.11} parent=0 // pred_fallthru
    _
  // Predicated region
  $region38: #{flux_forward.11} parent=0 // pred_check
    _
  $region39: #{flux_forward.11} parent=0 // pred_check_branch
    %45 = sbr.rel (0) target = $region41
  $region40: #{flux_forward.11} parent=0 // pred_region
    _
  $region41: #{flux_forward.11} parent=0 // pred_fallthru
    _
  // Predicated region
  $region42: #{flux_forward.11} parent=0 // pred_check
    _
  $region43: #{flux_forward.11} parent=0 // pred_check_branch
    %47 = sbr.rel (0) target = $region45
  $region44: #{flux_forward.11} parent=0 // pred_region
    _
  $region45: #{flux_forward.11} parent=0 // pred_fallthru
    _
  // Predicated region
  $region46: #{flux_forward.11} parent=0 // pred_check
    _
  $region47: #{flux_forward.11} parent=0 // pred_check_branch
    %49 = sbr.rel (0) target = $region49
  $region48: #{flux_forward.11} parent=0 // pred_region
    _
  $region49: #{flux_forward.11} parent=0 // pred_fallthru
    _
  // Predicated region
  $region50: #{flux_forward.11} parent=0 // pred_check
    _
  $region51: #{flux_forward.11} parent=0 // pred_check_branch
    %51 = sbr.rel (0) target = $region53
  $region52: #{flux_forward.11} parent=0 // pred_region
    _
  $region53: #{flux_forward.11} parent=0 // pred_fallthru
    _
  // Predicated region
  $region54: #{flux_forward.11} parent=0 // pred_check
    _
  $region55: #{flux_forward.11} parent=0 // pred_check_branch
    %53 = sbr.rel (0) target = $region57
  $region56: #{flux_forward.11} parent=0 // pred_region
    _
  $region57: #{flux_forward.11} parent=0 // pred_fallthru
    _
  // Predicated region
  $region58: #{flux_forward.11} parent=0 // pred_check
    _
  $region59: #{flux_forward.11} parent=0 // pred_check_branch
    %55 = sbr.rel (0) target = $region61
  $region60: #{flux_forward.11} parent=0 // pred_region
    _
  $region61: #{flux_forward.11} parent=0 // pred_fallthru
    _
  // Predicated region
  $region62: #{flux_forward.11} parent=0 // pred_check
    _
  $region63: #{flux_forward.11} parent=0 // pred_check_branch
    %57 = sbr.rel (0) target = $region65
  $region64: #{flux_forward.11} parent=0 // pred_region
    _
  $region65: #{flux_forward.11} parent=0 // pred_fallthru
    _
  // Predicated region
  $region66: #{flux_forward.11} parent=0 // pred_check
    _
  $region67: #{flux_forward.11} parent=0 // pred_check_branch
    %59 = sbr.rel (0) target = $region69
  $region68: #{flux_forward.11} parent=0 // pred_region
    _
  $region69: #{flux_forward.11} parent=0 // pred_fallthru
    _
  // Predicated region
  $region70: #{flux_forward.11} parent=0 // pred_check
    _
  $region71: #{flux_forward.11} parent=0 // pred_check_branch
    %61 = sbr.rel (0) target = $region73
  $region72: #{flux_forward.11} parent=0 // pred_region
    _
  $region73: #{flux_forward.11} parent=0 // pred_fallthru
    _
  // Predicated region
  $region74: #{flux_forward.11} parent=0 // pred_check
    _
  $region75: #{flux_forward.11} parent=0 // pred_check_branch
    %63 = sbr.rel (0) target = $region77
  $region76: #{flux_forward.11} parent=0 // pred_region
    _
  $region77: #{flux_forward.11} parent=0 // pred_fallthru
    _
  %v64 = vld [vmem:[%s0] sm:$0x3f]
  %v65 = vld [vmem:[%s1] sm:$0xff]
  %v66 = vld [vmem:[%s1 + $0x8] sm:$0xff]
  %v67 = vld [vmem:[%s2] sm:$0xff]
  %v68 = vld [vmem:[%s2 + $0x8] sm:$0xff]
  %v69 = vld [vmem:[%s3] sm:$0xff]
  %v70 = vld [vmem:[%s3 + $0x8] sm:$0xff]
  %v71 = vld [vmem:[%s4] sm:$0xff]
  %v72 = vld [vmem:[%s4 + $0x8] sm:$0xff]
  %v73 = vld [vmem:[%s4 + $0x10] sm:$0xff]
  %v74 = vld [vmem:[%s4 + $0x18] sm:$0xff]
  %v75 = vld [vmem:[%s5] sm:$0x1]
  %v76 = vld [vmem:[%s6] sm:$0xff]
  %v77 = vld [vmem:[%s6 + $0x8] sm:$0xff]
  %v78 = vld [vmem:[%s6 + $0x10] sm:$0xff]
  %v79 = vld [vmem:[%s6 + $0x18] sm:$0xff]
  %v80 = vld [vmem:[%s7] sm:$0x1]
  %v81 = vld [vmem:[%s8] sm:$0xff]
  %v82 = vld [vmem:[%s8 + $0x8] sm:$0xff]
  %v83 = vld [vmem:[%s8 + $0x10] sm:$0xff]
  %v84 = vld [vmem:[%s8 + $0x18] sm:$0xff]
  %v85 = vld [vmem:[%s8 + $0x20] sm:$0xff]
  %v86 = vld [vmem:[%s8 + $0x28] sm:$0xff]
  %v87 = vld [vmem:[%s8 + $0x30] sm:$0xff]
  %v88 = vld [vmem:[%s8 + $0x38] sm:$0xff]
  %v89 = vld [vmem:[%s8 + $0x40] sm:$0xff]
  %v90 = vld [vmem:[%s8 + $0x48] sm:$0xff]
  %v91 = vld [vmem:[%s8 + $0x50] sm:$0xff]
  %v92 = vld [vmem:[%s8 + $0x58] sm:$0xff]
  %v93 = vld [vmem:[%s8 + $0x60] sm:$0xff]
  %v94 = vld [vmem:[%s8 + $0x68] sm:$0xff]
  %v95 = vld [vmem:[%s8 + $0x70] sm:$0xff]
  %v96 = vld [vmem:[%s8 + $0x78] sm:$0xff]
  %v97 = vld [vmem:[%s9] sm:$0x1]
  %v100 = vunpack.c.l.s4 1983009808
  %v101 = vunpack.c.0.s8 %v100
  %v102 = vlaneseq
  %v103 = vshrl.u32 %v102, 7
  %v104 = vsub.s32 %v101, %v103
  %v105 = vrot.slane %v64, %v104
  %v106 = vcombine.high %v105, %v105
  %107 = vrot.lane.b32.xlu0 %v105, 64
  %v108 = vpop.permute.xlu0 %107
  %109 = vrot.lane.b32.xlu0 %v106, 64
  %v110 = vpop.permute.xlu0 %109
  %vm111 = vcmask 523264
  %v112 = vsel %vm111, %v108, %v110
  %vm113 = vcmask 15360
  %v115 = vsel %vm113, %v69, 0
  %v118 = vsel %vm113, %v70, 0
  %vm120 = vcmask 1041408
  %v121 = vsel %vm120, %v112, 0
  %123 = vmatprep.subr.mxu0 0.0
  %124 = vmatpush1.msra.mxu0 0.0
  %125 = vmatprep.subr.mxu0 0.0
  %126 = vmatpush1.msra.mxu0 0.0
  %127 = vmatprep.subr.mxu0 0.0
  %128 = vmatpush1.msra.mxu0 0.0
  %129 = vmatprep.subr.mxu0 0.0
  %130 = vmatpush1.msra.mxu0 0.0
  %131 = vmatprep.subr.mxu0 0.0
  %132 = vmatpush1.msra.mxu0 0.0
  %133 = vmatprep.subr.mxu0 0.0
  %134 = vmatpush1.msra.mxu0 0.0
  %135 = vmatprep.subr.mxu0 0.0
  %136 = vmatpush1.msra.mxu0 0.0
  %137 = vmatprep.subr.mxu0 0.0
  %138 = vmatpush1.msra.mxu0 0.0
  %139 = vmatprep.subr.mxu0 0.0
  %140 = vmatpush1.msra.mxu0 0.0
  %141 = vmatprep.subr.mxu0 0.0
  %142 = vmatpush1.msra.mxu0 0.0
  %143 = vmatprep.subr.mxu0 0.0
  %144 = vmatpush1.msra.mxu0 0.0
  %145 = vmatprep.subr.mxu0 0.0
  %146 = vmatpush1.msra.mxu0 0.0
  %147 = vmatprep.subr.mxu0 0.0
  %148 = vmatpush1.msra.mxu0 0.0
  %149 = vmatprep.subr.mxu0 0.0
  %150 = vmatpush1.msra.mxu0 0.0
  %151 = vmatprep.subr.mxu0 0.0
  %152 = vmatpush1.msra.mxu0 0.0
  %153 = vmatprep.subr.mxu0 0.0
  %154 = vmatpush1.msra.mxu0 %v121
  %155 = vmatprep.subr.mxu0 0.0
  %156 = vmatpush2.msra.mxu0 0.0
  %157 = vmatprep.subr.mxu0 0.0
  %158 = vmatpush2.msra.mxu0 0.0
  %159 = vmatprep.subr.mxu0 0.0
  %160 = vmatpush2.msra.mxu0 0.0
  %161 = vmatprep.subr.mxu0 0.0
  %162 = vmatpush2.msra.mxu0 0.0
  %163 = vmatprep.subr.mxu0 0.0
  %164 = vmatpush2.msra.mxu0 0.0
  %165 = vmatprep.subr.mxu0 0.0
  %166 = vmatpush2.msra.mxu0 0.0
  %167 = vmatprep.subr.mxu0 0.0
  %168 = vmatpush2.msra.mxu0 0.0
  %169 = vmatprep.subr.mxu0 0.0
  %170 = vmatpush2.msra.mxu0 0.0
  %171 = vmatprep.subr.mxu0 0.0
  %172 = vmatpush2.msra.mxu0 0.0
  %173 = vmatprep.subr.mxu0 0.0
  %174 = vmatpush2.msra.mxu0 0.0
  %175 = vmatprep.subr.mxu0 0.0
  %176 = vmatpush2.msra.mxu0 0.0
  %177 = vmatprep.subr.mxu0 0.0
  %178 = vmatpush2.msra.mxu0 0.0
  %179 = vmatprep.subr.mxu0 0.0
  %180 = vmatpush2.msra.mxu0 0.0
  %181 = vmatprep.subr.mxu0 0.0
  %182 = vmatpush2.msra.mxu0 0.0
  %183 = vmatprep.subr.mxu0 0.0
  %184 = vmatpush2.msra.mxu0 0.0
  %185 = vmatprep.subr.mxu0 0.0
  %186 = vmatpush2.msra.mxu0 0.0
  %187 = vmatprep.mubr.f32.mxu0 0.0
  %188 = vmatmul.mubr.f32.gmra.mxu0 %v115
  %v189 = vpop.f32.mrf.mxu0
  %v190 = vadd.f32 0.0, %v189
  %v191 = vpop.f32.mrf.mxu0
  %192 = vmatprep.mubr.f32.mxu0 0.0
  %193 = vmatmul.mubr.f32.gmra.mxu0 %v118
  %v194 = vpop.f32.mrf.mxu0
  %v195 = vadd.f32 0.0, %v194
  %v196 = vpop.f32.mrf.mxu0
  %197 = vdwg.mxu0
  %v199 = vlaneseq
  %v200 = vshrl.u32 %v199, 7
  %v201 = vsub.s32 0, %v200
  %v202 = vrot.slane %v75, %v201
  %vm204 = vcmask 261120
  %v206 = vsel %vm204, %v67, 0
  %v209 = vsel %vm204, %v68, 0
  %211 = vmatprep.subr.mxu0 0.0
  %212 = vmatpush1.msra.mxu0 0.0
  %213 = vmatprep.subr.mxu0 0.0
  %214 = vmatpush1.msra.mxu0 0.0
  %215 = vmatprep.subr.mxu0 0.0
  %216 = vmatpush1.msra.mxu0 0.0
  %217 = vmatprep.subr.mxu0 0.0
  %218 = vmatpush1.msra.mxu0 0.0
  %219 = vmatprep.subr.mxu0 0.0
  %220 = vmatpush1.msra.mxu0 0.0
  %221 = vmatprep.subr.mxu0 0.0
  %222 = vmatpush1.msra.mxu0 0.0
  %223 = vmatprep.subr.mxu0 0.0
  %224 = vmatpush1.msra.mxu0 0.0
  %225 = vmatprep.subr.mxu0 0.0
  %226 = vmatpush1.msra.mxu0 0.0
  %227 = vmatprep.subr.mxu0 0.0
  %228 = vmatpush1.msra.mxu0 0.0
  %229 = vmatprep.subr.mxu0 0.0
  %230 = vmatpush1.msra.mxu0 0.0
  %231 = vmatprep.subr.mxu0 0.0
  %232 = vmatpush1.msra.mxu0 0.0
  %233 = vmatprep.subr.mxu0 0.0
  %234 = vmatpush1.msra.mxu0 0.0
  %235 = vmatprep.subr.mxu0 0.0
  %236 = vmatpush1.msra.mxu0 %v74
  %237 = vmatprep.subr.mxu0 0.0
  %238 = vmatpush1.msra.mxu0 %v73
  %239 = vmatprep.subr.mxu0 0.0
  %240 = vmatpush1.msra.mxu0 %v72
  %241 = vmatprep.subr.mxu0 0.0
  %242 = vmatpush1.msra.mxu0 %v71
  %243 = vmatprep.subr.mxu0 0.0
  %244 = vmatpush2.msra.mxu0 0.0
  %245 = vmatprep.subr.mxu0 0.0
  %246 = vmatpush2.msra.mxu0 0.0
  %247 = vmatprep.subr.mxu0 0.0
  %248 = vmatpush2.msra.mxu0 0.0
  %249 = vmatprep.subr.mxu0 0.0
  %250 = vmatpush2.msra.mxu0 0.0
  %251 = vmatprep.subr.mxu0 0.0
  %252 = vmatpush2.msra.mxu0 0.0
  %253 = vmatprep.subr.mxu0 0.0
  %254 = vmatpush2.msra.mxu0 0.0
  %255 = vmatprep.subr.mxu0 0.0
  %256 = vmatpush2.msra.mxu0 0.0
  %257 = vmatprep.subr.mxu0 0.0
  %258 = vmatpush2.msra.mxu0 0.0
  %259 = vmatprep.subr.mxu0 0.0
  %260 = vmatpush2.msra.mxu0 0.0
  %261 = vmatprep.subr.mxu0 0.0
  %262 = vmatpush2.msra.mxu0 0.0
  %263 = vmatprep.subr.mxu0 0.0
  %264 = vmatpush2.msra.mxu0 0.0
  %265 = vmatprep.subr.mxu0 0.0
  %266 = vmatpush2.msra.mxu0 0.0
  %267 = vmatprep.subr.mxu0 0.0
  %268 = vmatpush2.msra.mxu0 0.0
  %269 = vmatprep.subr.mxu0 0.0
  %270 = vmatpush2.msra.mxu0 0.0
  %271 = vmatprep.subr.mxu0 0.0
  %272 = vmatpush2.msra.mxu0 0.0
  %273 = vmatprep.subr.mxu0 0.0
  %274 = vmatpush2.msra.mxu0 0.0
  %275 = vmatprep.mubr.f32.mxu0 0.0
  %276 = vmatmul.mubr.f32.gmra.mxu0 %v206
  %v277 = vpop.f32.mrf.mxu0
  %v278 = vadd.f32 %v202, %v277
  %v279 = vpop.f32.mrf.mxu0
  %280 = vmatprep.mubr.f32.mxu0 0.0
  %281 = vmatmul.mubr.f32.gmra.mxu0 %v209
  %v282 = vpop.f32.mrf.mxu0
  %v283 = vadd.f32 %v202, %v282
  %v284 = vpop.f32.mrf.mxu0
  %285 = vdwg.mxu0
  %v286 = vmul.f32 %v190, %v278
  %v287 = vmul.f32 %v195, %v283
  %v288 = vadd.f32 %v65, %v286
  %v289 = vadd.f32 %v66, %v287
  %v290 = vadd.f32 %v190, 1.0
  %v291 = vadd.f32 %v195, 1.0
  %v292 = vsel %vm204, %v288, 0.0
  %293 = vadd.xlane.f32.xlu0 %v292
  %v294 = vpop.xlane.xlu0 %293
  %v295 = vsel %vm204, %v289, 0.0
  %296 = vadd.xlane.f32.xlu0 %v295
  %v297 = vpop.xlane.xlu0 %296
  %v298 = vrcp.pop 32.0
  %v299 = vmul.f32 %v294, %v298
  %v300 = vmul.f32 %v297, %v298
  %v301 = vsub.f32 %v288, %v299
  %v302 = vsub.f32 %v289, %v300
  %v303 = vmul.f32 %v301, %v301
  %v304 = vmul.f32 %v302, %v302
  %v305 = vsel %vm204, %v303, 0.0
  %306 = vadd.xlane.f32.xlu0 %v305
  %v307 = vpop.xlane.xlu0 %306
  %v308 = vsel %vm204, %v304, 0.0
  %309 = vadd.xlane.f32.xlu0 %v308
  %v310 = vpop.xlane.xlu0 %309
  %v311 = vmul.f32 %v307, %v298
  %v312 = vmul.f32 %v310, %v298
  %v313 = vadd.f32 %v311, 1e-06
  %v314 = vadd.f32 %v312, 1e-06
  %v315 = vrsqrt.pop %v313
  %v316 = vrsqrt.pop %v314
  %v317 = vmul.f32 %v301, %v315
  %v318 = vmul.f32 %v302, %v316
  %321 = vrot.lane.b32.xlu0 %v317, 64
  %v322 = vpop.permute.xlu0 %321
  %323 = vrot.lane.b32.xlu0 %v318, 64
  %v324 = vpop.permute.xlu0 %323
  %v327 = vmul.f32 %v290, %v322
  %v328 = vmul.f32 %v291, %v324
  %331 = vrot.lane.b32.xlu0 %v190, 32
  %v332 = vpop.permute.xlu0 %331
  %333 = vrot.lane.b32.xlu0 %v195, 32
  %v334 = vpop.permute.xlu0 %333
  %v337 = vadd.f32 %v327, %v332
  %v338 = vadd.f32 %v328, %v334
  %v340 = vlaneseq
  %v341 = vshrl.u32 %v340, 7
  %v342 = vsub.s32 0, %v341
  %v343 = vrot.slane %v80, %v342
  %347 = vrot.lane.b32.xlu0 %v337, 64
  %v348 = vpop.permute.xlu0 %347
  %349 = vrot.lane.b32.xlu0 %v338, 64
  %v350 = vpop.permute.xlu0 %349
  %v351 = vsel %vm204, %v348, 0
  %v353 = vsel %vm204, %v350, 0
  %355 = vmatprep.subr.mxu0 0.0
  %356 = vmatpush1.msra.mxu0 0.0
  %357 = vmatprep.subr.mxu0 0.0
  %358 = vmatpush1.msra.mxu0 0.0
  %359 = vmatprep.subr.mxu0 0.0
  %360 = vmatpush1.msra.mxu0 0.0
  %361 = vmatprep.subr.mxu0 0.0
  %362 = vmatpush1.msra.mxu0 0.0
  %363 = vmatprep.subr.mxu0 0.0
  %364 = vmatpush1.msra.mxu0 0.0
  %365 = vmatprep.subr.mxu0 0.0
  %366 = vmatpush1.msra.mxu0 0.0
  %367 = vmatprep.subr.mxu0 0.0
  %368 = vmatpush1.msra.mxu0 0.0
  %369 = vmatprep.subr.mxu0 0.0
  %370 = vmatpush1.msra.mxu0 0.0
  %371 = vmatprep.subr.mxu0 0.0
  %372 = vmatpush1.msra.mxu0 0.0
  %373 = vmatprep.subr.mxu0 0.0
  %374 = vmatpush1.msra.mxu0 0.0
  %375 = vmatprep.subr.mxu0 0.0
  %376 = vmatpush1.msra.mxu0 0.0
  %377 = vmatprep.subr.mxu0 0.0
  %378 = vmatpush1.msra.mxu0 0.0
  %379 = vmatprep.subr.mxu0 0.0
  %380 = vmatpush1.msra.mxu0 %v79
  %381 = vmatprep.subr.mxu0 0.0
  %382 = vmatpush1.msra.mxu0 %v78
  %383 = vmatprep.subr.mxu0 0.0
  %384 = vmatpush1.msra.mxu0 %v77
  %385 = vmatprep.subr.mxu0 0.0
  %386 = vmatpush1.msra.mxu0 %v76
  %387 = vmatprep.subr.mxu0 0.0
  %388 = vmatpush2.msra.mxu0 0.0
  %389 = vmatprep.subr.mxu0 0.0
  %390 = vmatpush2.msra.mxu0 0.0
  %391 = vmatprep.subr.mxu0 0.0
  %392 = vmatpush2.msra.mxu0 0.0
  %393 = vmatprep.subr.mxu0 0.0
  %394 = vmatpush2.msra.mxu0 0.0
  %395 = vmatprep.subr.mxu0 0.0
  %396 = vmatpush2.msra.mxu0 0.0
  %397 = vmatprep.subr.mxu0 0.0
  %398 = vmatpush2.msra.mxu0 0.0
  %399 = vmatprep.subr.mxu0 0.0
  %400 = vmatpush2.msra.mxu0 0.0
  %401 = vmatprep.subr.mxu0 0.0
  %402 = vmatpush2.msra.mxu0 0.0
  %403 = vmatprep.subr.mxu0 0.0
  %404 = vmatpush2.msra.mxu0 0.0
  %405 = vmatprep.subr.mxu0 0.0
  %406 = vmatpush2.msra.mxu0 0.0
  %407 = vmatprep.subr.mxu0 0.0
  %408 = vmatpush2.msra.mxu0 0.0
  %409 = vmatprep.subr.mxu0 0.0
  %410 = vmatpush2.msra.mxu0 0.0
  %411 = vmatprep.subr.mxu0 0.0
  %412 = vmatpush2.msra.mxu0 0.0
  %413 = vmatprep.subr.mxu0 0.0
  %414 = vmatpush2.msra.mxu0 0.0
  %415 = vmatprep.subr.mxu0 0.0
  %416 = vmatpush2.msra.mxu0 0.0
  %417 = vmatprep.subr.mxu0 0.0
  %418 = vmatpush2.msra.mxu0 0.0
  %419 = vmatprep.mubr.f32.mxu0 0.0
  %420 = vmatmul.mubr.f32.gmra.mxu0 %v351
  %v421 = vpop.f32.mrf.mxu0
  %v422 = vadd.f32 %v343, %v421
  %v423 = vpop.f32.mrf.mxu0
  %424 = vmatprep.mubr.f32.mxu0 0.0
  %425 = vmatmul.mubr.f32.gmra.mxu0 %v353
  %v426 = vpop.f32.mrf.mxu0
  %v427 = vadd.f32 %v343, %v426
  %v428 = vpop.f32.mrf.mxu0
  %429 = vdwg.mxu0
  %v430 = vmul.f32 %v422, 0.5
  %v431 = vmul.f32 %v427, 0.5
  %v432 = vmul.f32 %v422, 0.044715
  %v433 = vmul.f32 %v427, 0.044715
  %v434 = vmul.f32 %v432, %v422
  %v435 = vmul.f32 %v433, %v427
  %v436 = vmul.f32 %v434, %v422
  %v437 = vmul.f32 %v435, %v427
  %v438 = vadd.f32 %v422, %v436
  %v439 = vadd.f32 %v427, %v437
  %v440 = vmul.f32 %v438, 0.7978846
  %v441 = vmul.f32 %v439, 0.7978846
  %v442 = vtanh.pop %v440
  %v443 = vtanh.pop %v441
  %v444 = vadd.f32 %v442, 1.0
  %v445 = vadd.f32 %v443, 1.0
  %v446 = vmul.f32 %v430, %v444
  %v447 = vmul.f32 %v431, %v445
  %v449 = vlaneseq
  %v450 = vshrl.u32 %v449, 7
  %v451 = vsub.s32 0, %v450
  %v452 = vrot.slane %v97, %v451
  %454 = vmatprep.subr.mxu0 0.0
  %455 = vmatpush1.msra.mxu0 %v96
  %456 = vmatprep.subr.mxu0 0.0
  %457 = vmatpush1.msra.mxu0 %v95
  %458 = vmatprep.subr.mxu0 0.0
  %459 = vmatpush1.msra.mxu0 %v94
  %460 = vmatprep.subr.mxu0 0.0
  %461 = vmatpush1.msra.mxu0 %v93
  %462 = vmatprep.subr.mxu0 0.0
  %463 = vmatpush1.msra.mxu0 %v92
  %464 = vmatprep.subr.mxu0 0.0
  %465 = vmatpush1.msra.mxu0 %v91
  %466 = vmatprep.subr.mxu0 0.0
  %467 = vmatpush1.msra.mxu0 %v90
  %468 = vmatprep.subr.mxu0 0.0
  %469 = vmatpush1.msra.mxu0 %v89
  %470 = vmatprep.subr.mxu0 0.0
  %471 = vmatpush1.msra.mxu0 %v88
  %472 = vmatprep.subr.mxu0 0.0
  %473 = vmatpush1.msra.mxu0 %v87
  %474 = vmatprep.subr.mxu0 0.0
  %475 = vmatpush1.msra.mxu0 %v86
  %476 = vmatprep.subr.mxu0 0.0
  %477 = vmatpush1.msra.mxu0 %v85
  %478 = vmatprep.subr.mxu0 0.0
  %479 = vmatpush1.msra.mxu0 %v84
  %480 = vmatprep.subr.mxu0 0.0
  %481 = vmatpush1.msra.mxu0 %v83
  %482 = vmatprep.subr.mxu0 0.0
  %483 = vmatpush1.msra.mxu0 %v82
  %484 = vmatprep.subr.mxu0 0.0
  %485 = vmatpush1.msra.mxu0 %v81
  %486 = vmatprep.subr.mxu0 0.0
  %487 = vmatpush2.msra.mxu0 0.0
  %488 = vmatprep.subr.mxu0 0.0
  %489 = vmatpush2.msra.mxu0 0.0
  %490 = vmatprep.subr.mxu0 0.0
  %491 = vmatpush2.msra.mxu0 0.0
  %492 = vmatprep.subr.mxu0 0.0
  %493 = vmatpush2.msra.mxu0 0.0
  %494 = vmatprep.subr.mxu0 0.0
  %495 = vmatpush2.msra.mxu0 0.0
  %496 = vmatprep.subr.mxu0 0.0
  %497 = vmatpush2.msra.mxu0 0.0
  %498 = vmatprep.subr.mxu0 0.0
  %499 = vmatpush2.msra.mxu0 0.0
  %500 = vmatprep.subr.mxu0 0.0
  %501 = vmatpush2.msra.mxu0 0.0
  %502 = vmatprep.subr.mxu0 0.0
  %503 = vmatpush2.msra.mxu0 0.0
  %504 = vmatprep.subr.mxu0 0.0
  %505 = vmatpush2.msra.mxu0 0.0
  %506 = vmatprep.subr.mxu0 0.0
  %507 = vmatpush2.msra.mxu0 0.0
  %508 = vmatprep.subr.mxu0 0.0
  %509 = vmatpush2.msra.mxu0 0.0
  %510 = vmatprep.subr.mxu0 0.0
  %511 = vmatpush2.msra.mxu0 0.0
  %512 = vmatprep.subr.mxu0 0.0
  %513 = vmatpush2.msra.mxu0 0.0
  %514 = vmatprep.subr.mxu0 0.0
  %515 = vmatpush2.msra.mxu0 0.0
  %516 = vmatprep.subr.mxu0 0.0
  %517 = vmatpush2.msra.mxu0 0.0
  %518 = vmatprep.mubr.f32.mxu0 0.0
  %519 = vmatmul.mubr.f32.gmra.mxu0 %v446
  %v520 = vpop.f32.mrf.mxu0
  %v521 = vadd.f32 %v452, %v520
  %v522 = vpop.f32.mrf.mxu0
  %523 = vmatprep.mubr.f32.mxu0 0.0
  %524 = vmatmul.mubr.f32.gmra.mxu0 %v447
  %v525 = vpop.f32.mrf.mxu0
  %v526 = vadd.f32 %v452, %v525
  %v527 = vpop.f32.mrf.mxu0
  %528 = vdwg.mxu0
  %531 = vrot.lane.b32.xlu0 %v521, 96
  %v532 = vpop.permute.xlu0 %531
  %533 = vrot.lane.b32.xlu0 %v526, 96
  %v534 = vpop.permute.xlu0 %533
  %v537 = vmul.f32 %v190, %v532
  %v538 = vmul.f32 %v195, %v534
  %541 = vrot.lane.b32.xlu0 %v537, 32
  %v542 = vpop.permute.xlu0 %541
  %543 = vrot.lane.b32.xlu0 %v538, 32
  %v544 = vpop.permute.xlu0 %543
  %v547 = vadd.f32 %v288, %v542
  %v548 = vadd.f32 %v289, %v544
  %549 = vst.msk [vmem:[%s19] sm:$0xff] %vm204, %v547
  %550 = vst.msk [vmem:[%s19 + $0x8] sm:$0xff] %vm204, %v548
  %v551 = vld [vmem:[%s10] sm:$0xff]
  %v552 = vld [vmem:[%s11] sm:$0xff]
  %v553 = vld [vmem:[%s12] sm:$0xff]
  %v554 = vld [vmem:[%s13] sm:$0xff]
  %v555 = vld [vmem:[%s13 + $0x8] sm:$0xff]
  %v556 = vld [vmem:[%s13 + $0x10] sm:$0xff]
  %v557 = vld [vmem:[%s13 + $0x18] sm:$0xff]
  %v558 = vld [vmem:[%s14] sm:$0x1]
  %v559 = vld [vmem:[%s15] sm:$0xff]
  %v560 = vld [vmem:[%s15 + $0x8] sm:$0xff]
  %v561 = vld [vmem:[%s15 + $0x10] sm:$0xff]
  %v562 = vld [vmem:[%s15 + $0x18] sm:$0xff]
  %v563 = vld [vmem:[%s16] sm:$0x1]
  %v564 = vld [vmem:[%s17] sm:$0xff]
  %v565 = vld [vmem:[%s17 + $0x8] sm:$0xff]
  %v566 = vld [vmem:[%s17 + $0x10] sm:$0xff]
  %v567 = vld [vmem:[%s17 + $0x18] sm:$0xff]
  %v568 = vld [vmem:[%s17 + $0x20] sm:$0xff]
  %v569 = vld [vmem:[%s17 + $0x28] sm:$0xff]
  %v570 = vld [vmem:[%s17 + $0x30] sm:$0xff]
  %v571 = vld [vmem:[%s17 + $0x38] sm:$0xff]
  %v572 = vld [vmem:[%s17 + $0x40] sm:$0xff]
  %v573 = vld [vmem:[%s17 + $0x48] sm:$0xff]
  %v574 = vld [vmem:[%s17 + $0x50] sm:$0xff]
  %v575 = vld [vmem:[%s17 + $0x58] sm:$0xff]
  %v576 = vld [vmem:[%s17 + $0x60] sm:$0xff]
  %v577 = vld [vmem:[%s17 + $0x68] sm:$0xff]
  %v578 = vld [vmem:[%s17 + $0x70] sm:$0xff]
  %v579 = vld [vmem:[%s17 + $0x78] sm:$0xff]
  %v580 = vld [vmem:[%s18] sm:$0x1]
  %v581 = vcombine.high %v64, %v64
  %v583 = vunpack.c.l.s4 1983009808
  %v584 = vunpack.c.0.s8 %v583
  %v585 = vlaneseq
  %v586 = vshrl.u32 %v585, 7
  %v587 = vsub.s32 %v584, %v586
  %v588 = vrot.slane %v581, %v587
  %v590 = vsel %vm113, %v553, 0
  %v592 = vsel %vm120, %v588, 0
  %594 = vmatprep.subr.mxu0 0.0
  %595 = vmatpush1.msra.mxu0 0.0
  %596 = vmatprep.subr.mxu0 0.0
  %597 = vmatpush1.msra.mxu0 0.0
  %598 = vmatprep.subr.mxu0 0.0
  %599 = vmatpush1.msra.mxu0 0.0
  %600 = vmatprep.subr.mxu0 0.0
  %601 = vmatpush1.msra.mxu0 0.0
  %602 = vmatprep.subr.mxu0 0.0
  %603 = vmatpush1.msra.mxu0 0.0
  %604 = vmatprep.subr.mxu0 0.0
  %605 = vmatpush1.msra.mxu0 0.0
  %606 = vmatprep.subr.mxu0 0.0
  %607 = vmatpush1.msra.mxu0 0.0
  %608 = vmatprep.subr.mxu0 0.0
  %609 = vmatpush1.msra.mxu0 0.0
  %610 = vmatprep.subr.mxu0 0.0
  %611 = vmatpush1.msra.mxu0 0.0
  %612 = vmatprep.subr.mxu0 0.0
  %613 = vmatpush1.msra.mxu0 0.0
  %614 = vmatprep.subr.mxu0 0.0
  %615 = vmatpush1.msra.mxu0 0.0
  %616 = vmatprep.subr.mxu0 0.0
  %617 = vmatpush1.msra.mxu0 0.0
  %618 = vmatprep.subr.mxu0 0.0
  %619 = vmatpush1.msra.mxu0 0.0
  %620 = vmatprep.subr.mxu0 0.0
  %621 = vmatpush1.msra.mxu0 0.0
  %622 = vmatprep.subr.mxu0 0.0
  %623 = vmatpush1.msra.mxu0 0.0
  %624 = vmatprep.subr.mxu0 0.0
  %625 = vmatpush1.msra.mxu0 %v592
  %626 = vmatprep.subr.mxu0 0.0
  %627 = vmatpush2.msra.mxu0 0.0
  %628 = vmatprep.subr.mxu0 0.0
  %629 = vmatpush2.msra.mxu0 0.0
  %630 = vmatprep.subr.mxu0 0.0
  %631 = vmatpush2.msra.mxu0 0.0
  %632 = vmatprep.subr.mxu0 0.0
  %633 = vmatpush2.msra.mxu0 0.0
  %634 = vmatprep.subr.mxu0 0.0
  %635 = vmatpush2.msra.mxu0 0.0
  %636 = vmatprep.subr.mxu0 0.0
  %637 = vmatpush2.msra.mxu0 0.0
  %638 = vmatprep.subr.mxu0 0.0
  %639 = vmatpush2.msra.mxu0 0.0
  %640 = vmatprep.subr.mxu0 0.0
  %641 = vmatpush2.msra.mxu0 0.0
  %642 = vmatprep.subr.mxu0 0.0
  %643 = vmatpush2.msra.mxu0 0.0
  %644 = vmatprep.subr.mxu0 0.0
  %645 = vmatpush2.msra.mxu0 0.0
  %646 = vmatprep.subr.mxu0 0.0
  %647 = vmatpush2.msra.mxu0 0.0
  %648 = vmatprep.subr.mxu0 0.0
  %649 = vmatpush2.msra.mxu0 0.0
  %650 = vmatprep.subr.mxu0 0.0
  %651 = vmatpush2.msra.mxu0 0.0
  %652 = vmatprep.subr.mxu0 0.0
  %653 = vmatpush2.msra.mxu0 0.0
  %654 = vmatprep.subr.mxu0 0.0
  %655 = vmatpush2.msra.mxu0 0.0
  %656 = vmatprep.subr.mxu0 0.0
  %657 = vmatpush2.msra.mxu0 0.0
  %658 = vmatprep.mubr.f32.mxu0 0.0
  %659 = vmatmul.mubr.f32.gmra.mxu0 %v590
  %v660 = vpop.f32.mrf.mxu0
  %v661 = vadd.f32 0.0, %v660
  %v662 = vpop.f32.mrf.mxu0
  %663 = vdwg.mxu0
  %v665 = vlaneseq
  %v666 = vshrl.u32 %v665, 7
  %v667 = vsub.s32 0, %v666
  %v668 = vrot.slane %v558, %v667
  %v671 = vsel %vm204, %v552, 0
  %673 = vmatprep.subr.mxu0 0.0
  %674 = vmatpush1.msra.mxu0 0.0
  %675 = vmatprep.subr.mxu0 0.0
  %676 = vmatpush1.msra.mxu0 0.0
  %677 = vmatprep.subr.mxu0 0.0
  %678 = vmatpush1.msra.mxu0 0.0
  %679 = vmatprep.subr.mxu0 0.0
  %680 = vmatpush1.msra.mxu0 0.0
  %681 = vmatprep.subr.mxu0 0.0
  %682 = vmatpush1.msra.mxu0 0.0
  %683 = vmatprep.subr.mxu0 0.0
  %684 = vmatpush1.msra.mxu0 0.0
  %685 = vmatprep.subr.mxu0 0.0
  %686 = vmatpush1.msra.mxu0 0.0
  %687 = vmatprep.subr.mxu0 0.0
  %688 = vmatpush1.msra.mxu0 0.0
  %689 = vmatprep.subr.mxu0 0.0
  %690 = vmatpush1.msra.mxu0 0.0
  %691 = vmatprep.subr.mxu0 0.0
  %692 = vmatpush1.msra.mxu0 0.0
  %693 = vmatprep.subr.mxu0 0.0
  %694 = vmatpush1.msra.mxu0 0.0
  %695 = vmatprep.subr.mxu0 0.0
  %696 = vmatpush1.msra.mxu0 0.0
  %697 = vmatprep.subr.mxu0 0.0
  %698 = vmatpush1.msra.mxu0 %v557
  %699 = vmatprep.subr.mxu0 0.0
  %700 = vmatpush1.msra.mxu0 %v556
  %701 = vmatprep.subr.mxu0 0.0
  %702 = vmatpush1.msra.mxu0 %v555
  %703 = vmatprep.subr.mxu0 0.0
  %704 = vmatpush1.msra.mxu0 %v554
  %705 = vmatprep.subr.mxu0 0.0
  %706 = vmatpush2.msra.mxu0 0.0
  %707 = vmatprep.subr.mxu0 0.0
  %708 = vmatpush2.msra.mxu0 0.0
  %709 = vmatprep.subr.mxu0 0.0
  %710 = vmatpush2.msra.mxu0 0.0
  %711 = vmatprep.subr.mxu0 0.0
  %712 = vmatpush2.msra.mxu0 0.0
  %713 = vmatprep.subr.mxu0 0.0
  %714 = vmatpush2.msra.mxu0 0.0
  %715 = vmatprep.subr.mxu0 0.0
  %716 = vmatpush2.msra.mxu0 0.0
  %717 = vmatprep.subr.mxu0 0.0
  %718 = vmatpush2.msra.mxu0 0.0
  %719 = vmatprep.subr.mxu0 0.0
  %720 = vmatpush2.msra.mxu0 0.0
  %721 = vmatprep.subr.mxu0 0.0
  %722 = vmatpush2.msra.mxu0 0.0
  %723 = vmatprep.subr.mxu0 0.0
  %724 = vmatpush2.msra.mxu0 0.0
  %725 = vmatprep.subr.mxu0 0.0
  %726 = vmatpush2.msra.mxu0 0.0
  %727 = vmatprep.subr.mxu0 0.0
  %728 = vmatpush2.msra.mxu0 0.0
  %729 = vmatprep.subr.mxu0 0.0
  %730 = vmatpush2.msra.mxu0 0.0
  %731 = vmatprep.subr.mxu0 0.0
  %732 = vmatpush2.msra.mxu0 0.0
  %733 = vmatprep.subr.mxu0 0.0
  %734 = vmatpush2.msra.mxu0 0.0
  %735 = vmatprep.subr.mxu0 0.0
  %736 = vmatpush2.msra.mxu0 0.0
  %737 = vmatprep.mubr.f32.mxu0 0.0
  %738 = vmatmul.mubr.f32.gmra.mxu0 %v671
  %v739 = vpop.f32.mrf.mxu0
  %v740 = vadd.f32 %v668, %v739
  %v741 = vpop.f32.mrf.mxu0
  %742 = vdwg.mxu0
  %v743 = vmul.f32 %v661, %v740
  %v744 = vadd.f32 %v551, %v743
  %v745 = vadd.f32 %v661, 1.0
  %v746 = vsel %vm204, %v744, 0.0
  %747 = vadd.xlane.f32.xlu0 %v746
  %v748 = vpop.xlane.xlu0 %747
  %v749 = vmul.f32 %v748, %v298
  %v750 = vsub.f32 %v744, %v749
  %v751 = vmul.f32 %v750, %v750
  %v752 = vsel %vm204, %v751, 0.0
  %753 = vadd.xlane.f32.xlu0 %v752
  %v754 = vpop.xlane.xlu0 %753
  %v755 = vmul.f32 %v754, %v298
  %v756 = vadd.f32 %v755, 1e-06
  %v757 = vrsqrt.pop %v756
  %v758 = vmul.f32 %v750, %v757
  %760 = vrot.lane.b32.xlu0 %v758, 64
  %v761 = vpop.permute.xlu0 %760
  %v763 = vmul.f32 %v745, %v761
  %765 = vrot.lane.b32.xlu0 %v661, 32
  %v766 = vpop.permute.xlu0 %765
  %v768 = vadd.f32 %v763, %v766
  %v770 = vlaneseq
  %v771 = vshrl.u32 %v770, 7
  %v772 = vsub.s32 0, %v771
  %v773 = vrot.slane %v563, %v772
  %776 = vrot.lane.b32.xlu0 %v768, 64
  %v777 = vpop.permute.xlu0 %776
  %v778 = vsel %vm204, %v777, 0
  %780 = vmatprep.subr.mxu0 0.0
  %781 = vmatpush1.msra.mxu0 0.0
  %782 = vmatprep.subr.mxu0 0.0
  %783 = vmatpush1.msra.mxu0 0.0
  %784 = vmatprep.subr.mxu0 0.0
  %785 = vmatpush1.msra.mxu0 0.0
  %786 = vmatprep.subr.mxu0 0.0
  %787 = vmatpush1.msra.mxu0 0.0
  %788 = vmatprep.subr.mxu0 0.0
  %789 = vmatpush1.msra.mxu0 0.0
  %790 = vmatprep.subr.mxu0 0.0
  %791 = vmatpush1.msra.mxu0 0.0
  %792 = vmatprep.subr.mxu0 0.0
  %793 = vmatpush1.msra.mxu0 0.0
  %794 = vmatprep.subr.mxu0 0.0
  %795 = vmatpush1.msra.mxu0 0.0
  %796 = vmatprep.subr.mxu0 0.0
  %797 = vmatpush1.msra.mxu0 0.0
  %798 = vmatprep.subr.mxu0 0.0
  %799 = vmatpush1.msra.mxu0 0.0
  %800 = vmatprep.subr.mxu0 0.0
  %801 = vmatpush1.msra.mxu0 0.0
  %802 = vmatprep.subr.mxu0 0.0
  %803 = vmatpush1.msra.mxu0 0.0
  %804 = vmatprep.subr.mxu0 0.0
  %805 = vmatpush1.msra.mxu0 %v562
  %806 = vmatprep.subr.mxu0 0.0
  %807 = vmatpush1.msra.mxu0 %v561
  %808 = vmatprep.subr.mxu0 0.0
  %809 = vmatpush1.msra.mxu0 %v560
  %810 = vmatprep.subr.mxu0 0.0
  %811 = vmatpush1.msra.mxu0 %v559
  %812 = vmatprep.subr.mxu0 0.0
  %813 = vmatpush2.msra.mxu0 0.0
  %814 = vmatprep.subr.mxu0 0.0
  %815 = vmatpush2.msra.mxu0 0.0
  %816 = vmatprep.subr.mxu0 0.0
  %817 = vmatpush2.msra.mxu0 0.0
  %818 = vmatprep.subr.mxu0 0.0
  %819 = vmatpush2.msra.mxu0 0.0
  %820 = vmatprep.subr.mxu0 0.0
  %821 = vmatpush2.msra.mxu0 0.0
  %822 = vmatprep.subr.mxu0 0.0
  %823 = vmatpush2.msra.mxu0 0.0
  %824 = vmatprep.subr.mxu0 0.0
  %825 = vmatpush2.msra.mxu0 0.0
  %826 = vmatprep.subr.mxu0 0.0
  %827 = vmatpush2.msra.mxu0 0.0
  %828 = vmatprep.subr.mxu0 0.0
  %829 = vmatpush2.msra.mxu0 0.0
  %830 = vmatprep.subr.mxu0 0.0
  %831 = vmatpush2.msra.mxu0 0.0
  %832 = vmatprep.subr.mxu0 0.0
  %833 = vmatpush2.msra.mxu0 0.0
  %834 = vmatprep.subr.mxu0 0.0
  %835 = vmatpush2.msra.mxu0 0.0
  %836 = vmatprep.subr.mxu0 0.0
  %837 = vmatpush2.msra.mxu0 0.0
  %838 = vmatprep.subr.mxu0 0.0
  %839 = vmatpush2.msra.mxu0 0.0
  %840 = vmatprep.subr.mxu0 0.0
  %841 = vmatpush2.msra.mxu0 0.0
  %842 = vmatprep.subr.mxu0 0.0
  %843 = vmatpush2.msra.mxu0 0.0
  %844 = vmatprep.mubr.f32.mxu0 0.0
  %845 = vmatmul.mubr.f32.gmra.mxu0 %v778
  %v846 = vpop.f32.mrf.mxu0
  %v847 = vadd.f32 %v773, %v846
  %v848 = vpop.f32.mrf.mxu0
  %849 = vdwg.mxu0
  %v850 = vmul.f32 %v847, 0.5
  %v851 = vmul.f32 %v847, 0.044715
  %v852 = vmul.f32 %v851, %v847
  %v853 = vmul.f32 %v852, %v847
  %v854 = vadd.f32 %v847, %v853
  %v855 = vmul.f32 %v854, 0.7978846
  %v856 = vtanh.pop %v855
  %v857 = vadd.f32 %v856, 1.0
  %v858 = vmul.f32 %v850, %v857
  %v860 = vlaneseq
  %v861 = vshrl.u32 %v860, 7
  %v862 = vsub.s32 0, %v861
  %v863 = vrot.slane %v580, %v862
  %865 = vmatprep.subr.mxu0 0.0
  %866 = vmatpush1.msra.mxu0 %v579
  %867 = vmatprep.subr.mxu0 0.0
  %868 = vmatpush1.msra.mxu0 %v578
  %869 = vmatprep.subr.mxu0 0.0
  %870 = vmatpush1.msra.mxu0 %v577
  %871 = vmatprep.subr.mxu0 0.0
  %872 = vmatpush1.msra.mxu0 %v576
  %873 = vmatprep.subr.mxu0 0.0
  %874 = vmatpush1.msra.mxu0 %v575
  %875 = vmatprep.subr.mxu0 0.0
  %876 = vmatpush1.msra.mxu0 %v574
  %877 = vmatprep.subr.mxu0 0.0
  %878 = vmatpush1.msra.mxu0 %v573
  %879 = vmatprep.subr.mxu0 0.0
  %880 = vmatpush1.msra.mxu0 %v572
  %881 = vmatprep.subr.mxu0 0.0
  %882 = vmatpush1.msra.mxu0 %v571
  %883 = vmatprep.subr.mxu0 0.0
  %884 = vmatpush1.msra.mxu0 %v570
  %885 = vmatprep.subr.mxu0 0.0
  %886 = vmatpush1.msra.mxu0 %v569
  %887 = vmatprep.subr.mxu0 0.0
  %888 = vmatpush1.msra.mxu0 %v568
  %889 = vmatprep.subr.mxu0 0.0
  %890 = vmatpush1.msra.mxu0 %v567
  %891 = vmatprep.subr.mxu0 0.0
  %892 = vmatpush1.msra.mxu0 %v566
  %893 = vmatprep.subr.mxu0 0.0
  %894 = vmatpush1.msra.mxu0 %v565
  %895 = vmatprep.subr.mxu0 0.0
  %896 = vmatpush1.msra.mxu0 %v564
  %897 = vmatprep.subr.mxu0 0.0
  %898 = vmatpush2.msra.mxu0 0.0
  %899 = vmatprep.subr.mxu0 0.0
  %900 = vmatpush2.msra.mxu0 0.0
  %901 = vmatprep.subr.mxu0 0.0
  %902 = vmatpush2.msra.mxu0 0.0
  %903 = vmatprep.subr.mxu0 0.0
  %904 = vmatpush2.msra.mxu0 0.0
  %905 = vmatprep.subr.mxu0 0.0
  %906 = vmatpush2.msra.mxu0 0.0
  %907 = vmatprep.subr.mxu0 0.0
  %908 = vmatpush2.msra.mxu0 0.0
  %909 = vmatprep.subr.mxu0 0.0
  %910 = vmatpush2.msra.mxu0 0.0
  %911 = vmatprep.subr.mxu0 0.0
  %912 = vmatpush2.msra.mxu0 0.0
  %913 = vmatprep.subr.mxu0 0.0
  %914 = vmatpush2.msra.mxu0 0.0
  %915 = vmatprep.subr.mxu0 0.0
  %916 = vmatpush2.msra.mxu0 0.0
  %917 = vmatprep.subr.mxu0 0.0
  %918 = vmatpush2.msra.mxu0 0.0
  %919 = vmatprep.subr.mxu0 0.0
  %920 = vmatpush2.msra.mxu0 0.0
  %921 = vmatprep.subr.mxu0 0.0
  %922 = vmatpush2.msra.mxu0 0.0
  %923 = vmatprep.subr.mxu0 0.0
  %924 = vmatpush2.msra.mxu0 0.0
  %925 = vmatprep.subr.mxu0 0.0
  %926 = vmatpush2.msra.mxu0 0.0
  %927 = vmatprep.subr.mxu0 0.0
  %928 = vmatpush2.msra.mxu0 0.0
  %929 = vmatprep.mubr.f32.mxu0 0.0
  %930 = vmatmul.mubr.f32.gmra.mxu0 %v858
  %v931 = vpop.f32.mrf.mxu0
  %v932 = vadd.f32 %v863, %v931
  %v933 = vpop.f32.mrf.mxu0
  %934 = vdwg.mxu0
  %936 = vrot.lane.b32.xlu0 %v932, 96
  %v937 = vpop.permute.xlu0 %936
  %v939 = vmul.f32 %v661, %v937
  %941 = vrot.lane.b32.xlu0 %v939, 32
  %v942 = vpop.permute.xlu0 %941
  %v944 = vadd.f32 %v744, %v942
  %945 = vst.msk [vmem:[%s20] sm:$0xff] %vm204, %v944
  // Predicated region
  $region78: #{flux_forward.11} parent=0 // pred_check
    _
  $region79: #{flux_forward.11} parent=0 // pred_check_branch
    %947 = sbr.rel (0) target = $region81
  $region80: #{flux_forward.11} parent=0 // pred_region
    _
  $region81: #{flux_forward.11} parent=0 // pred_fallthru
    _
  // Predicated region
  $region82: #{flux_forward.11} parent=0 // pred_check
    _
  $region83: #{flux_forward.11} parent=0 // pred_check_branch
    %949 = sbr.rel (0) target = $region85
  $region84: #{flux_forward.11} parent=0 // pred_region
    _
  $region85: #{flux_forward.11} parent=0 // pred_fallthru
    _
  // Predicated region
  $region86: #{flux_forward.11} parent=0 // pred_check
    _
  $region87: #{flux_forward.11} parent=0 // pred_check_branch
    %951 = sbr.rel (0) target = $region89
  $region88: #{flux_forward.11} parent=0 // pred_region
    _
  $region89: #{flux_forward.11} parent=0 // pred_fallthru
    _
  // Predicated region
  $region90: #{flux_forward.11} parent=0 // pred_check
    _
  $region91: #{flux_forward.11} parent=0 // pred_check_branch
    %953 = sbr.rel (0) target = $region93
  $region92: #{flux_forward.11} parent=0 // pred_region
    _
  $region93: #{flux_forward.11} parent=0 // pred_fallthru
    _

// kernel: flux_forward.12
$region0: #{flux_forward.12}
  #allocation0 [shape = 'u32[]', space=smem, size = 0x4, offset = 0x4, fixed_abs, tag = 'smem constant byte address 0x4 - core index']
  #allocation1 [shape = 'u32[144,128]{1,0:T(1,128)}', space=vmem, size = 0x12000, scoped, tag = 'internal scratch']
  %s0 = inlined_call_operand.vmem [shape: f32[2,32], index: 0, kind: input, shape index: {}]
  %s1 = inlined_call_operand.vmem [shape: f32[32,96], index: 1, kind: input, shape index: {}]
  %s2 = inlined_call_operand.vmem [shape: f32[1,96], index: 2, kind: input, shape index: {}]
  %s3 = inlined_call_operand.vmem [shape: f32[24,32], index: 3, kind: input, shape index: {}]
  %s4 = inlined_call_operand.vmem [shape: f32[24,2], index: 4, kind: input, shape index: {}]
  %s5 = inlined_call_operand.vmem [shape: f32[32,224], index: 5, kind: input, shape index: {}]
  %s6 = inlined_call_operand.vmem [shape: f32[1,224], index: 6, kind: input, shape index: {}]
  %s7 = inlined_call_operand.vmem [shape: f32[224,224], index: 7, kind: input, shape index: {}]
  %s8 = inlined_call_operand.vmem [shape: f32[1,224], index: 8, kind: input, shape index: {}]
  %s9 = inlined_call_operand.vmem [shape: f32[1,224], index: 9, kind: input, shape index: {}]
  %s10 = inlined_call_operand.vmem [shape: f32[24,224], index: 10, kind: output, shape index: {0}]
  %s11 = inlined_call_operand.vmem [shape: f32[2,96], index: 11, kind: output, shape index: {1}]
  %12 = xla_tuple %s10, %s11
  %s13 = sld [smem:[#allocation0]]
  $region58: #{flux_forward.12} parent=0
    _
  %s15 = ssub.s32 1, %s13
  %s16 = scalar_select 0, %s15, %s13
  // Predicated region
  $region2: #{flux_forward.12} parent=0 // pred_check
    _
  $region3: #{flux_forward.12} parent=0 // pred_check_branch
    %18 = sbr.rel (0) target = $region5
  $region4: #{flux_forward.12} parent=0 // pred_region
    _
  $region5: #{flux_forward.12} parent=0 // pred_fallthru
    _
  // Predicated region
  $region6: #{flux_forward.12} parent=0 // pred_check
    _
  $region7: #{flux_forward.12} parent=0 // pred_check_branch
    %20 = sbr.rel (0) target = $region9
  $region8: #{flux_forward.12} parent=0 // pred_region
    _
  $region9: #{flux_forward.12} parent=0 // pred_fallthru
    _
  // Predicated region
  $region10: #{flux_forward.12} parent=0 // pred_check
    _
  $region11: #{flux_forward.12} parent=0 // pred_check_branch
    %22 = sbr.rel (0) target = $region13
  $region12: #{flux_forward.12} parent=0 // pred_region
    _
  $region13: #{flux_forward.12} parent=0 // pred_fallthru
    _
  // Predicated region
  $region14: #{flux_forward.12} parent=0 // pred_check
    _
  $region15: #{flux_forward.12} parent=0 // pred_check_branch
    %24 = sbr.rel (0) target = $region17
  $region16: #{flux_forward.12} parent=0 // pred_region
    _
  $region17: #{flux_forward.12} parent=0 // pred_fallthru
    _
  // Predicated region
  $region18: #{flux_forward.12} parent=0 // pred_check
    _
  $region19: #{flux_forward.12} parent=0 // pred_check_branch
    %26 = sbr.rel (0) target = $region21
  $region20: #{flux_forward.12} parent=0 // pred_region
    _
  $region21: #{flux_forward.12} parent=0 // pred_fallthru
    _
  // Predicated region
  $region22: #{flux_forward.12} parent=0 // pred_check
    _
  $region23: #{flux_forward.12} parent=0 // pred_check_branch
    %28 = sbr.rel (0) target = $region25
  $region24: #{flux_forward.12} parent=0 // pred_region
    _
  $region25: #{flux_forward.12} parent=0 // pred_fallthru
    _
  // Predicated region
  $region26: #{flux_forward.12} parent=0 // pred_check
    _
  $region27: #{flux_forward.12} parent=0 // pred_check_branch
    %30 = sbr.rel (0) target = $region29
  $region28: #{flux_forward.12} parent=0 // pred_region
    _
  $region29: #{flux_forward.12} parent=0 // pred_fallthru
    _
  // Predicated region
  $region30: #{flux_forward.12} parent=0 // pred_check
    _
  $region31: #{flux_forward.12} parent=0 // pred_check_branch
    %32 = sbr.rel (0) target = $region33
  $region32: #{flux_forward.12} parent=0 // pred_region
    _
  $region33: #{flux_forward.12} parent=0 // pred_fallthru
    _
  // Predicated region
  $region34: #{flux_forward.12} parent=0 // pred_check
    _
  $region35: #{flux_forward.12} parent=0 // pred_check_branch
    %34 = sbr.rel (0) target = $region37
  $region36: #{flux_forward.12} parent=0 // pred_region
    _
  $region37: #{flux_forward.12} parent=0 // pred_fallthru
    _
  // Predicated region
  $region38: #{flux_forward.12} parent=0 // pred_check
    _
  $region39: #{flux_forward.12} parent=0 // pred_check_branch
    %36 = sbr.rel (0) target = $region41
  $region40: #{flux_forward.12} parent=0 // pred_region
    _
  $region41: #{flux_forward.12} parent=0 // pred_fallthru
    _
  %v37 = vld [vmem:[%s0] sm:$0x3]
  %v38 = vxor.u32 %v37, 2147483648
  %v39 = vmul.f32 %v38, 1.442695
  %v40 = vpow.pop %v39
  %v41 = vadd.f32 %v40, 1.0
  %v42 = vrcp.pop %v41
  %v43 = vmul.f32 1.0, %v42
  %v44 = vmul.f32 %v37, %v43
  %v45 = vld [vmem:[%s1] sm:$0xff]
  %v46 = vld [vmem:[%s1 + $0x8] sm:$0xff]
  %v47 = vld [vmem:[%s1 + $0x10] sm:$0xff]
  %v48 = vld [vmem:[%s1 + $0x18] sm:$0xff]
  %v49 = vld [vmem:[%s2] sm:$0x1]
  %v51 = vlaneseq
  %v52 = vshrl.u32 %v51, 7
  %v53 = vsub.s32 0, %v52
  %v54 = vrot.slane %v49, %v53
  %vm56 = vcmask 261120
  %v58 = vsel %vm56, %v44, 0
  %60 = vmatprep.subr.mxu0 0.0
  %61 = vmatpush1.msra.mxu0 0.0
  %62 = vmatprep.subr.mxu0 0.0
  %63 = vmatpush1.msra.mxu0 0.0
  %64 = vmatprep.subr.mxu0 0.0
  %65 = vmatpush1.msra.mxu0 0.0
  %66 = vmatprep.subr.mxu0 0.0
  %67 = vmatpush1.msra.mxu0 0.0
  %68 = vmatprep.subr.mxu0 0.0
  %69 = vmatpush1.msra.mxu0 0.0
  %70 = vmatprep.subr.mxu0 0.0
  %71 = vmatpush1.msra.mxu0 0.0
  %72 = vmatprep.subr.mxu0 0.0
  %73 = vmatpush1.msra.mxu0 0.0
  %74 = vmatprep.subr.mxu0 0.0
  %75 = vmatpush1.msra.mxu0 0.0
  %76 = vmatprep.subr.mxu0 0.0
  %77 = vmatpush1.msra.mxu0 0.0
  %78 = vmatprep.subr.mxu0 0.0
  %79 = vmatpush1.msra.mxu0 0.0
  %80 = vmatprep.subr.mxu0 0.0
  %81 = vmatpush1.msra.mxu0 0.0
  %82 = vmatprep.subr.mxu0 0.0
  %83 = vmatpush1.msra.mxu0 0.0
  %84 = vmatprep.subr.mxu0 0.0
  %85 = vmatpush1.msra.mxu0 %v48
  %86 = vmatprep.subr.mxu0 0.0
  %87 = vmatpush1.msra.mxu0 %v47
  %88 = vmatprep.subr.mxu0 0.0
  %89 = vmatpush1.msra.mxu0 %v46
  %90 = vmatprep.subr.mxu0 0.0
  %91 = vmatpush1.msra.mxu0 %v45
  %92 = vmatprep.subr.mxu0 0.0
  %93 = vmatpush2.msra.mxu0 0.0
  %94 = vmatprep.subr.mxu0 0.0
  %95 = vmatpush2.msra.mxu0 0.0
  %96 = vmatprep.subr.mxu0 0.0
  %97 = vmatpush2.msra.mxu0 0.0
  %98 = vmatprep.subr.mxu0 0.0
  %99 = vmatpush2.msra.mxu0 0.0
  %100 = vmatprep.subr.mxu0 0.0
  %101 = vmatpush2.msra.mxu0 0.0
  %102 = vmatprep.subr.mxu0 0.0
  %103 = vmatpush2.msra.mxu0 0.0
  %104 = vmatprep.subr.mxu0 0.0
  %105 = vmatpush2.msra.mxu0 0.0
  %106 = vmatprep.subr.mxu0 0.0
  %107 = vmatpush2.msra.mxu0 0.0
  %108 = vmatprep.subr.mxu0 0.0
  %109 = vmatpush2.msra.mxu0 0.0
  %110 = vmatprep.subr.mxu0 0.0
  %111 = vmatpush2.msra.mxu0 0.0
  %112 = vmatprep.subr.mxu0 0.0
  %113 = vmatpush2.msra.mxu0 0.0
  %114 = vmatprep.subr.mxu0 0.0
  %115 = vmatpush2.msra.mxu0 0.0
  %116 = vmatprep.subr.mxu0 0.0
  %117 = vmatpush2.msra.mxu0 0.0
  %118 = vmatprep.subr.mxu0 0.0
  %119 = vmatpush2.msra.mxu0 0.0
  %120 = vmatprep.subr.mxu0 0.0
  %121 = vmatpush2.msra.mxu0 0.0
  %122 = vmatprep.subr.mxu0 0.0
  %123 = vmatpush2.msra.mxu0 0.0
  %124 = vmatprep.mubr.f32.mxu0 0.0
  %125 = vmatmul.mubr.f32.gmra.mxu0 %v58
  %v126 = vpop.f32.mrf.mxu0
  %v127 = vadd.f32 %v54, %v126
  %v128 = vpop.f32.mrf.mxu0
  %129 = vdwg.mxu0
  %vm130 = vcmask 779264
  %131 = vst.msk [vmem:[%s11] sm:$0x3] %vm130, %v127
  %v132 = vld [vmem:[%s4] sm:$0xff]
  %v133 = vld [vmem:[%s4 + $0x8] sm:$0xff]
  %v134 = vld [vmem:[%s4 + $0x10] sm:$0xff]
  %vm135 = vcmask 15360
  %v137 = vsel %vm135, %v132, 0
  %v140 = vsel %vm135, %v133, 0
  %v143 = vsel %vm135, %v134, 0
  %vm145 = vcmask 1041408
  %v147 = vsel %vm145, %v127, 0
  %149 = vmatprep.subr.mxu0 0.0
  %150 = vmatpush1.msra.mxu0 0.0
  %151 = vmatprep.subr.mxu0 0.0
  %152 = vmatpush1.msra.mxu0 0.0
  %153 = vmatprep.subr.mxu0 0.0
  %154 = vmatpush1.msra.mxu0 0.0
  %155 = vmatprep.subr.mxu0 0.0
  %156 = vmatpush1.msra.mxu0 0.0
  %157 = vmatprep.subr.mxu0 0.0
  %158 = vmatpush1.msra.mxu0 0.0
  %159 = vmatprep.subr.mxu0 0.0
  %160 = vmatpush1.msra.mxu0 0.0
  %161 = vmatprep.subr.mxu0 0.0
  %162 = vmatpush1.msra.mxu0 0.0
  %163 = vmatprep.subr.mxu0 0.0
  %164 = vmatpush1.msra.mxu0 0.0
  %165 = vmatprep.subr.mxu0 0.0
  %166 = vmatpush1.msra.mxu0 0.0
  %167 = vmatprep.subr.mxu0 0.0
  %168 = vmatpush1.msra.mxu0 0.0
  %169 = vmatprep.subr.mxu0 0.0
  %170 = vmatpush1.msra.mxu0 0.0
  %171 = vmatprep.subr.mxu0 0.0
  %172 = vmatpush1.msra.mxu0 0.0
  %173 = vmatprep.subr.mxu0 0.0
  %174 = vmatpush1.msra.mxu0 0.0
  %175 = vmatprep.subr.mxu0 0.0
  %176 = vmatpush1.msra.mxu0 0.0
  %177 = vmatprep.subr.mxu0 0.0
  %178 = vmatpush1.msra.mxu0 0.0
  %179 = vmatprep.subr.mxu0 0.0
  %180 = vmatpush1.msra.mxu0 %v147
  %181 = vmatprep.subr.mxu0 0.0
  %182 = vmatpush2.msra.mxu0 0.0
  %183 = vmatprep.subr.mxu0 0.0
  %184 = vmatpush2.msra.mxu0 0.0
  %185 = vmatprep.subr.mxu0 0.0
  %186 = vmatpush2.msra.mxu0 0.0
  %187 = vmatprep.subr.mxu0 0.0
  %188 = vmatpush2.msra.mxu0 0.0
  %189 = vmatprep.subr.mxu0 0.0
  %190 = vmatpush2.msra.mxu0 0.0
  %191 = vmatprep.subr.mxu0 0.0
  %192 = vmatpush2.msra.mxu0 0.0
  %193 = vmatprep.subr.mxu0 0.0
  %194 = vmatpush2.msra.mxu0 0.0
  %195 = vmatprep.subr.mxu0 0.0
  %196 = vmatpush2.msra.mxu0 0.0
  %197 = vmatprep.subr.mxu0 0.0
  %198 = vmatpush2.msra.mxu0 0.0
  %199 = vmatprep.subr.mxu0 0.0
  %200 = vmatpush2.msra.mxu0 0.0
  %201 = vmatprep.subr.mxu0 0.0
  %202 = vmatpush2.msra.mxu0 0.0
  %203 = vmatprep.subr.mxu0 0.0
  %204 = vmatpush2.msra.mxu0 0.0
  %205 = vmatprep.subr.mxu0 0.0
  %206 = vmatpush2.msra.mxu0 0.0
  %207 = vmatprep.subr.mxu0 0.0
  %208 = vmatpush2.msra.mxu0 0.0
  %209 = vmatprep.subr.mxu0 0.0
  %210 = vmatpush2.msra.mxu0 0.0
  %211 = vmatprep.subr.mxu0 0.0
  %212 = vmatpush2.msra.mxu0 0.0
  %213 = vmatprep.mubr.f32.mxu0 0.0
  %214 = vmatmul.mubr.f32.gmra.mxu0 %v137
  %v215 = vpop.f32.mrf.mxu0
  %v216 = vadd.f32 0.0, %v215
  %v217 = vpop.f32.mrf.mxu0
  %218 = vmatprep.mubr.f32.mxu0 0.0
  %219 = vmatmul.mubr.f32.gmra.mxu0 %v140
  %v220 = vpop.f32.mrf.mxu0
  %v221 = vadd.f32 0.0, %v220
  %v222 = vpop.f32.mrf.mxu0
  %223 = vmatprep.mubr.f32.mxu0 0.0
  %224 = vmatmul.mubr.f32.gmra.mxu0 %v143
  %v225 = vpop.f32.mrf.mxu0
  %v226 = vadd.f32 0.0, %v225
  %v227 = vpop.f32.mrf.mxu0
  %228 = vdwg.mxu0
  %v229 = vadd.f32 %v216, 1.0
  %v230 = vadd.f32 %v221, 1.0
  %v231 = vadd.f32 %v226, 1.0
  %v232 = vld [vmem:[%s3] sm:$0xff]
  %v233 = vld [vmem:[%s3 + $0x8] sm:$0xff]
  %v234 = vld [vmem:[%s3 + $0x10] sm:$0xff]
  %v235 = vsel %vm56, %v232, 0.0
  %236 = vadd.xlane.f32.xlu0 %v235
  %v237 = vpop.xlane.xlu0 %236
  %v238 = vsel %vm56, %v233, 0.0
  %239 = vadd.xlane.f32.xlu0 %v238
  %v240 = vpop.xlane.xlu0 %239
  %v241 = vsel %vm56, %v234, 0.0
  %242 = vadd.xlane.f32.xlu0 %v241
  %v243 = vpop.xlane.xlu0 %242
  %v244 = vrcp.pop 32.0
  %v245 = vmul.f32 %v237, %v244
  %v246 = vmul.f32 %v240, %v244
  %v247 = vmul.f32 %v243, %v244
  %v248 = vsub.f32 %v232, %v245
  %v249 = vsub.f32 %v233, %v246
  %v250 = vsub.f32 %v234, %v247
  %v251 = vmul.f32 %v248, %v248
  %v252 = vmul.f32 %v249, %v249
  %v253 = vmul.f32 %v250, %v250
  %v254 = vsel %vm56, %v251, 0.0
  %255 = vadd.xlane.f32.xlu0 %v254
  %v256 = vpop.xlane.xlu0 %255
  %v257 = vsel %vm56, %v252, 0.0
  %258 = vadd.xlane.f32.xlu0 %v257
  %v259 = vpop.xlane.xlu0 %258
  %v260 = vsel %vm56, %v253, 0.0
  %261 = vadd.xlane.f32.xlu0 %v260
  %v262 = vpop.xlane.xlu0 %261
  %v263 = vmul.f32 %v256, %v244
  %v264 = vmul.f32 %v259, %v244
  %v265 = vmul.f32 %v262, %v244
  %v266 = vadd.f32 %v263, 1e-06
  %v267 = vadd.f32 %v264, 1e-06
  %v268 = vadd.f32 %v265, 1e-06
  %v269 = vrsqrt.pop %v266
  %v270 = vrsqrt.pop %v267
  %v271 = vrsqrt.pop %v268
  %v272 = vmul.f32 %v248, %v269
  %v273 = vmul.f32 %v249, %v270
  %v274 = vmul.f32 %v250, %v271
  %278 = vrot.lane.b32.xlu0 %v272, 32
  %v279 = vpop.permute.xlu0 %278
  %280 = vrot.lane.b32.xlu0 %v273, 32
  %v281 = vpop.permute.xlu0 %280
  %282 = vrot.lane.b32.xlu0 %v274, 32
  %v283 = vpop.permute.xlu0 %282
  %v287 = vmul.f32 %v229, %v279
  %v288 = vmul.f32 %v230, %v281
  %v289 = vmul.f32 %v231, %v283
  %293 = vrot.lane.b32.xlu0 %v216, 32
  %v294 = vpop.permute.xlu0 %293
  %295 = vrot.lane.b32.xlu0 %v221, 32
  %v296 = vpop.permute.xlu0 %295
  %297 = vrot.lane.b32.xlu0 %v226, 32
  %v298 = vpop.permute.xlu0 %297
  %v302 = vadd.f32 %v287, %v294
  %v303 = vadd.f32 %v288, %v296
  %v304 = vadd.f32 %v289, %v298
  %v305 = vld [vmem:[%s5] sm:$0xff]
  %v306 = vld [vmem:[%s5 + $0x8] sm:$0xff]
  %v307 = vld [vmem:[%s5 + $0x10] sm:$0xff]
  %v308 = vld [vmem:[%s5 + $0x18] sm:$0xff]
  %v309 = vld [vmem:[%s5 + $0x20] sm:$0xff]
  %v310 = vld [vmem:[%s5 + $0x28] sm:$0xff]
  %v311 = vld [vmem:[%s5 + $0x30] sm:$0xff]
  %v312 = vld [vmem:[%s5 + $0x38] sm:$0xff]
  %v313 = vld [vmem:[%s6] sm:$0x3]
  %v315 = vlaneseq
  %v316 = vshrl.u32 %v315, 7
  %v317 = vsub.s32 0, %v316
  %v318 = vrot.slane %v313, %v317
  %v319 = vlaneseq
  %v320 = vshrl.u32 %v319, 7
  %v321 = vsub.s32 1, %v320
  %v322 = vrot.slane %v313, %v321
  %328 = vrot.lane.b32.xlu0 %v302, 96
  %v329 = vpop.permute.xlu0 %328
  %330 = vrot.lane.b32.xlu0 %v303, 96
  %v331 = vpop.permute.xlu0 %330
  %332 = vrot.lane.b32.xlu0 %v304, 96
  %v333 = vpop.permute.xlu0 %332
  %v334 = vsel %vm56, %v329, 0
  %v336 = vsel %vm56, %v331, 0
  %v338 = vsel %vm56, %v333, 0
  %340 = vmatprep.subr.mxu0 0.0
  %341 = vmatpush1.msra.mxu0 0.0
  %342 = vmatprep.subr.mxu0 0.0
  %343 = vmatpush1.msra.mxu0 0.0
  %344 = vmatprep.subr.mxu0 0.0
  %345 = vmatpush1.msra.mxu0 0.0
  %346 = vmatprep.subr.mxu0 0.0
  %347 = vmatpush1.msra.mxu0 0.0
  %348 = vmatprep.subr.mxu0 0.0
  %349 = vmatpush1.msra.mxu0 0.0
  %350 = vmatprep.subr.mxu0 0.0
  %351 = vmatpush1.msra.mxu0 0.0
  %352 = vmatprep.subr.mxu0 0.0
  %353 = vmatpush1.msra.mxu0 0.0
  %354 = vmatprep.subr.mxu0 0.0
  %355 = vmatpush1.msra.mxu0 0.0
  %356 = vmatprep.subr.mxu0 0.0
  %357 = vmatpush1.msra.mxu0 0.0
  %358 = vmatprep.subr.mxu0 0.0
  %359 = vmatpush1.msra.mxu0 0.0
  %360 = vmatprep.subr.mxu0 0.0
  %361 = vmatpush1.msra.mxu0 0.0
  %362 = vmatprep.subr.mxu0 0.0
  %363 = vmatpush1.msra.mxu0 0.0
  %364 = vmatprep.subr.mxu0 %v312
  %365 = vmatpush1.msra.mxu0 %v311
  %366 = vmatprep.subr.mxu0 %v310
  %367 = vmatpush1.msra.mxu0 %v309
  %368 = vmatprep.subr.mxu0 %v308
  %369 = vmatpush1.msra.mxu0 %v307
  %370 = vmatprep.subr.mxu0 %v306
  %371 = vmatpush1.msra.mxu0 %v305
  %372 = vmatprep.subr.mxu0 0.0
  %373 = vmatpush2.msra.mxu0 0.0
  %374 = vmatprep.subr.mxu0 0.0
  %375 = vmatpush2.msra.mxu0 0.0
  %376 = vmatprep.subr.mxu0 0.0
  %377 = vmatpush2.msra.mxu0 0.0
  %378 = vmatprep.subr.mxu0 0.0
  %379 = vmatpush2.msra.mxu0 0.0
  %380 = vmatprep.subr.mxu0 0.0
  %381 = vmatpush2.msra.mxu0 0.0
  %382 = vmatprep.subr.mxu0 0.0
  %383 = vmatpush2.msra.mxu0 0.0
  %384 = vmatprep.subr.mxu0 0.0
  %385 = vmatpush2.msra.mxu0 0.0
  %386 = vmatprep.subr.mxu0 0.0
  %387 = vmatpush2.msra.mxu0 0.0
  %388 = vmatprep.subr.mxu0 0.0
  %389 = vmatpush2.msra.mxu0 0.0
  %390 = vmatprep.subr.mxu0 0.0
  %391 = vmatpush2.msra.mxu0 0.0
  %392 = vmatprep.subr.mxu0 0.0
  %393 = vmatpush2.msra.mxu0 0.0
  %394 = vmatprep.subr.mxu0 0.0
  %395 = vmatpush2.msra.mxu0 0.0
  %396 = vmatprep.subr.mxu0 0.0
  %397 = vmatpush2.msra.mxu0 0.0
  %398 = vmatprep.subr.mxu0 0.0
  %399 = vmatpush2.msra.mxu0 0.0
  %400 = vmatprep.subr.mxu0 0.0
  %401 = vmatpush2.msra.mxu0 0.0
  %402 = vmatprep.subr.mxu0 0.0
  %403 = vmatpush2.msra.mxu0 0.0
  %404 = vmatprep.mubr.f32.mxu0 0.0
  %405 = vmatmul.mubr.f32.gmra.mxu0 %v334
  %v406 = vpop.f32.mrf.mxu0
  %v407 = vadd.f32 %v318, %v406
  %v408 = vpop.f32.mrf.mxu0
  %v409 = vadd.f32 %v322, %v408
  %410 = vmatprep.mubr.f32.mxu0 0.0
  %411 = vmatmul.mubr.f32.gmra.mxu0 %v336
  %v412 = vpop.f32.mrf.mxu0
  %v413 = vadd.f32 %v318, %v412
  %v414 = vpop.f32.mrf.mxu0
  %v415 = vadd.f32 %v322, %v414
  %416 = vmatprep.mubr.f32.mxu0 0.0
  %417 = vmatmul.mubr.f32.gmra.mxu0 %v338
  %v418 = vpop.f32.mrf.mxu0
  %v419 = vadd.f32 %v318, %v418
  %v420 = vpop.f32.mrf.mxu0
  %v421 = vadd.f32 %v322, %v420
  %422 = vdwg.mxu0
  %v423 = vmul.f32 %v407, %v407
  %v424 = vmul.f32 %v409, %v409
  %v425 = vmul.f32 %v413, %v413
  %v426 = vmul.f32 %v415, %v415
  %v427 = vmul.f32 %v419, %v419
  %v428 = vmul.f32 %v421, %v421
  %v429 = vld [vmem:[%s7] sm:$0xff]
  %v430 = vld [vmem:[%s7 + $0x8] sm:$0xff]
  %v431 = vld [vmem:[%s7 + $0x10] sm:$0xff]
  %v432 = vld [vmem:[%s7 + $0x18] sm:$0xff]
  %v433 = vld [vmem:[%s7 + $0x20] sm:$0xff]
  %v434 = vld [vmem:[%s7 + $0x28] sm:$0xff]
  %v435 = vld [vmem:[%s7 + $0x30] sm:$0xff]
  %v436 = vld [vmem:[%s7 + $0x38] sm:$0xff]
  %v437 = vld [vmem:[%s7 + $0x40] sm:$0xff]
  %v438 = vld [vmem:[%s7 + $0x48] sm:$0xff]
  %v439 = vld [vmem:[%s7 + $0x50] sm:$0xff]
  %v440 = vld [vmem:[%s7 + $0x58] sm:$0xff]
  %v441 = vld [vmem:[%s7 + $0x60] sm:$0xff]
  %v442 = vld [vmem:[%s7 + $0x68] sm:$0xff]
  %v443 = vld [vmem:[%s7 + $0x70] sm:$0xff]
  %v444 = vld [vmem:[%s7 + $0x78] sm:$0xff]
  %v445 = vld [vmem:[%s7 + $0x80] sm:$0xff]
  %v446 = vld [vmem:[%s7 + $0x88] sm:$0xff]
  %v447 = vld [vmem:[%s7 + $0x90] sm:$0xff]
  %v448 = vld [vmem:[%s7 + $0x98] sm:$0xff]
  %v449 = vld [vmem:[%s7 + $0xa0] sm:$0xff]
  %v450 = vld [vmem:[%s7 + $0xa8] sm:$0xff]
  %v451 = vld [vmem:[%s7 + $0xb0] sm:$0xff]
  %v452 = vld [vmem:[%s7 + $0xb8] sm:$0xff]
  %v453 = vld [vmem:[%s7 + $0xc0] sm:$0xff]
  %v454 = vld [vmem:[%s7 + $0xc8] sm:$0xff]
  %v455 = vld [vmem:[%s7 + $0xd0] sm:$0xff]
  %v456 = vld [vmem:[%s7 + $0xd8] sm:$0xff]
  %v457 = vld [vmem:[%s7 + $0xe0] sm:$0xff]
  %v458 = vld [vmem:[%s7 + $0xe8] sm:$0xff]
  %v459 = vld [vmem:[%s7 + $0xf0] sm:$0xff]
  %v460 = vld [vmem:[%s7 + $0xf8] sm:$0xff]
  %v461 = vld [vmem:[%s7 + $0x100] sm:$0xff]
  %v462 = vld [vmem:[%s7 + $0x108] sm:$0xff]
  %v463 = vld [vmem:[%s7 + $0x110] sm:$0xff]
  %v464 = vld [vmem:[%s7 + $0x118] sm:$0xff]
  %v465 = vld [vmem:[%s7 + $0x120] sm:$0xff]
  %v466 = vld [vmem:[%s7 + $0x128] sm:$0xff]
  %v467 = vld [vmem:[%s7 + $0x130] sm:$0xff]
  %v468 = vld [vmem:[%s7 + $0x138] sm:$0xff]
  %v469 = vld [vmem:[%s7 + $0x140] sm:$0xff]
  %v470 = vld [vmem:[%s7 + $0x148] sm:$0xff]
  %v471 = vld [vmem:[%s7 + $0x150] sm:$0xff]
  %v472 = vld [vmem:[%s7 + $0x158] sm:$0xff]
  %v473 = vld [vmem:[%s7 + $0x160] sm:$0xff]
  %v474 = vld [vmem:[%s7 + $0x168] sm:$0xff]
  %v475 = vld [vmem:[%s7 + $0x170] sm:$0xff]
  %v476 = vld [vmem:[%s7 + $0x178] sm:$0xff]
  %v477 = vld [vmem:[%s7 + $0x180] sm:$0xff]
  %v478 = vld [vmem:[%s7 + $0x188] sm:$0xff]
  %v479 = vld [vmem:[%s7 + $0x190] sm:$0xff]
  %v480 = vld [vmem:[%s7 + $0x198] sm:$0xff]
  %v481 = vld [vmem:[%s7 + $0x1a0] sm:$0xff]
  %v482 = vld [vmem:[%s7 + $0x1a8] sm:$0xff]
  %v483 = vld [vmem:[%s7 + $0x1b0] sm:$0xff]
  %v484 = vld [vmem:[%s7 + $0x1b8] sm:$0xff]
  %vm485 = vcmask 785408
  %v487 = vsel %vm485, %v424, 0
  %v490 = vsel %vm485, %v426, 0
  %v493 = vsel %vm485, %v428, 0
  %495 = vmatprep.subr.mxu0 %v460
  %496 = vmatpush1.msra.mxu0 %v459
  %497 = vmatprep.subr.mxu0 %v458
  %498 = vmatpush1.msra.mxu0 %v457
  %499 = vmatprep.subr.mxu0 %v456
  %500 = vmatpush1.msra.mxu0 %v455
  %501 = vmatprep.subr.mxu0 %v454
  %502 = vmatpush1.msra.mxu0 %v453
  %503 = vmatprep.subr.mxu0 %v452
  %504 = vmatpush1.msra.mxu0 %v451
  %505 = vmatprep.subr.mxu0 %v450
  %506 = vmatpush1.msra.mxu0 %v449
  %507 = vmatprep.subr.mxu0 %v448
  %508 = vmatpush1.msra.mxu0 %v447
  %509 = vmatprep.subr.mxu0 %v446
  %510 = vmatpush1.msra.mxu0 %v445
  %511 = vmatprep.subr.mxu0 %v444
  %512 = vmatpush1.msra.mxu0 %v443
  %513 = vmatprep.subr.mxu0 %v442
  %514 = vmatpush1.msra.mxu0 %v441
  %515 = vmatprep.subr.mxu0 %v440
  %516 = vmatpush1.msra.mxu0 %v439
  %517 = vmatprep.subr.mxu0 %v438
  %518 = vmatpush1.msra.mxu0 %v437
  %519 = vmatprep.subr.mxu0 %v436
  %520 = vmatpush1.msra.mxu0 %v435
  %521 = vmatprep.subr.mxu0 %v434
  %522 = vmatpush1.msra.mxu0 %v433
  %523 = vmatprep.subr.mxu0 %v432
  %524 = vmatpush1.msra.mxu0 %v431
  %525 = vmatprep.subr.mxu0 %v430
  %526 = vmatpush1.msra.mxu0 %v429
  %527 = vmatprep.subr.mxu0 0.0
  %528 = vmatpush2.msra.mxu0 0.0
  %529 = vmatprep.subr.mxu0 0.0
  %530 = vmatpush2.msra.mxu0 0.0
  %531 = vmatprep.subr.mxu0 0.0
  %532 = vmatpush2.msra.mxu0 0.0
  %533 = vmatprep.subr.mxu0 0.0
  %534 = vmatpush2.msra.mxu0 0.0
  %535 = vmatprep.subr.mxu0 %v484
  %536 = vmatpush2.msra.mxu0 %v483
  %537 = vmatprep.subr.mxu0 %v482
  %538 = vmatpush2.msra.mxu0 %v481
  %539 = vmatprep.subr.mxu0 %v480
  %540 = vmatpush2.msra.mxu0 %v479
  %541 = vmatprep.subr.mxu0 %v478
  %542 = vmatpush2.msra.mxu0 %v477
  %543 = vmatprep.subr.mxu0 %v476
  %544 = vmatpush2.msra.mxu0 %v475
  %545 = vmatprep.subr.mxu0 %v474
  %546 = vmatpush2.msra.mxu0 %v473
  %547 = vmatprep.subr.mxu0 %v472
  %548 = vmatpush2.msra.mxu0 %v471
  %549 = vmatprep.subr.mxu0 %v470
  %550 = vmatpush2.msra.mxu0 %v469
  %551 = vmatprep.subr.mxu0 %v468
  %552 = vmatpush2.msra.mxu0 %v467
  %553 = vmatprep.subr.mxu0 %v466
  %554 = vmatpush2.msra.mxu0 %v465
  %555 = vmatprep.subr.mxu0 %v464
  %556 = vmatpush2.msra.mxu0 %v463
  %557 = vmatprep.subr.mxu0 %v462
  %558 = vmatpush2.msra.mxu0 %v461
  %559 = vmatprep.mubr.f32.mxu0 %v487
  %560 = vmatmul.mubr.f32.gmra.mxu0 %v423
  %v561 = vpop.f32.mrf.mxu0
  %v562 = vadd.f32 1e-06, %v561
  %v563 = vpop.f32.mrf.mxu0
  %v564 = vadd.f32 1e-06, %v563
  %565 = vmatprep.mubr.f32.mxu0 %v490
  %566 = vmatmul.mubr.f32.gmra.mxu0 %v425
  %v567 = vpop.f32.mrf.mxu0
  %v568 = vadd.f32 1e-06, %v567
  %v569 = vpop.f32.mrf.mxu0
  %v570 = vadd.f32 1e-06, %v569
  %571 = vmatprep.mubr.f32.mxu0 %v493
  %572 = vmatmul.mubr.f32.gmra.mxu0 %v427
  %v573 = vpop.f32.mrf.mxu0
  %v574 = vadd.f32 1e-06, %v573
  %v575 = vpop.f32.mrf.mxu0
  %v576 = vadd.f32 1e-06, %v575
  %577 = vdwg.mxu0
  %v578 = vrsqrt.pop %v562
  %v579 = vrsqrt.pop %v564
  %v580 = vrsqrt.pop %v568
  %v581 = vrsqrt.pop %v570
  %v582 = vrsqrt.pop %v574
  %v583 = vrsqrt.pop %v576
  %v584 = vld [vmem:[%s8] sm:$0x3]
  %vm585 = vcmp.gt.f32.partialorder %v584, 0.5
  %v586 = vld [vmem:[%s9] sm:$0x3]
  %v588 = vlaneseq
  %v589 = vshrl.u32 %v588, 7
  %v590 = vsub.s32 0, %v589
  %v591 = vrot.slane %v586, %v590
  %v592 = vlaneseq
  %v593 = vshrl.u32 %v592, 7
  %v594 = vsub.s32 1, %v593
  %v595 = vrot.slane %v586, %v594
  %v598 = vmul.f32 %v578, %v591
  %v599 = vmul.f32 %v579, %v595
  %v600 = vmul.f32 %v580, %v591
  %v601 = vmul.f32 %v581, %v595
  %v602 = vmul.f32 %v582, %v591
  %v603 = vmul.f32 %v583, %v595
  %v604 = vsel %vm585, 1, 0
  %v605 = vlaneseq
  %v606 = vshrl.u32 %v605, 7
  %v607 = vsub.s32 0, %v606
  %v608 = vrot.slane %v604, %v607
  %v609 = vlaneseq
  %v610 = vshrl.u32 %v609, 7
  %v611 = vsub.s32 1, %v610
  %v612 = vrot.slane %v604, %v611
  %vm613 = vcmp.eq.s32.totalorder %v608, 1
  %vm614 = vcmp.eq.s32.totalorder %v612, 1
  %v615 = vsel %vm613, %v598, 1.0
  %v616 = vsel %vm614, %v599, 1.0
  %v617 = vsel %vm613, %v600, 1.0
  %v618 = vsel %vm614, %v601, 1.0
  %v619 = vsel %vm613, %v602, 1.0
  %v620 = vsel %vm614, %v603, 1.0
  %v621 = vmul.f32 %v407, %v615
  %v622 = vmul.f32 %v409, %v616
  %v623 = vmul.f32 %v413, %v617
  %v624 = vmul.f32 %v415, %v618
  %v625 = vmul.f32 %v419, %v619
  %v626 = vmul.f32 %v421, %v620
  %627 = vst [vmem:[%s10] sm:$0xff] %v621
  %628 = vst.msk [vmem:[%s10 + $0x8] sm:$0xff] %vm485, %v622
  %629 = vst [vmem:[%s10 + $0x10] sm:$0xff] %v623
  %630 = vst.msk [vmem:[%s10 + $0x18] sm:$0xff] %vm485, %v624
  %631 = vst [vmem:[%s10 + $0x20] sm:$0xff] %v625
  %632 = vst.msk [vmem:[%s10 + $0x28] sm:$0xff] %vm485, %v626
  // Predicated region
  $region42: #{flux_forward.12} parent=0 // pred_check
    _
  $region43: #{flux_forward.12} parent=0 // pred_check_branch
    %634 = sbr.rel (0) target = $region45
  $region44: #{flux_forward.12} parent=0 // pred_region
    _
  $region45: #{flux_forward.12} parent=0 // pred_fallthru
    _
  // Predicated region
  $region46: #{flux_forward.12} parent=0 // pred_check
    _
  $region47: #{flux_forward.12} parent=0 // pred_check_branch
    %636 = sbr.rel (0) target = $region49
  $region48: #{flux_forward.12} parent=0 // pred_region
    _
  $region49: #{flux_forward.12} parent=0 // pred_fallthru
    _
  // Predicated region
  $region50: #{flux_forward.12} parent=0 // pred_check
    _
  $region51: #{flux_forward.12} parent=0 // pred_check_branch
    %638 = sbr.rel (0) target = $region53
  $region52: #{flux_forward.12} parent=0 // pred_region
    _
  $region53: #{flux_forward.12} parent=0 // pred_fallthru
    _
  // Predicated region
  $region54: #{flux_forward.12} parent=0 // pred_check
    _
  $region55: #{flux_forward.12} parent=0 // pred_check_branch
    %640 = sbr.rel (0) target = $region57
  $region56: #{flux_forward.12} parent=0 // pred_region
    _
  $region57: #{flux_forward.12} parent=0 // pred_fallthru
    _

// kernel: flux_forward.15
$region0: #{flux_forward.15}
  #allocation0 [shape = 'u32[]', space=smem, size = 0x4, offset = 0x4, fixed_abs, tag = 'smem constant byte address 0x4 - core index']
  #allocation1 [shape = 'u32[144,128]{1,0:T(1,128)}', space=vmem, size = 0x12000, scoped, tag = 'internal scratch']
  %s0 = inlined_call_operand.vmem [shape: f32[16,32], index: 0, kind: input, shape index: {}]
  %s1 = inlined_call_operand.vmem [shape: f32[2,32], index: 1, kind: input, shape index: {}]
  %s2 = inlined_call_operand.vmem [shape: f32[16,2], index: 2, kind: input, shape index: {}]
  %s3 = inlined_call_operand.vmem [shape: f32[32,64], index: 3, kind: input, shape index: {}]
  %s4 = inlined_call_operand.vmem [shape: f32[1,64], index: 4, kind: input, shape index: {}]
  %s5 = inlined_call_operand.vmem [shape: f32[32,16], index: 5, kind: input, shape index: {}]
  %s6 = inlined_call_operand.vmem [shape: f32[1,16], index: 6, kind: input, shape index: {}]
  %s7 = inlined_call_operand.hbm [shape: f32[16,16], index: 7, kind: output, shape index: {}]
  %s8 = sld [smem:[#allocation0]]
  $region38: #{flux_forward.15} parent=0
    _
  %s10 = ssub.s32 1, %s8
  %s11 = scalar_select 0, %s10, %s8
  $region1: #{flux_forward.15} parent=0
    #allocation2 [shape = 'u8[8192]{0}', space=vmem, size = 0x2000, scoped, tag = 'output window, operand 0, single buffered']
    #allocation3 [shape = 's32[1]{0}', space=sflag, size = 0x4, scoped, tag = 'scoped memory for flux_forward.15']
    %12 = vsyncpa [#allocation3], 0
    // Predicated region
    $region2: #{flux_forward.15} parent=1 // pred_check
      _
    $region3: #{flux_forward.15} parent=1 // pred_check_branch
      %14 = sbr.rel (0) target = $region5
    $region4: #{flux_forward.15} parent=1 // pred_region
      _
    $region5: #{flux_forward.15} parent=1 // pred_fallthru
      _
    // Predicated region
    $region6: #{flux_forward.15} parent=1 // pred_check
      _
    $region7: #{flux_forward.15} parent=1 // pred_check_branch
      %16 = sbr.rel (0) target = $region9
    $region8: #{flux_forward.15} parent=1 // pred_region
      _
    $region9: #{flux_forward.15} parent=1 // pred_fallthru
      _
    // Predicated region
    $region10: #{flux_forward.15} parent=1 // pred_check
      _
    $region11: #{flux_forward.15} parent=1 // pred_check_branch
      %18 = sbr.rel (0) target = $region13
    $region12: #{flux_forward.15} parent=1 // pred_region
      _
    $region13: #{flux_forward.15} parent=1 // pred_fallthru
      _
    // Predicated region
    $region14: #{flux_forward.15} parent=1 // pred_check
      _
    $region15: #{flux_forward.15} parent=1 // pred_check_branch
      %20 = sbr.rel (0) target = $region17
    $region16: #{flux_forward.15} parent=1 // pred_region
      _
    $region17: #{flux_forward.15} parent=1 // pred_fallthru
      _
    // Predicated region
    $region18: #{flux_forward.15} parent=1 // pred_check
      _
    $region19: #{flux_forward.15} parent=1 // pred_check_branch
      %22 = sbr.rel (0) target = $region21
    $region20: #{flux_forward.15} parent=1 // pred_region
      _
    $region21: #{flux_forward.15} parent=1 // pred_fallthru
      _
    // Predicated region
    $region22: #{flux_forward.15} parent=1 // pred_check
      _
    $region23: #{flux_forward.15} parent=1 // pred_check_branch
      %24 = sbr.rel (0) target = $region25
    $region24: #{flux_forward.15} parent=1 // pred_region
      _
    $region25: #{flux_forward.15} parent=1 // pred_fallthru
      _
    // Predicated region
    $region26: #{flux_forward.15} parent=1 // pred_check
      _
    $region27: #{flux_forward.15} parent=1 // pred_check_branch
      %26 = sbr.rel (0) target = $region29
    $region28: #{flux_forward.15} parent=1 // pred_region
      _
    $region29: #{flux_forward.15} parent=1 // pred_fallthru
      _
    %v27 = vld [vmem:[%s1] sm:$0x3]
    %v28 = vxor.u32 %v27, 2147483648
    %v29 = vmul.f32 %v28, 1.442695
    %v30 = vpow.pop %v29
    %v31 = vadd.f32 %v30, 1.0
    %v32 = vrcp.pop %v31
    %v33 = vmul.f32 1.0, %v32
    %v34 = vmul.f32 %v27, %v33
    %v35 = vld [vmem:[%s3] sm:$0xff]
    %v36 = vld [vmem:[%s3 + $0x8] sm:$0xff]
    %v37 = vld [vmem:[%s3 + $0x10] sm:$0xff]
    %v38 = vld [vmem:[%s3 + $0x18] sm:$0xff]
    %v39 = vld [vmem:[%s4] sm:$0x1]
    %v41 = vlaneseq
    %v42 = vshrl.u32 %v41, 7
    %v43 = vsub.s32 0, %v42
    %v44 = vrot.slane %v39, %v43
    %vm46 = vcmask 261120
    %v48 = vsel %vm46, %v34, 0
    %50 = vmatprep.subr.mxu0 0.0
    %51 = vmatpush1.msra.mxu0 0.0
    %52 = vmatprep.subr.mxu0 0.0
    %53 = vmatpush1.msra.mxu0 0.0
    %54 = vmatprep.subr.mxu0 0.0
    %55 = vmatpush1.msra.mxu0 0.0
    %56 = vmatprep.subr.mxu0 0.0
    %57 = vmatpush1.msra.mxu0 0.0
    %58 = vmatprep.subr.mxu0 0.0
    %59 = vmatpush1.msra.mxu0 0.0
    %60 = vmatprep.subr.mxu0 0.0
    %61 = vmatpush1.msra.mxu0 0.0
    %62 = vmatprep.subr.mxu0 0.0
    %63 = vmatpush1.msra.mxu0 0.0
    %64 = vmatprep.subr.mxu0 0.0
    %65 = vmatpush1.msra.mxu0 0.0
    %66 = vmatprep.subr.mxu0 0.0
    %67 = vmatpush1.msra.mxu0 0.0
    %68 = vmatprep.subr.mxu0 0.0
    %69 = vmatpush1.msra.mxu0 0.0
    %70 = vmatprep.subr.mxu0 0.0
    %71 = vmatpush1.msra.mxu0 0.0
    %72 = vmatprep.subr.mxu0 0.0
    %73 = vmatpush1.msra.mxu0 0.0
    %74 = vmatprep.subr.mxu0 0.0
    %75 = vmatpush1.msra.mxu0 %v38
    %76 = vmatprep.subr.mxu0 0.0
    %77 = vmatpush1.msra.mxu0 %v37
    %78 = vmatprep.subr.mxu0 0.0
    %79 = vmatpush1.msra.mxu0 %v36
    %80 = vmatprep.subr.mxu0 0.0
    %81 = vmatpush1.msra.mxu0 %v35
    %82 = vmatprep.subr.mxu0 0.0
    %83 = vmatpush2.msra.mxu0 0.0
    %84 = vmatprep.subr.mxu0 0.0
    %85 = vmatpush2.msra.mxu0 0.0
    %86 = vmatprep.subr.mxu0 0.0
    %87 = vmatpush2.msra.mxu0 0.0
    %88 = vmatprep.subr.mxu0 0.0
    %89 = vmatpush2.msra.mxu0 0.0
    %90 = vmatprep.subr.mxu0 0.0
    %91 = vmatpush2.msra.mxu0 0.0
    %92 = vmatprep.subr.mxu0 0.0
    %93 = vmatpush2.msra.mxu0 0.0
    %94 = vmatprep.subr.mxu0 0.0
    %95 = vmatpush2.msra.mxu0 0.0
    %96 = vmatprep.subr.mxu0 0.0
    %97 = vmatpush2.msra.mxu0 0.0
    %98 = vmatprep.subr.mxu0 0.0
    %99 = vmatpush2.msra.mxu0 0.0
    %100 = vmatprep.subr.mxu0 0.0
    %101 = vmatpush2.msra.mxu0 0.0
    %102 = vmatprep.subr.mxu0 0.0
    %103 = vmatpush2.msra.mxu0 0.0
    %104 = vmatprep.subr.mxu0 0.0
    %105 = vmatpush2.msra.mxu0 0.0
    %106 = vmatprep.subr.mxu0 0.0
    %107 = vmatpush2.msra.mxu0 0.0
    %108 = vmatprep.subr.mxu0 0.0
    %109 = vmatpush2.msra.mxu0 0.0
    %110 = vmatprep.subr.mxu0 0.0
    %111 = vmatpush2.msra.mxu0 0.0
    %112 = vmatprep.subr.mxu0 0.0
    %113 = vmatpush2.msra.mxu0 0.0
    %114 = vmatprep.mubr.f32.mxu0 0.0
    %115 = vmatmul.mubr.f32.gmra.mxu0 %v48
    %v116 = vpop.f32.mrf.mxu0
    %v117 = vadd.f32 %v44, %v116
    %v118 = vpop.f32.mrf.mxu0
    %119 = vdwg.mxu0
    %v120 = vld [vmem:[%s2] sm:$0xff]
    %v121 = vld [vmem:[%s2 + $0x8] sm:$0xff]
    %vm122 = vcmask 15360
    %v124 = vsel %vm122, %v120, 0
    %v127 = vsel %vm122, %v121, 0
    %vm129 = vcmask 1041408
    %v131 = vsel %vm129, %v117, 0
    %133 = vmatprep.subr.mxu0 0.0
    %134 = vmatpush1.msra.mxu0 0.0
    %135 = vmatprep.subr.mxu0 0.0
    %136 = vmatpush1.msra.mxu0 0.0
    %137 = vmatprep.subr.mxu0 0.0
    %138 = vmatpush1.msra.mxu0 0.0
    %139 = vmatprep.subr.mxu0 0.0
    %140 = vmatpush1.msra.mxu0 0.0
    %141 = vmatprep.subr.mxu0 0.0
    %142 = vmatpush1.msra.mxu0 0.0
    %143 = vmatprep.subr.mxu0 0.0
    %144 = vmatpush1.msra.mxu0 0.0
    %145 = vmatprep.subr.mxu0 0.0
    %146 = vmatpush1.msra.mxu0 0.0
    %147 = vmatprep.subr.mxu0 0.0
    %148 = vmatpush1.msra.mxu0 0.0
    %149 = vmatprep.subr.mxu0 0.0
    %150 = vmatpush1.msra.mxu0 0.0
    %151 = vmatprep.subr.mxu0 0.0
    %152 = vmatpush1.msra.mxu0 0.0
    %153 = vmatprep.subr.mxu0 0.0
    %154 = vmatpush1.msra.mxu0 0.0
    %155 = vmatprep.subr.mxu0 0.0
    %156 = vmatpush1.msra.mxu0 0.0
    %157 = vmatprep.subr.mxu0 0.0
    %158 = vmatpush1.msra.mxu0 0.0
    %159 = vmatprep.subr.mxu0 0.0
    %160 = vmatpush1.msra.mxu0 0.0
    %161 = vmatprep.subr.mxu0 0.0
    %162 = vmatpush1.msra.mxu0 0.0
    %163 = vmatprep.subr.mxu0 0.0
    %164 = vmatpush1.msra.mxu0 %v131
    %165 = vmatprep.subr.mxu0 0.0
    %166 = vmatpush2.msra.mxu0 0.0
    %167 = vmatprep.subr.mxu0 0.0
    %168 = vmatpush2.msra.mxu0 0.0
    %169 = vmatprep.subr.mxu0 0.0
    %170 = vmatpush2.msra.mxu0 0.0
    %171 = vmatprep.subr.mxu0 0.0
    %172 = vmatpush2.msra.mxu0 0.0
    %173 = vmatprep.subr.mxu0 0.0
    %174 = vmatpush2.msra.mxu0 0.0
    %175 = vmatprep.subr.mxu0 0.0
    %176 = vmatpush2.msra.mxu0 0.0
    %177 = vmatprep.subr.mxu0 0.0
    %178 = vmatpush2.msra.mxu0 0.0
    %179 = vmatprep.subr.mxu0 0.0
    %180 = vmatpush2.msra.mxu0 0.0
    %181 = vmatprep.subr.mxu0 0.0
    %182 = vmatpush2.msra.mxu0 0.0
    %183 = vmatprep.subr.mxu0 0.0
    %184 = vmatpush2.msra.mxu0 0.0
    %185 = vmatprep.subr.mxu0 0.0
    %186 = vmatpush2.msra.mxu0 0.0
    %187 = vmatprep.subr.mxu0 0.0
    %188 = vmatpush2.msra.mxu0 0.0
    %189 = vmatprep.subr.mxu0 0.0
    %190 = vmatpush2.msra.mxu0 0.0
    %191 = vmatprep.subr.mxu0 0.0
    %192 = vmatpush2.msra.mxu0 0.0
    %193 = vmatprep.subr.mxu0 0.0
    %194 = vmatpush2.msra.mxu0 0.0
    %195 = vmatprep.subr.mxu0 0.0
    %196 = vmatpush2.msra.mxu0 0.0
    %197 = vmatprep.mubr.f32.mxu0 0.0
    %198 = vmatmul.mubr.f32.gmra.mxu0 %v124
    %v199 = vpop.f32.mrf.mxu0
    %v200 = vadd.f32 0.0, %v199
    %v201 = vpop.f32.mrf.mxu0
    %202 = vmatprep.mubr.f32.mxu0 0.0
    %203 = vmatmul.mubr.f32.gmra.mxu0 %v127
    %v204 = vpop.f32.mrf.mxu0
    %v205 = vadd.f32 0.0, %v204
    %v206 = vpop.f32.mrf.mxu0
    %207 = vdwg.mxu0
    %v208 = vadd.f32 %v200, 1.0
    %v209 = vadd.f32 %v205, 1.0
    %v210 = vld [vmem:[%s0] sm:$0xff]
    %v211 = vld [vmem:[%s0 + $0x8] sm:$0xff]
    %v212 = vsel %vm46, %v210, 0.0
    %213 = vadd.xlane.f32.xlu0 %v212
    %v214 = vpop.xlane.xlu0 %213
    %v215 = vsel %vm46, %v211, 0.0
    %216 = vadd.xlane.f32.xlu0 %v215
    %v217 = vpop.xlane.xlu0 %216
    %v218 = vrcp.pop 32.0
    %v219 = vmul.f32 %v214, %v218
    %v220 = vmul.f32 %v217, %v218
    %v221 = vsub.f32 %v210, %v219
    %v222 = vsub.f32 %v211, %v220
    %v223 = vmul.f32 %v221, %v221
    %v224 = vmul.f32 %v222, %v222
    %v225 = vsel %vm46, %v223, 0.0
    %226 = vadd.xlane.f32.xlu0 %v225
    %v227 = vpop.xlane.xlu0 %226
    %v228 = vsel %vm46, %v224, 0.0
    %229 = vadd.xlane.f32.xlu0 %v228
    %v230 = vpop.xlane.xlu0 %229
    %v231 = vmul.f32 %v227, %v218
    %v232 = vmul.f32 %v230, %v218
    %v233 = vadd.f32 %v231, 1e-06
    %v234 = vadd.f32 %v232, 1e-06
    %v235 = vrsqrt.pop %v233
    %v236 = vrsqrt.pop %v234
    %v237 = vmul.f32 %v221, %v235
    %v238 = vmul.f32 %v222, %v236
    %241 = vrot.lane.b32.xlu0 %v237, 32
    %v242 = vpop.permute.xlu0 %241
    %243 = vrot.lane.b32.xlu0 %v238, 32
    %v244 = vpop.permute.xlu0 %243
    %v247 = vmul.f32 %v208, %v242
    %v248 = vmul.f32 %v209, %v244
    %251 = vrot.lane.b32.xlu0 %v200, 32
    %v252 = vpop.permute.xlu0 %251
    %253 = vrot.lane.b32.xlu0 %v205, 32
    %v254 = vpop.permute.xlu0 %253
    %v257 = vadd.f32 %v247, %v252
    %v258 = vadd.f32 %v248, %v254
    %v259 = vld [vmem:[%s5] sm:$0xff]
    %v260 = vld [vmem:[%s5 + $0x8] sm:$0xff]
    %v261 = vld [vmem:[%s5 + $0x10] sm:$0xff]
    %v262 = vld [vmem:[%s5 + $0x18] sm:$0xff]
    %v263 = vld [vmem:[%s6] sm:$0x1]
    %v265 = vlaneseq
    %v266 = vshrl.u32 %v265, 7
    %v267 = vsub.s32 0, %v266
    %v268 = vrot.slane %v263, %v267
    %272 = vrot.lane.b32.xlu0 %v257, 96
    %v273 = vpop.permute.xlu0 %272
    %274 = vrot.lane.b32.xlu0 %v258, 96
    %v275 = vpop.permute.xlu0 %274
    %v276 = vsel %vm46, %v273, 0
    %v278 = vsel %vm46, %v275, 0
    %280 = vmatprep.subr.mxu0 0.0
    %281 = vmatpush1.msra.mxu0 0.0
    %282 = vmatprep.subr.mxu0 0.0
    %283 = vmatpush1.msra.mxu0 0.0
    %284 = vmatprep.subr.mxu0 0.0
    %285 = vmatpush1.msra.mxu0 0.0
    %286 = vmatprep.subr.mxu0 0.0
    %287 = vmatpush1.msra.mxu0 0.0
    %288 = vmatprep.subr.mxu0 0.0
    %289 = vmatpush1.msra.mxu0 0.0
    %290 = vmatprep.subr.mxu0 0.0
    %291 = vmatpush1.msra.mxu0 0.0
    %292 = vmatprep.subr.mxu0 0.0
    %293 = vmatpush1.msra.mxu0 0.0
    %294 = vmatprep.subr.mxu0 0.0
    %295 = vmatpush1.msra.mxu0 0.0
    %296 = vmatprep.subr.mxu0 0.0
    %297 = vmatpush1.msra.mxu0 0.0
    %298 = vmatprep.subr.mxu0 0.0
    %299 = vmatpush1.msra.mxu0 0.0
    %300 = vmatprep.subr.mxu0 0.0
    %301 = vmatpush1.msra.mxu0 0.0
    %302 = vmatprep.subr.mxu0 0.0
    %303 = vmatpush1.msra.mxu0 0.0
    %304 = vmatprep.subr.mxu0 0.0
    %305 = vmatpush1.msra.mxu0 %v262
    %306 = vmatprep.subr.mxu0 0.0
    %307 = vmatpush1.msra.mxu0 %v261
    %308 = vmatprep.subr.mxu0 0.0
    %309 = vmatpush1.msra.mxu0 %v260
    %310 = vmatprep.subr.mxu0 0.0
    %311 = vmatpush1.msra.mxu0 %v259
    %312 = vmatprep.subr.mxu0 0.0
    %313 = vmatpush2.msra.mxu0 0.0
    %314 = vmatprep.subr.mxu0 0.0
    %315 = vmatpush2.msra.mxu0 0.0
    %316 = vmatprep.subr.mxu0 0.0
    %317 = vmatpush2.msra.mxu0 0.0
    %318 = vmatprep.subr.mxu0 0.0
    %319 = vmatpush2.msra.mxu0 0.0
    %320 = vmatprep.subr.mxu0 0.0
    %321 = vmatpush2.msra.mxu0 0.0
    %322 = vmatprep.subr.mxu0 0.0
    %323 = vmatpush2.msra.mxu0 0.0
    %324 = vmatprep.subr.mxu0 0.0
    %325 = vmatpush2.msra.mxu0 0.0
    %326 = vmatprep.subr.mxu0 0.0
    %327 = vmatpush2.msra.mxu0 0.0
    %328 = vmatprep.subr.mxu0 0.0
    %329 = vmatpush2.msra.mxu0 0.0
    %330 = vmatprep.subr.mxu0 0.0
    %331 = vmatpush2.msra.mxu0 0.0
    %332 = vmatprep.subr.mxu0 0.0
    %333 = vmatpush2.msra.mxu0 0.0
    %334 = vmatprep.subr.mxu0 0.0
    %335 = vmatpush2.msra.mxu0 0.0
    %336 = vmatprep.subr.mxu0 0.0
    %337 = vmatpush2.msra.mxu0 0.0
    %338 = vmatprep.subr.mxu0 0.0
    %339 = vmatpush2.msra.mxu0 0.0
    %340 = vmatprep.subr.mxu0 0.0
    %341 = vmatpush2.msra.mxu0 0.0
    %342 = vmatprep.subr.mxu0 0.0
    %343 = vmatpush2.msra.mxu0 0.0
    %344 = vmatprep.mubr.f32.mxu0 0.0
    %345 = vmatmul.mubr.f32.gmra.mxu0 %v276
    %v346 = vpop.f32.mrf.mxu0
    %v347 = vadd.f32 %v268, %v346
    %v348 = vpop.f32.mrf.mxu0
    %349 = vmatprep.mubr.f32.mxu0 0.0
    %350 = vmatmul.mubr.f32.gmra.mxu0 %v278
    %v351 = vpop.f32.mrf.mxu0
    %v352 = vadd.f32 %v268, %v351
    %v353 = vpop.f32.mrf.mxu0
    %354 = vdwg.mxu0
    %vm355 = vcmask 130048
    %356 = vst.msk [vmem:[#allocation2] sm:$0xff] %vm355, %v347
    %357 = vst.msk [vmem:[#allocation2 + $0x8] sm:$0xff] %vm355, %v352
    // Predicated region
    $region30: #{flux_forward.15} parent=1 // pred_check
      _
    $region31: #{flux_forward.15} parent=1 // pred_check_branch
      %359 = sbr.rel (0) target = $region33
    $region32: #{flux_forward.15} parent=1 // pred_region
      %s361 = ssub.s32 256, 256
      %362 = vsyncadd [#allocation3], %s361
      %s363 = sshll.u32 [#allocation2], 4
      %s364 = int_to_ptr.vmem [resolvable:$true] %s363
      %369 = dma.vmem_to_hbm [thread:$0]  %s364, 256, %s7, [#allocation3], 128, 128, 8
    $region33: #{flux_forward.15} parent=1 // pred_fallthru
      _
    // Predicated region
    $region34: #{flux_forward.15} parent=1 // pred_check
      _
    $region35: #{flux_forward.15} parent=1 // pred_check_branch
      %371 = sbr.rel (0) target = $region37
    $region36: #{flux_forward.15} parent=1 // pred_region
      %372 = dma.done [#allocation3], 256
    $region37: #{flux_forward.15} parent=1 // pred_fallthru
      _
    %373 = vsyncpa [#allocation3], 1

// kernel: flux_forward.14
$region0: #{flux_forward.14}
  #allocation0 [shape = 'u32[]', space=smem, size = 0x4, offset = 0x4, fixed_abs, tag = 'smem constant byte address 0x4 - core index']
  #allocation1 [shape = 'u32[144,128]{1,0:T(1,128)}', space=vmem, size = 0x12000, scoped, tag = 'internal scratch']
  %s0 = inlined_call_operand.vmem [shape: f32[24,32], index: 0, kind: input, shape index: {}]
  %s1 = inlined_call_operand.vmem [shape: f32[24,32], index: 1, kind: input, shape index: {}]
  %s2 = inlined_call_operand.vmem [shape: f32[24,128], index: 2, kind: input, shape index: {}]
  %s3 = inlined_call_operand.vmem [shape: f32[2,96], index: 3, kind: input, shape index: {}]
  %s4 = inlined_call_operand.vmem [shape: f32[24,2], index: 4, kind: input, shape index: {}]
  %s5 = inlined_call_operand.vmem [shape: f32[32,32], index: 5, kind: input, shape index: {}]
  %s6 = inlined_call_operand.vmem [shape: f32[128,32], index: 6, kind: input, shape index: {}]
  %s7 = inlined_call_operand.vmem [shape: f32[1,32], index: 7, kind: input, shape index: {}]
  %s8 = inlined_call_operand.vmem [shape: f32[24,32], index: 8, kind: output, shape index: {}]
  %s9 = sld [smem:[#allocation0]]
  $region42: #{flux_forward.14} parent=0
    _
  %s11 = ssub.s32 1, %s9
  %s12 = scalar_select 0, %s11, %s9
  // Predicated region
  $region2: #{flux_forward.14} parent=0 // pred_check
    _
  $region3: #{flux_forward.14} parent=0 // pred_check_branch
    %14 = sbr.rel (0) target = $region5
  $region4: #{flux_forward.14} parent=0 // pred_region
    _
  $region5: #{flux_forward.14} parent=0 // pred_fallthru
    _
  // Predicated region
  $region6: #{flux_forward.14} parent=0 // pred_check
    _
  $region7: #{flux_forward.14} parent=0 // pred_check_branch
    %16 = sbr.rel (0) target = $region9
  $region8: #{flux_forward.14} parent=0 // pred_region
    _
  $region9: #{flux_forward.14} parent=0 // pred_fallthru
    _
  // Predicated region
  $region10: #{flux_forward.14} parent=0 // pred_check
    _
  $region11: #{flux_forward.14} parent=0 // pred_check_branch
    %18 = sbr.rel (0) target = $region13
  $region12: #{flux_forward.14} parent=0 // pred_region
    _
  $region13: #{flux_forward.14} parent=0 // pred_fallthru
    _
  // Predicated region
  $region14: #{flux_forward.14} parent=0 // pred_check
    _
  $region15: #{flux_forward.14} parent=0 // pred_check_branch
    %20 = sbr.rel (0) target = $region17
  $region16: #{flux_forward.14} parent=0 // pred_region
    _
  $region17: #{flux_forward.14} parent=0 // pred_fallthru
    _
  // Predicated region
  $region18: #{flux_forward.14} parent=0 // pred_check
    _
  $region19: #{flux_forward.14} parent=0 // pred_check_branch
    %22 = sbr.rel (0) target = $region21
  $region20: #{flux_forward.14} parent=0 // pred_region
    _
  $region21: #{flux_forward.14} parent=0 // pred_fallthru
    _
  // Predicated region
  $region22: #{flux_forward.14} parent=0 // pred_check
    _
  $region23: #{flux_forward.14} parent=0 // pred_check_branch
    %24 = sbr.rel (0) target = $region25
  $region24: #{flux_forward.14} parent=0 // pred_region
    _
  $region25: #{flux_forward.14} parent=0 // pred_fallthru
    _
  // Predicated region
  $region26: #{flux_forward.14} parent=0 // pred_check
    _
  $region27: #{flux_forward.14} parent=0 // pred_check_branch
    %26 = sbr.rel (0) target = $region29
  $region28: #{flux_forward.14} parent=0 // pred_region
    _
  $region29: #{flux_forward.14} parent=0 // pred_fallthru
    _
  // Predicated region
  $region30: #{flux_forward.14} parent=0 // pred_check
    _
  $region31: #{flux_forward.14} parent=0 // pred_check_branch
    %28 = sbr.rel (0) target = $region33
  $region32: #{flux_forward.14} parent=0 // pred_region
    _
  $region33: #{flux_forward.14} parent=0 // pred_fallthru
    _
  %v29 = vld [vmem:[%s4] sm:$0xff]
  %v30 = vld [vmem:[%s4 + $0x8] sm:$0xff]
  %v31 = vld [vmem:[%s4 + $0x10] sm:$0xff]
  %v32 = vld [vmem:[%s3] sm:$0x3]
  %34 = vrot.lane.b32.xlu0 %v32, 64
  %v35 = vpop.permute.xlu0 %34
  %vm36 = vcmask 15360
  %v38 = vsel %vm36, %v29, 0
  %v41 = vsel %vm36, %v30, 0
  %v44 = vsel %vm36, %v31, 0
  %vm46 = vcmask 1041408
  %v47 = vsel %vm46, %v35, 0
  %49 = vmatprep.subr.mxu0 0.0
  %50 = vmatpush1.msra.mxu0 0.0
  %51 = vmatprep.subr.mxu0 0.0
  %52 = vmatpush1.msra.mxu0 0.0
  %53 = vmatprep.subr.mxu0 0.0
  %54 = vmatpush1.msra.mxu0 0.0
  %55 = vmatprep.subr.mxu0 0.0
  %56 = vmatpush1.msra.mxu0 0.0
  %57 = vmatprep.subr.mxu0 0.0
  %58 = vmatpush1.msra.mxu0 0.0
  %59 = vmatprep.subr.mxu0 0.0
  %60 = vmatpush1.msra.mxu0 0.0
  %61 = vmatprep.subr.mxu0 0.0
  %62 = vmatpush1.msra.mxu0 0.0
  %63 = vmatprep.subr.mxu0 0.0
  %64 = vmatpush1.msra.mxu0 0.0
  %65 = vmatprep.subr.mxu0 0.0
  %66 = vmatpush1.msra.mxu0 0.0
  %67 = vmatprep.subr.mxu0 0.0
  %68 = vmatpush1.msra.mxu0 0.0
  %69 = vmatprep.subr.mxu0 0.0
  %70 = vmatpush1.msra.mxu0 0.0
  %71 = vmatprep.subr.mxu0 0.0
  %72 = vmatpush1.msra.mxu0 0.0
  %73 = vmatprep.subr.mxu0 0.0
  %74 = vmatpush1.msra.mxu0 0.0
  %75 = vmatprep.subr.mxu0 0.0
  %76 = vmatpush1.msra.mxu0 0.0
  %77 = vmatprep.subr.mxu0 0.0
  %78 = vmatpush1.msra.mxu0 0.0
  %79 = vmatprep.subr.mxu0 0.0
  %80 = vmatpush1.msra.mxu0 %v47
  %81 = vmatprep.subr.mxu0 0.0
  %82 = vmatpush2.msra.mxu0 0.0
  %83 = vmatprep.subr.mxu0 0.0
  %84 = vmatpush2.msra.mxu0 0.0
  %85 = vmatprep.subr.mxu0 0.0
  %86 = vmatpush2.msra.mxu0 0.0
  %87 = vmatprep.subr.mxu0 0.0
  %88 = vmatpush2.msra.mxu0 0.0
  %89 = vmatprep.subr.mxu0 0.0
  %90 = vmatpush2.msra.mxu0 0.0
  %91 = vmatprep.subr.mxu0 0.0
  %92 = vmatpush2.msra.mxu0 0.0
  %93 = vmatprep.subr.mxu0 0.0
  %94 = vmatpush2.msra.mxu0 0.0
  %95 = vmatprep.subr.mxu0 0.0
  %96 = vmatpush2.msra.mxu0 0.0
  %97 = vmatprep.subr.mxu0 0.0
  %98 = vmatpush2.msra.mxu0 0.0
  %99 = vmatprep.subr.mxu0 0.0
  %100 = vmatpush2.msra.mxu0 0.0
  %101 = vmatprep.subr.mxu0 0.0
  %102 = vmatpush2.msra.mxu0 0.0
  %103 = vmatprep.subr.mxu0 0.0
  %104 = vmatpush2.msra.mxu0 0.0
  %105 = vmatprep.subr.mxu0 0.0
  %106 = vmatpush2.msra.mxu0 0.0
  %107 = vmatprep.subr.mxu0 0.0
  %108 = vmatpush2.msra.mxu0 0.0
  %109 = vmatprep.subr.mxu0 0.0
  %110 = vmatpush2.msra.mxu0 0.0
  %111 = vmatprep.subr.mxu0 0.0
  %112 = vmatpush2.msra.mxu0 0.0
  %113 = vmatprep.mubr.f32.mxu0 0.0
  %114 = vmatmul.mubr.f32.gmra.mxu0 %v38
  %v115 = vpop.f32.mrf.mxu0
  %v116 = vadd.f32 0.0, %v115
  %v117 = vpop.f32.mrf.mxu0
  %118 = vmatprep.mubr.f32.mxu0 0.0
  %119 = vmatmul.mubr.f32.gmra.mxu0 %v41
  %v120 = vpop.f32.mrf.mxu0
  %v121 = vadd.f32 0.0, %v120
  %v122 = vpop.f32.mrf.mxu0
  %123 = vmatprep.mubr.f32.mxu0 0.0
  %124 = vmatmul.mubr.f32.gmra.mxu0 %v44
  %v125 = vpop.f32.mrf.mxu0
  %v126 = vadd.f32 0.0, %v125
  %v127 = vpop.f32.mrf.mxu0
  %128 = vdwg.mxu0
  %v129 = vld [vmem:[%s2] sm:$0xff]
  %v130 = vld [vmem:[%s2 + $0x8] sm:$0xff]
  %v131 = vld [vmem:[%s2 + $0x10] sm:$0xff]
  %v132 = vmul.f32 %v129, 0.5
  %v133 = vmul.f32 %v130, 0.5
  %v134 = vmul.f32 %v131, 0.5
  %v135 = vmul.f32 %v129, 0.044715
  %v136 = vmul.f32 %v130, 0.044715
  %v137 = vmul.f32 %v131, 0.044715
  %v138 = vmul.f32 %v135, %v129
  %v139 = vmul.f32 %v136, %v130
  %v140 = vmul.f32 %v137, %v131
  %v141 = vmul.f32 %v138, %v129
  %v142 = vmul.f32 %v139, %v130
  %v143 = vmul.f32 %v140, %v131
  %v144 = vadd.f32 %v129, %v141
  %v145 = vadd.f32 %v130, %v142
  %v146 = vadd.f32 %v131, %v143
  %v147 = vmul.f32 %v144, 0.7978846
  %v148 = vmul.f32 %v145, 0.7978846
  %v149 = vmul.f32 %v146, 0.7978846
  %v150 = vtanh.pop %v147
  %v151 = vtanh.pop %v148
  %v152 = vtanh.pop %v149
  %v153 = vadd.f32 %v150, 1.0
  %v154 = vadd.f32 %v151, 1.0
  %v155 = vadd.f32 %v152, 1.0
  %v156 = vmul.f32 %v132, %v153
  %v157 = vmul.f32 %v133, %v154
  %v158 = vmul.f32 %v134, %v155
  %v159 = vld [vmem:[%s1] sm:$0xff]
  %v160 = vld [vmem:[%s1 + $0x8] sm:$0xff]
  %v161 = vld [vmem:[%s1 + $0x10] sm:$0xff]
  %v162 = vld [vmem:[%s5] sm:$0xff]
  %v163 = vld [vmem:[%s5 + $0x8] sm:$0xff]
  %v164 = vld [vmem:[%s5 + $0x10] sm:$0xff]
  %v165 = vld [vmem:[%s5 + $0x18] sm:$0xff]
  %v166 = vld [vmem:[%s6] sm:$0xff]
  %v167 = vld [vmem:[%s6 + $0x8] sm:$0xff]
  %v168 = vld [vmem:[%s6 + $0x10] sm:$0xff]
  %v169 = vld [vmem:[%s6 + $0x18] sm:$0xff]
  %v170 = vld [vmem:[%s6 + $0x20] sm:$0xff]
  %v171 = vld [vmem:[%s6 + $0x28] sm:$0xff]
  %v172 = vld [vmem:[%s6 + $0x30] sm:$0xff]
  %v173 = vld [vmem:[%s6 + $0x38] sm:$0xff]
  %v174 = vld [vmem:[%s6 + $0x40] sm:$0xff]
  %v175 = vld [vmem:[%s6 + $0x48] sm:$0xff]
  %v176 = vld [vmem:[%s6 + $0x50] sm:$0xff]
  %v177 = vld [vmem:[%s6 + $0x58] sm:$0xff]
  %v178 = vld [vmem:[%s6 + $0x60] sm:$0xff]
  %v179 = vld [vmem:[%s6 + $0x68] sm:$0xff]
  %v180 = vld [vmem:[%s6 + $0x70] sm:$0xff]
  %v181 = vld [vmem:[%s6 + $0x78] sm:$0xff]
  %182 = vmatprep.subr.mxu0 0.0
  %183 = vmatpush1.msra.mxu0 %v181
  %184 = vmatprep.subr.mxu0 0.0
  %185 = vmatpush1.msra.mxu0 %v180
  %186 = vmatprep.subr.mxu0 0.0
  %187 = vmatpush1.msra.mxu0 %v179
  %188 = vmatprep.subr.mxu0 0.0
  %189 = vmatpush1.msra.mxu0 %v178
  %190 = vmatprep.subr.mxu0 0.0
  %191 = vmatpush1.msra.mxu0 %v177
  %192 = vmatprep.subr.mxu0 0.0
  %193 = vmatpush1.msra.mxu0 %v176
  %194 = vmatprep.subr.mxu0 0.0
  %195 = vmatpush1.msra.mxu0 %v175
  %196 = vmatprep.subr.mxu0 0.0
  %197 = vmatpush1.msra.mxu0 %v174
  %198 = vmatprep.subr.mxu0 0.0
  %199 = vmatpush1.msra.mxu0 %v173
  %200 = vmatprep.subr.mxu0 0.0
  %201 = vmatpush1.msra.mxu0 %v172
  %202 = vmatprep.subr.mxu0 0.0
  %203 = vmatpush1.msra.mxu0 %v171
  %204 = vmatprep.subr.mxu0 0.0
  %205 = vmatpush1.msra.mxu0 %v170
  %206 = vmatprep.subr.mxu0 0.0
  %207 = vmatpush1.msra.mxu0 %v169
  %208 = vmatprep.subr.mxu0 0.0
  %209 = vmatpush1.msra.mxu0 %v168
  %210 = vmatprep.subr.mxu0 0.0
  %211 = vmatpush1.msra.mxu0 %v167
  %212 = vmatprep.subr.mxu0 0.0
  %213 = vmatpush1.msra.mxu0 %v166
  %214 = vmatprep.subr.mxu0 0.0
  %215 = vmatpush2.msra.mxu0 0.0
  %216 = vmatprep.subr.mxu0 0.0
  %217 = vmatpush2.msra.mxu0 0.0
  %218 = vmatprep.subr.mxu0 0.0
  %219 = vmatpush2.msra.mxu0 0.0
  %220 = vmatprep.subr.mxu0 0.0
  %221 = vmatpush2.msra.mxu0 0.0
  %222 = vmatprep.subr.mxu0 0.0
  %223 = vmatpush2.msra.mxu0 0.0
  %224 = vmatprep.subr.mxu0 0.0
  %225 = vmatpush2.msra.mxu0 0.0
  %226 = vmatprep.subr.mxu0 0.0
  %227 = vmatpush2.msra.mxu0 0.0
  %228 = vmatprep.subr.mxu0 0.0
  %229 = vmatpush2.msra.mxu0 0.0
  %230 = vmatprep.subr.mxu0 0.0
  %231 = vmatpush2.msra.mxu0 0.0
  %232 = vmatprep.subr.mxu0 0.0
  %233 = vmatpush2.msra.mxu0 0.0
  %234 = vmatprep.subr.mxu0 0.0
  %235 = vmatpush2.msra.mxu0 0.0
  %236 = vmatprep.subr.mxu0 0.0
  %237 = vmatpush2.msra.mxu0 0.0
  %238 = vmatprep.subr.mxu0 0.0
  %239 = vmatpush2.msra.mxu0 0.0
  %240 = vmatprep.subr.mxu0 0.0
  %241 = vmatpush2.msra.mxu0 0.0
  %242 = vmatprep.subr.mxu0 0.0
  %243 = vmatpush2.msra.mxu0 0.0
  %244 = vmatprep.subr.mxu0 0.0
  %245 = vmatpush2.msra.mxu0 0.0
  %246 = vmatprep.mubr.f32.mxu0 0.0
  %247 = vmatmul.mubr.f32.gmra.mxu0 %v156
  %v248 = vpop.f32.mrf.mxu0
  %v249 = vadd.f32 0.0, %v248
  %v250 = vpop.f32.mrf.mxu0
  %251 = vmatprep.mubr.f32.mxu0 0.0
  %252 = vmatmul.mubr.f32.gmra.mxu0 %v157
  %v253 = vpop.f32.mrf.mxu0
  %v254 = vadd.f32 0.0, %v253
  %v255 = vpop.f32.mrf.mxu0
  %256 = vmatprep.mubr.f32.mxu0 0.0
  %257 = vmatmul.mubr.f32.gmra.mxu0 %v158
  %v258 = vpop.f32.mrf.mxu0
  %v259 = vadd.f32 0.0, %v258
  %v260 = vpop.f32.mrf.mxu0
  %261 = vdwg.mxu0
  %vm262 = vcmask 261120
  %v264 = vsel %vm262, %v159, 0
  %v267 = vsel %vm262, %v160, 0
  %v270 = vsel %vm262, %v161, 0
  %272 = vmatprep.subr.mxu0 0.0
  %273 = vmatpush1.msra.mxu0 0.0
  %274 = vmatprep.subr.mxu0 0.0
  %275 = vmatpush1.msra.mxu0 0.0
  %276 = vmatprep.subr.mxu0 0.0
  %277 = vmatpush1.msra.mxu0 0.0
  %278 = vmatprep.subr.mxu0 0.0
  %279 = vmatpush1.msra.mxu0 0.0
  %280 = vmatprep.subr.mxu0 0.0
  %281 = vmatpush1.msra.mxu0 0.0
  %282 = vmatprep.subr.mxu0 0.0
  %283 = vmatpush1.msra.mxu0 0.0
  %284 = vmatprep.subr.mxu0 0.0
  %285 = vmatpush1.msra.mxu0 0.0
  %286 = vmatprep.subr.mxu0 0.0
  %287 = vmatpush1.msra.mxu0 0.0
  %288 = vmatprep.subr.mxu0 0.0
  %289 = vmatpush1.msra.mxu0 0.0
  %290 = vmatprep.subr.mxu0 0.0
  %291 = vmatpush1.msra.mxu0 0.0
  %292 = vmatprep.subr.mxu0 0.0
  %293 = vmatpush1.msra.mxu0 0.0
  %294 = vmatprep.subr.mxu0 0.0
  %295 = vmatpush1.msra.mxu0 0.0
  %296 = vmatprep.subr.mxu0 0.0
  %297 = vmatpush1.msra.mxu0 %v165
  %298 = vmatprep.subr.mxu0 0.0
  %299 = vmatpush1.msra.mxu0 %v164
  %300 = vmatprep.subr.mxu0 0.0
  %301 = vmatpush1.msra.mxu0 %v163
  %302 = vmatprep.subr.mxu0 0.0
  %303 = vmatpush1.msra.mxu0 %v162
  %304 = vmatprep.subr.mxu0 0.0
  %305 = vmatpush2.msra.mxu0 0.0
  %306 = vmatprep.subr.mxu0 0.0
  %307 = vmatpush2.msra.mxu0 0.0
  %308 = vmatprep.subr.mxu0 0.0
  %309 = vmatpush2.msra.mxu0 0.0
  %310 = vmatprep.subr.mxu0 0.0
  %311 = vmatpush2.msra.mxu0 0.0
  %312 = vmatprep.subr.mxu0 0.0
  %313 = vmatpush2.msra.mxu0 0.0
  %314 = vmatprep.subr.mxu0 0.0
  %315 = vmatpush2.msra.mxu0 0.0
  %316 = vmatprep.subr.mxu0 0.0
  %317 = vmatpush2.msra.mxu0 0.0
  %318 = vmatprep.subr.mxu0 0.0
  %319 = vmatpush2.msra.mxu0 0.0
  %320 = vmatprep.subr.mxu0 0.0
  %321 = vmatpush2.msra.mxu0 0.0
  %322 = vmatprep.subr.mxu0 0.0
  %323 = vmatpush2.msra.mxu0 0.0
  %324 = vmatprep.subr.mxu0 0.0
  %325 = vmatpush2.msra.mxu0 0.0
  %326 = vmatprep.subr.mxu0 0.0
  %327 = vmatpush2.msra.mxu0 0.0
  %328 = vmatprep.subr.mxu0 0.0
  %329 = vmatpush2.msra.mxu0 0.0
  %330 = vmatprep.subr.mxu0 0.0
  %331 = vmatpush2.msra.mxu0 0.0
  %332 = vmatprep.subr.mxu0 0.0
  %333 = vmatpush2.msra.mxu0 0.0
  %334 = vmatprep.subr.mxu0 0.0
  %335 = vmatpush2.msra.mxu0 0.0
  %336 = vmatprep.mubr.f32.mxu0 0.0
  %337 = vmatmul.mubr.f32.gmra.mxu0 %v264
  %v338 = vpop.f32.mrf.mxu0
  %v339 = vadd.f32 %v249, %v338
  %v340 = vpop.f32.mrf.mxu0
  %341 = vmatprep.mubr.f32.mxu0 0.0
  %342 = vmatmul.mubr.f32.gmra.mxu0 %v267
  %v343 = vpop.f32.mrf.mxu0
  %v344 = vadd.f32 %v254, %v343
  %v345 = vpop.f32.mrf.mxu0
  %346 = vmatprep.mubr.f32.mxu0 0.0
  %347 = vmatmul.mubr.f32.gmra.mxu0 %v270
  %v348 = vpop.f32.mrf.mxu0
  %v349 = vadd.f32 %v259, %v348
  %v350 = vpop.f32.mrf.mxu0
  %351 = vdwg.mxu0
  %v352 = vld [vmem:[%s7] sm:$0x1]
  %v354 = vlaneseq
  %v355 = vshrl.u32 %v354, 7
  %v356 = vsub.s32 0, %v355
  %v357 = vrot.slane %v352, %v356
  %v359 = vadd.f32 %v339, %v357
  %v360 = vadd.f32 %v344, %v357
  %v361 = vadd.f32 %v349, %v357
  %v362 = vld [vmem:[%s0] sm:$0xff]
  %v363 = vld [vmem:[%s0 + $0x8] sm:$0xff]
  %v364 = vld [vmem:[%s0 + $0x10] sm:$0xff]
  %v365 = vmul.f32 %v116, %v359
  %v366 = vmul.f32 %v121, %v360
  %v367 = vmul.f32 %v126, %v361
  %v368 = vadd.f32 %v362, %v365
  %v369 = vadd.f32 %v363, %v366
  %v370 = vadd.f32 %v364, %v367
  %371 = vst.msk [vmem:[%s8] sm:$0xff] %vm262, %v368
  %372 = vst.msk [vmem:[%s8 + $0x8] sm:$0xff] %vm262, %v369
  %373 = vst.msk [vmem:[%s8 + $0x10] sm:$0xff] %vm262, %v370
  // Predicated region
  $region34: #{flux_forward.14} parent=0 // pred_check
    _
  $region35: #{flux_forward.14} parent=0 // pred_check_branch
    %375 = sbr.rel (0) target = $region37
  $region36: #{flux_forward.14} parent=0 // pred_region
    _
  $region37: #{flux_forward.14} parent=0 // pred_fallthru
    _
  // Predicated region
  $region38: #{flux_forward.14} parent=0 // pred_check
    _
  $region39: #{flux_forward.14} parent=0 // pred_check_branch
    %377 = sbr.rel (0) target = $region41
  $region40: #{flux_forward.14} parent=0 // pred_region
    _
  $region41: #{flux_forward.14} parent=0 // pred_fallthru
    _

</llo_original>
